<compile_context>
chip_gen: v7x
topology: tpu7x:2x2x1
jax: 0.10.0
libtpu: 0.0.40
codegen_flags: <defaults>
</compile_context>

<pallas_src>
import functools

import jax
import jax.numpy as jnp
from jax.experimental import pallas as pl
from jax.experimental.pallas import tpu as pltpu


def _round_up(v, m):
    return ((v + m - 1) // m) * m


# ----------------------------- Fused Pallas kernel ---------------------------

def _fused_ae_kernel(x_ref, *refs, activations):
    """One batch tile through the full encoder+decoder stack, all in VMEM.

    refs = (w0, b0, w1, b1, ..., w_{L-1}, b_{L-1}, o_ref)
    x / weights are bf16 (MXU operands), biases f32; matmuls accumulate in f32
    and the bias/activation epilogue runs in f32 on the VPU/EUP.
    """
    o_ref = refs[-1]
    param_refs = refs[:-1]
    n_layers = len(param_refs) // 2
    assert len(activations) == n_layers

    h = x_ref[...]                         # bf16 tile, straight from HBM
    for li in range(n_layers):
        w = param_refs[2 * li][...]        # (in_dim, out_dim) bf16
        b = param_refs[2 * li + 1][...]    # (1, out_dim) f32
        y = jnp.dot(h, w, preferred_element_type=jnp.float32) + b
        act = activations[li]
        if act == "relu":
            y = jnp.maximum(y, 0.0)
        elif act == "sigmoid":
            y = jax.nn.sigmoid(y)
        elif act == "none":
            pass
        else:
            raise ValueError(f"unknown activation {act}")
        if li == n_layers - 1:
            o_ref[...] = y.astype(o_ref.dtype)
        else:
            h = y.astype(jnp.bfloat16)     # next layer's MXU operand


# ----------------------------- Wrapper ---------------------------------------

def preprocess(x):
    # BaseAE.preprocess: flatten everything but the batch dim if rank > 2.
    if x.ndim > 2:
        x = x.reshape(x.shape[0], -1)
    return x


def standard_ae_forward(x, layers, *, tile_b=1024):
    """layers: list of (w_bf16, b_f32, activation). Returns bf16 reconstruction."""
    x = preprocess(x).astype(jnp.bfloat16)          # bf16 HBM-side I/O
    B, in_dim = x.shape
    assert layers[0][0].shape[0] == in_dim, (layers[0][0].shape, in_dim)
    out_dim = layers[-1][0].shape[1]

    # Pad the batch only to the bf16 sublane requirement (16), not to the tile.
    b_padded = max(16, _round_up(B, 16))
    if b_padded != B:
        x = jnp.pad(x, ((0, b_padded - B), (0, 0)))

    # Batch tile: multiple of 16 sublanes (bf16), capped at tile_b. When the
    # batch is big enough, cap at b_padded//2 so the "parallel" grid axis has
    # >= 2 steps and both v7x TensorCores are used.
    eff_tb = min(tile_b, b_padded)
    half = (b_padded // 2) // 16 * 16
    if half >= 128:
        eff_tb = min(eff_tb, half)
    grid = (pl.cdiv(b_padded, eff_tb),)             # ragged last tile is masked

    activations = tuple(act for (_, _, act) in layers)
    flat_params = []
    for (w, b, _) in layers:
        flat_params.extend([w, b])

    def build_in_specs(single_buffer_params):
        # Full-extent blocks + constant index maps -> params stay VMEM-resident.
        pkw = {"pipeline_mode": pl.Buffered(1)} if single_buffer_params else {}
        specs = [pl.BlockSpec((eff_tb, in_dim), lambda i: (i, 0))]   # x tile
        for (w, b, _) in layers:
            specs.append(pl.BlockSpec(w.shape, lambda i: (0, 0), **pkw))
            specs.append(pl.BlockSpec(b.shape, lambda i: (0, 0), **pkw))
        return specs

    flops = 2 * b_padded * sum(w.shape[0] * w.shape[1] for (w, _, _) in layers)
    transcendentals = b_padded * out_dim            # final sigmoid on the EUP
    bytes_accessed = (x.size * 2                                     # bf16 in
                      + sum(w.size * 2 + b.size * 4 for (w, b, _) in layers)
                      + b_padded * out_dim * 2)                      # bf16 out

    def run(single_buffer_params):
        return pl.pallas_call(
            functools.partial(_fused_ae_kernel, activations=activations),
            out_shape=jax.ShapeDtypeStruct((b_padded, out_dim), jnp.bfloat16),
            grid=grid,
            in_specs=build_in_specs(single_buffer_params),
            out_specs=pl.BlockSpec((eff_tb, out_dim), lambda i: (i, 0)),
            compiler_params=pltpu.CompilerParams(
                dimension_semantics=("parallel",),   # megacore sharding on v7x
                vmem_limit_bytes=48 * 1024 * 1024,   # <= v7x's 64 MiB physical
            ),
            cost_estimate=pl.CostEstimate(
                flops=flops,
                transcendentals=transcendentals,
                bytes_accessed=bytes_accessed,
            ),
        )(x, *flat_params)

    try:
        out = run(single_buffer_params=True)
    except Exception:
        # Fallback if this JAX build rejects single-buffered resident params.
        out = run(single_buffer_params=False)
    return out[:B]


# ----------------------------- Param init ------------------------------------

def init_linear_params(key, in_dim, out_dim):
    """Mirror torch.nn.Linear default init: U[-1/sqrt(in), 1/sqrt(in)]."""
    kw, kb = jax.random.split(key)
    bound = 1.0 / jnp.sqrt(jnp.asarray(in_dim, jnp.float32))
    w = jax.random.uniform(kw, (in_dim, out_dim), jnp.float32, -bound, bound)
    b = jax.random.uniform(kb, (1, out_dim), jnp.float32, -bound, bound)
    return w.astype(jnp.bfloat16), b   # bf16 weights (MXU operand), f32 bias


def pad_layers_lane_dense(layers):
    """Zero-pad inter-layer dims up to a multiple of 128 lanes.

    Padded output columns carry zero weights and zero bias, so they produce
    act(0); the corresponding padded input rows of the next weight are zero,
    so they contribute exactly nothing. Math unchanged, but every intermediate
    activation (hidden 32, latent 8) becomes lane-dense.
    """
    n = len(layers)
    padded = []
    for li, (w, b, act) in enumerate(layers):
        in_dim, out_dim = w.shape
        new_in = in_dim if li == 0 else _round_up(in_dim, 128)
        new_out = out_dim if li == n - 1 else _round_up(out_dim, 128)
        w_p = jnp.zeros((new_in, new_out), w.dtype).at[:in_dim, :out_dim].set(w)
        b_p = jnp.zeros((1, new_out), b.dtype).at[:, :out_dim].set(b)
        padded.append((w_p, b_p, act))
    return padded


def init_standard_ae_layers(key, input_dim, hidden_dims, latent_dim):
    """Fused layer list (w, b, activation) for StandardAE(activation=None):
    ReLU after every encoder layer (incl. latent projection) and every hidden
    decoder layer; Sigmoid after the final decoder layer. Narrow inter-layer
    dims are zero-padded to 128 lanes (see pad_layers_lane_dense)."""
    enc_dims = [input_dim] + list(hidden_dims) + [latent_dim]
    dec_dims = [latent_dim] + list(reversed(hidden_dims)) + [input_dim]
    n_layers = (len(enc_dims) - 1) + (len(dec_dims) - 1)
    keys = jax.random.split(key, n_layers)

    layers = []
    ki = 0
    for i in range(len(enc_dims) - 1):
        w, b = init_linear_params(keys[ki], enc_dims[i], enc_dims[i + 1]); ki += 1
        layers.append((w, b, "relu"))
    for i in range(len(dec_dims) - 1):
        w, b = init_linear_params(keys[ki], dec_dims[i], dec_dims[i + 1]); ki += 1
        is_last = i == len(dec_dims) - 2
        layers.append((w, b, "sigmoid" if is_last else "relu"))
    return pad_layers_lane_dense(layers)


# ----------------------------- Reference (pure JAX) ---------------------------

def reference_forward(x, layers):
    """Same math as the kernel (bf16 operands, f32 accumulate/epilogue, bf16 out)."""
    h = preprocess(x).astype(jnp.bfloat16)
    out = None
    for li, (w, b, act) in enumerate(layers):
        y = jnp.dot(h, w, preferred_element_type=jnp.float32) + b
        if act == "relu":
            y = jnp.maximum(y, 0.0)
        elif act == "sigmoid":
            y = jax.nn.sigmoid(y)
        if li == len(layers) - 1:
            out = y.astype(jnp.bfloat16)
        else:
            h = y.astype(jnp.bfloat16)
    return out


# --------------------------------- Main ---------------------------------------

if __name__ == "__main__":
    key = jax.random.PRNGKey(0)
    k_in, k_params = jax.random.split(key)

    # NCHW image input flattened to input_dim = C*H*W, two hidden layers,
    # small latent space.
    B, C, H, W = 2, 4, 16, 16
    input_dim = C * H * W          # 1024
    hidden_dims = [128, 32]
    latent_dim = 8

    x = jax.random.normal(k_in, (B, C, H, W), dtype=jnp.float32)
    layers = init_standard_ae_layers(k_params, input_dim, hidden_dims, latent_dim)

    recon = standard_ae_forward(x, layers)
    recon = jax.block_until_ready(recon)

    assert recon.shape == (B, input_dim), recon.shape
    assert recon.dtype == jnp.bfloat16
    recon_f32 = recon.astype(jnp.float32)
    # Sigmoid output lies in [0, 1] (inclusive: bf16/f32 sigmoid can saturate).
    assert bool(jnp.all((recon_f32 >= 0.0) & (recon_f32 <= 1.0)))
    assert bool(jnp.all(jnp.isfinite(recon_f32)))

    # Numerical check against a pure-JAX reference using the same precision.
    ref = reference_forward(x, layers).astype(jnp.float32)
    assert bool(jnp.allclose(recon_f32, ref, atol=2e-2, rtol=2e-2)), (
        float(jnp.max(jnp.abs(recon_f32 - ref))))

    print("KERNEL_OK")
</pallas_src>

<mosaic_0001>
module attributes {stable_mosaic.version = 11 : i64} {
  func.func @_fused_ae_kernel(%arg0: i32, %arg1: memref<16x1024xbf16, #tpu.memory_space<vmem>>, %arg2: memref<1024x128xbf16, #tpu.memory_space<vmem>>, %arg3: memref<1x128xf32, #tpu.memory_space<vmem>>, %arg4: memref<128x128xbf16, #tpu.memory_space<vmem>>, %arg5: memref<1x128xf32, #tpu.memory_space<vmem>>, %arg6: memref<128x128xbf16, #tpu.memory_space<vmem>>, %arg7: memref<1x128xf32, #tpu.memory_space<vmem>>, %arg8: memref<128x128xbf16, #tpu.memory_space<vmem>>, %arg9: memref<1x128xf32, #tpu.memory_space<vmem>>, %arg10: memref<128x128xbf16, #tpu.memory_space<vmem>>, %arg11: memref<1x128xf32, #tpu.memory_space<vmem>>, %arg12: memref<128x1024xbf16, #tpu.memory_space<vmem>>, %arg13: memref<1x1024xf32, #tpu.memory_space<vmem>>, %arg14: memref<16x1024xbf16, #tpu.memory_space<vmem>>) attributes {dimension_semantics = [#tpu.dimension_semantics<parallel>], iteration_bounds = array<i64: 1>, scalar_prefetch = 0 : i64, scratch_operands = 0 : i64, tpu.core_type = #tpu.core_type<tc>, window_params = [{transform_indices = @transform_0, window_bounds = array<i64: 16, 1024>}, {pipeline_mode = #tpu.pipeline_mode<synchronous>, transform_indices = @transform_1, window_bounds = array<i64: 1024, 128>}, {pipeline_mode = #tpu.pipeline_mode<synchronous>, transform_indices = @transform_2, window_bounds = array<i64: 1, 128>}, {pipeline_mode = #tpu.pipeline_mode<synchronous>, transform_indices = @transform_3, window_bounds = array<i64: 128, 128>}, {pipeline_mode = #tpu.pipeline_mode<synchronous>, transform_indices = @transform_4, window_bounds = array<i64: 1, 128>}, {pipeline_mode = #tpu.pipeline_mode<synchronous>, transform_indices = @transform_5, window_bounds = array<i64: 128, 128>}, {pipeline_mode = #tpu.pipeline_mode<synchronous>, transform_indices = @transform_6, window_bounds = array<i64: 1, 128>}, {pipeline_mode = #tpu.pipeline_mode<synchronous>, transform_indices = @transform_7, window_bounds = array<i64: 128, 128>}, {pipeline_mode = #tpu.pipeline_mode<synchronous>, transform_indices = @transform_8, window_bounds = array<i64: 1, 128>}, {pipeline_mode = #tpu.pipeline_mode<synchronous>, transform_indices = @transform_9, window_bounds = array<i64: 128, 128>}, {pipeline_mode = #tpu.pipeline_mode<synchronous>, transform_indices = @transform_10, window_bounds = array<i64: 1, 128>}, {pipeline_mode = #tpu.pipeline_mode<synchronous>, transform_indices = @transform_11, window_bounds = array<i64: 128, 1024>}, {pipeline_mode = #tpu.pipeline_mode<synchronous>, transform_indices = @transform_12, window_bounds = array<i64: 1, 1024>}, {transform_indices = @transform_13, window_bounds = array<i64: 16, 1024>}]} {
    %c0 = arith.constant 0 : index
    %c0_0 = arith.constant 0 : index
    %0 = vector.load %arg1[%c0, %c0_0] : memref<16x1024xbf16, #tpu.memory_space<vmem>>, vector<16x1024xbf16>
    %c0_1 = arith.constant 0 : index
    %c0_2 = arith.constant 0 : index
    %1 = vector.load %arg2[%c0_1, %c0_2] : memref<1024x128xbf16, #tpu.memory_space<vmem>>, vector<1024x128xbf16>
    %c0_3 = arith.constant 0 : index
    %c0_4 = arith.constant 0 : index
    %2 = vector.load %arg3[%c0_3, %c0_4] : memref<1x128xf32, #tpu.memory_space<vmem>>, vector<1x128xf32>
    %cst = arith.constant dense<0.000000e+00> : vector<16x128xf32>
    %3 = tpu.matmul %0, %1, %cst {dimension_numbers = #tpu.dot_dimension_numbers<[1], [0], [0], [1], [0, 0, 1, 1], [], []>} : vector<16x1024xbf16>, vector<1024x128xbf16>, vector<16x128xf32> -> vector<16x128xf32>
    %4 = vector.broadcast %2 : vector<1x128xf32> to vector<16x128xf32>
    %5 = arith.addf %3, %4 : vector<16x128xf32>
    %cst_5 = arith.constant 0.000000e+00 : f32
    %6 = vector.broadcast %cst_5 : f32 to vector<16x128xf32>
    %7 = arith.maximumf %5, %6 : vector<16x128xf32>
    %8 = arith.truncf %7 : vector<16x128xf32> to vector<16x128xbf16>
    %c0_6 = arith.constant 0 : index
    %c0_7 = arith.constant 0 : index
    %9 = vector.load %arg4[%c0_6, %c0_7] : memref<128x128xbf16, #tpu.memory_space<vmem>>, vector<128x128xbf16>
    %c0_8 = arith.constant 0 : index
    %c0_9 = arith.constant 0 : index
    %10 = vector.load %arg5[%c0_8, %c0_9] : memref<1x128xf32, #tpu.memory_space<vmem>>, vector<1x128xf32>
    %cst_10 = arith.constant dense<0.000000e+00> : vector<16x128xf32>
    %11 = tpu.matmul %8, %9, %cst_10 {dimension_numbers = #tpu.dot_dimension_numbers<[1], [0], [0], [1], [0, 0, 1, 1], [], []>} : vector<16x128xbf16>, vector<128x128xbf16>, vector<16x128xf32> -> vector<16x128xf32>
    %12 = vector.broadcast %10 : vector<1x128xf32> to vector<16x128xf32>
    %13 = arith.addf %11, %12 : vector<16x128xf32>
    %cst_11 = arith.constant 0.000000e+00 : f32
    %14 = vector.broadcast %cst_11 : f32 to vector<16x128xf32>
    %15 = arith.maximumf %13, %14 : vector<16x128xf32>
    %16 = arith.truncf %15 : vector<16x128xf32> to vector<16x128xbf16>
    %c0_12 = arith.constant 0 : index
    %c0_13 = arith.constant 0 : index
    %17 = vector.load %arg6[%c0_12, %c0_13] : memref<128x128xbf16, #tpu.memory_space<vmem>>, vector<128x128xbf16>
    %c0_14 = arith.constant 0 : index
    %c0_15 = arith.constant 0 : index
    %18 = vector.load %arg7[%c0_14, %c0_15] : memref<1x128xf32, #tpu.memory_space<vmem>>, vector<1x128xf32>
    %cst_16 = arith.constant dense<0.000000e+00> : vector<16x128xf32>
    %19 = tpu.matmul %16, %17, %cst_16 {dimension_numbers = #tpu.dot_dimension_numbers<[1], [0], [0], [1], [0, 0, 1, 1], [], []>} : vector<16x128xbf16>, vector<128x128xbf16>, vector<16x128xf32> -> vector<16x128xf32>
    %20 = vector.broadcast %18 : vector<1x128xf32> to vector<16x128xf32>
    %21 = arith.addf %19, %20 : vector<16x128xf32>
    %cst_17 = arith.constant 0.000000e+00 : f32
    %22 = vector.broadcast %cst_17 : f32 to vector<16x128xf32>
    %23 = arith.maximumf %21, %22 : vector<16x128xf32>
    %24 = arith.truncf %23 : vector<16x128xf32> to vector<16x128xbf16>
    %c0_18 = arith.constant 0 : index
    %c0_19 = arith.constant 0 : index
    %25 = vector.load %arg8[%c0_18, %c0_19] : memref<128x128xbf16, #tpu.memory_space<vmem>>, vector<128x128xbf16>
    %c0_20 = arith.constant 0 : index
    %c0_21 = arith.constant 0 : index
    %26 = vector.load %arg9[%c0_20, %c0_21] : memref<1x128xf32, #tpu.memory_space<vmem>>, vector<1x128xf32>
    %cst_22 = arith.constant dense<0.000000e+00> : vector<16x128xf32>
    %27 = tpu.matmul %24, %25, %cst_22 {dimension_numbers = #tpu.dot_dimension_numbers<[1], [0], [0], [1], [0, 0, 1, 1], [], []>} : vector<16x128xbf16>, vector<128x128xbf16>, vector<16x128xf32> -> vector<16x128xf32>
    %28 = vector.broadcast %26 : vector<1x128xf32> to vector<16x128xf32>
    %29 = arith.addf %27, %28 : vector<16x128xf32>
    %cst_23 = arith.constant 0.000000e+00 : f32
    %30 = vector.broadcast %cst_23 : f32 to vector<16x128xf32>
    %31 = arith.maximumf %29, %30 : vector<16x128xf32>
    %32 = arith.truncf %31 : vector<16x128xf32> to vector<16x128xbf16>
    %c0_24 = arith.constant 0 : index
    %c0_25 = arith.constant 0 : index
    %33 = vector.load %arg10[%c0_24, %c0_25] : memref<128x128xbf16, #tpu.memory_space<vmem>>, vector<128x128xbf16>
    %c0_26 = arith.constant 0 : index
    %c0_27 = arith.constant 0 : index
    %34 = vector.load %arg11[%c0_26, %c0_27] : memref<1x128xf32, #tpu.memory_space<vmem>>, vector<1x128xf32>
    %cst_28 = arith.constant dense<0.000000e+00> : vector<16x128xf32>
    %35 = tpu.matmul %32, %33, %cst_28 {dimension_numbers = #tpu.dot_dimension_numbers<[1], [0], [0], [1], [0, 0, 1, 1], [], []>} : vector<16x128xbf16>, vector<128x128xbf16>, vector<16x128xf32> -> vector<16x128xf32>
    %36 = vector.broadcast %34 : vector<1x128xf32> to vector<16x128xf32>
    %37 = arith.addf %35, %36 : vector<16x128xf32>
    %cst_29 = arith.constant 0.000000e+00 : f32
    %38 = vector.broadcast %cst_29 : f32 to vector<16x128xf32>
    %39 = arith.maximumf %37, %38 : vector<16x128xf32>
    %40 = arith.truncf %39 : vector<16x128xf32> to vector<16x128xbf16>
    %c0_30 = arith.constant 0 : index
    %c0_31 = arith.constant 0 : index
    %41 = vector.load %arg12[%c0_30, %c0_31] : memref<128x1024xbf16, #tpu.memory_space<vmem>>, vector<128x1024xbf16>
    %c0_32 = arith.constant 0 : index
    %c0_33 = arith.constant 0 : index
    %42 = vector.load %arg13[%c0_32, %c0_33] : memref<1x1024xf32, #tpu.memory_space<vmem>>, vector<1x1024xf32>
    %cst_34 = arith.constant dense<0.000000e+00> : vector<16x1024xf32>
    %43 = tpu.matmul %40, %41, %cst_34 {dimension_numbers = #tpu.dot_dimension_numbers<[1], [0], [0], [1], [0, 0, 1, 1], [], []>} : vector<16x128xbf16>, vector<128x1024xbf16>, vector<16x1024xf32> -> vector<16x1024xf32>
    %44 = vector.broadcast %42 : vector<1x1024xf32> to vector<16x1024xf32>
    %45 = arith.addf %43, %44 : vector<16x1024xf32>
    %46 = arith.negf %45 : vector<16x1024xf32>
    %47 = math.exp %46 : vector<16x1024xf32>
    %cst_35 = arith.constant 1.000000e+00 : f32
    %48 = vector.broadcast %cst_35 : f32 to vector<16x1024xf32>
    %49 = arith.addf %48, %47 : vector<16x1024xf32>
    %50 = arith.divf %48, %49 : vector<16x1024xf32>
    %51 = arith.truncf %50 : vector<16x1024xf32> to vector<16x1024xbf16>
    %c0_36 = arith.constant 0 : index
    %c0_37 = arith.constant 0 : index
    %52 = vector.load %arg14[%c0_36, %c0_37] : memref<16x1024xbf16, #tpu.memory_space<vmem>>, vector<16x1024xbf16>
    tpu.vector_store %arg14[%c0_36, %c0_37], %51 {strides = array<i32>} : memref<16x1024xbf16, #tpu.memory_space<vmem>>, vector<16x1024xbf16>,
    return
  }
  func.func @transform_0(%arg0: i32) -> (i32, i32) {
    %c0_i32 = arith.constant 0 : i32
    %c0_i32_0 = arith.constant 0 : i32
    return %arg0, %c0_i32 : i32, i32
  }
  func.func @transform_1(%arg0: i32) -> (i32, i32) {
    %c0_i32 = arith.constant 0 : i32
    %c0_i32_0 = arith.constant 0 : i32
    %c0_i32_1 = arith.constant 0 : i32
    return %c0_i32, %c0_i32_0 : i32, i32
  }
  func.func @transform_2(%arg0: i32) -> (i32, i32) {
    %c0_i32 = arith.constant 0 : i32
    %c0_i32_0 = arith.constant 0 : i32
    %c0_i32_1 = arith.constant 0 : i32
    return %c0_i32, %c0_i32_0 : i32, i32
  }
  func.func @transform_3(%arg0: i32) -> (i32, i32) {
    %c0_i32 = arith.constant 0 : i32
    %c0_i32_0 = arith.constant 0 : i32
    %c0_i32_1 = arith.constant 0 : i32
    return %c0_i32, %c0_i32_0 : i32, i32
  }
  func.func @transform_4(%arg0: i32) -> (i32, i32) {
    %c0_i32 = arith.constant 0 : i32
    %c0_i32_0 = arith.constant 0 : i32
    %c0_i32_1 = arith.constant 0 : i32
    return %c0_i32, %c0_i32_0 : i32, i32
  }
  func.func @transform_5(%arg0: i32) -> (i32, i32) {
    %c0_i32 = arith.constant 0 : i32
    %c0_i32_0 = arith.constant 0 : i32
    %c0_i32_1 = arith.constant 0 : i32
    return %c0_i32, %c0_i32_0 : i32, i32
  }
  func.func @transform_6(%arg0: i32) -> (i32, i32) {
    %c0_i32 = arith.constant 0 : i32
    %c0_i32_0 = arith.constant 0 : i32
    %c0_i32_1 = arith.constant 0 : i32
    return %c0_i32, %c0_i32_0 : i32, i32
  }
  func.func @transform_7(%arg0: i32) -> (i32, i32) {
    %c0_i32 = arith.constant 0 : i32
    %c0_i32_0 = arith.constant 0 : i32
    %c0_i32_1 = arith.constant 0 : i32
    return %c0_i32, %c0_i32_0 : i32, i32
  }
  func.func @transform_8(%arg0: i32) -> (i32, i32) {
    %c0_i32 = arith.constant 0 : i32
    %c0_i32_0 = arith.constant 0 : i32
    %c0_i32_1 = arith.constant 0 : i32
    return %c0_i32, %c0_i32_0 : i32, i32
  }
  func.func @transform_9(%arg0: i32) -> (i32, i32) {
    %c0_i32 = arith.constant 0 : i32
    %c0_i32_0 = arith.constant 0 : i32
    %c0_i32_1 = arith.constant 0 : i32
    return %c0_i32, %c0_i32_0 : i32, i32
  }
  func.func @transform_10(%arg0: i32) -> (i32, i32) {
    %c0_i32 = arith.constant 0 : i32
    %c0_i32_0 = arith.constant 0 : i32
    %c0_i32_1 = arith.constant 0 : i32
    return %c0_i32, %c0_i32_0 : i32, i32
  }
  func.func @transform_11(%arg0: i32) -> (i32, i32) {
    %c0_i32 = arith.constant 0 : i32
    %c0_i32_0 = arith.constant 0 : i32
    %c0_i32_1 = arith.constant 0 : i32
    return %c0_i32, %c0_i32_0 : i32, i32
  }
  func.func @transform_12(%arg0: i32) -> (i32, i32) {
    %c0_i32 = arith.constant 0 : i32
    %c0_i32_0 = arith.constant 0 : i32
    %c0_i32_1 = arith.constant 0 : i32
    return %c0_i32, %c0_i32_0 : i32, i32
  }
  func.func @transform_13(%arg0: i32) -> (i32, i32) {
    %c0_i32 = arith.constant 0 : i32
    %c0_i32_0 = arith.constant 0 : i32
    return %arg0, %c0_i32 : i32, i32
  }
}

module attributes {stable_mosaic.version = 11 : i64} {
  func.func @_fused_ae_kernel(%arg0: i32, %arg1: memref<16x1024xbf16, #tpu.memory_space<vmem>>, %arg2: memref<1024x128xbf16, #tpu.memory_space<vmem>>, %arg3: memref<1x128xf32, #tpu.memory_space<vmem>>, %arg4: memref<128x128xbf16, #tpu.memory_space<vmem>>, %arg5: memref<1x128xf32, #tpu.memory_space<vmem>>, %arg6: memref<128x128xbf16, #tpu.memory_space<vmem>>, %arg7: memref<1x128xf32, #tpu.memory_space<vmem>>, %arg8: memref<128x128xbf16, #tpu.memory_space<vmem>>, %arg9: memref<1x128xf32, #tpu.memory_space<vmem>>, %arg10: memref<128x128xbf16, #tpu.memory_space<vmem>>, %arg11: memref<1x128xf32, #tpu.memory_space<vmem>>, %arg12: memref<128x1024xbf16, #tpu.memory_space<vmem>>, %arg13: memref<1x1024xf32, #tpu.memory_space<vmem>>, %arg14: memref<16x1024xbf16, #tpu.memory_space<vmem>>) attributes {dimension_semantics = [#tpu.dimension_semantics<parallel>], iteration_bounds = array<i64: 1>, scalar_prefetch = 0 : i64, scratch_operands = 0 : i64, tpu.core_type = #tpu.core_type<tc>, window_params = [{transform_indices = @transform_0, window_bounds = array<i64: 16, 1024>}, {pipeline_mode = #tpu.pipeline_mode<synchronous>, transform_indices = @transform_1, window_bounds = array<i64: 1024, 128>}, {pipeline_mode = #tpu.pipeline_mode<synchronous>, transform_indices = @transform_2, window_bounds = array<i64: 1, 128>}, {pipeline_mode = #tpu.pipeline_mode<synchronous>, transform_indices = @transform_3, window_bounds = array<i64: 128, 128>}, {pipeline_mode = #tpu.pipeline_mode<synchronous>, transform_indices = @transform_4, window_bounds = array<i64: 1, 128>}, {pipeline_mode = #tpu.pipeline_mode<synchronous>, transform_indices = @transform_5, window_bounds = array<i64: 128, 128>}, {pipeline_mode = #tpu.pipeline_mode<synchronous>, transform_indices = @transform_6, window_bounds = array<i64: 1, 128>}, {pipeline_mode = #tpu.pipeline_mode<synchronous>, transform_indices = @transform_7, window_bounds = array<i64: 128, 128>}, {pipeline_mode = #tpu.pipeline_mode<synchronous>, transform_indices = @transform_8, window_bounds = array<i64: 1, 128>}, {pipeline_mode = #tpu.pipeline_mode<synchronous>, transform_indices = @transform_9, window_bounds = array<i64: 128, 128>}, {pipeline_mode = #tpu.pipeline_mode<synchronous>, transform_indices = @transform_10, window_bounds = array<i64: 1, 128>}, {pipeline_mode = #tpu.pipeline_mode<synchronous>, transform_indices = @transform_11, window_bounds = array<i64: 128, 1024>}, {pipeline_mode = #tpu.pipeline_mode<synchronous>, transform_indices = @transform_12, window_bounds = array<i64: 1, 1024>}, {transform_indices = @transform_13, window_bounds = array<i64: 16, 1024>}]} {
    %c0 = arith.constant 0 : index
    %c0_0 = arith.constant 0 : index
    %0 = vector.load %arg1[%c0, %c0_0] : memref<16x1024xbf16, #tpu.memory_space<vmem>>, vector<16x1024xbf16>
    %c0_1 = arith.constant 0 : index
    %c0_2 = arith.constant 0 : index
    %1 = vector.load %arg2[%c0_1, %c0_2] : memref<1024x128xbf16, #tpu.memory_space<vmem>>, vector<1024x128xbf16>
    %c0_3 = arith.constant 0 : index
    %c0_4 = arith.constant 0 : index
    %2 = vector.load %arg3[%c0_3, %c0_4] : memref<1x128xf32, #tpu.memory_space<vmem>>, vector<1x128xf32>
    %cst = arith.constant dense<0.000000e+00> : vector<16x128xf32>
    %3 = tpu.matmul %0, %1, %cst {dimension_numbers = #tpu.dot_dimension_numbers<[1], [0], [0], [1], [0, 0, 1, 1], [], []>} : vector<16x1024xbf16>, vector<1024x128xbf16>, vector<16x128xf32> -> vector<16x128xf32>
    %4 = vector.broadcast %2 : vector<1x128xf32> to vector<16x128xf32>
    %5 = arith.addf %3, %4 : vector<16x128xf32>
    %cst_5 = arith.constant 0.000000e+00 : f32
    %6 = vector.broadcast %cst_5 : f32 to vector<16x128xf32>
    %7 = arith.maximumf %5, %6 : vector<16x128xf32>
    %8 = arith.truncf %7 : vector<16x128xf32> to vector<16x128xbf16>
    %c0_6 = arith.constant 0 : index
    %c0_7 = arith.constant 0 : index
    %9 = vector.load %arg4[%c0_6, %c0_7] : memref<128x128xbf16, #tpu.memory_space<vmem>>, vector<128x128xbf16>
    %c0_8 = arith.constant 0 : index
    %c0_9 = arith.constant 0 : index
    %10 = vector.load %arg5[%c0_8, %c0_9] : memref<1x128xf32, #tpu.memory_space<vmem>>, vector<1x128xf32>
    %cst_10 = arith.constant dense<0.000000e+00> : vector<16x128xf32>
    %11 = tpu.matmul %8, %9, %cst_10 {dimension_numbers = #tpu.dot_dimension_numbers<[1], [0], [0], [1], [0, 0, 1, 1], [], []>} : vector<16x128xbf16>, vector<128x128xbf16>, vector<16x128xf32> -> vector<16x128xf32>
    %12 = vector.broadcast %10 : vector<1x128xf32> to vector<16x128xf32>
    %13 = arith.addf %11, %12 : vector<16x128xf32>
    %cst_11 = arith.constant 0.000000e+00 : f32
    %14 = vector.broadcast %cst_11 : f32 to vector<16x128xf32>
    %15 = arith.maximumf %13, %14 : vector<16x128xf32>
    %16 = arith.truncf %15 : vector<16x128xf32> to vector<16x128xbf16>
    %c0_12 = arith.constant 0 : index
    %c0_13 = arith.constant 0 : index
    %17 = vector.load %arg6[%c0_12, %c0_13] : memref<128x128xbf16, #tpu.memory_space<vmem>>, vector<128x128xbf16>
    %c0_14 = arith.constant 0 : index
    %c0_15 = arith.constant 0 : index
    %18 = vector.load %arg7[%c0_14, %c0_15] : memref<1x128xf32, #tpu.memory_space<vmem>>, vector<1x128xf32>
    %cst_16 = arith.constant dense<0.000000e+00> : vector<16x128xf32>
    %19 = tpu.matmul %16, %17, %cst_16 {dimension_numbers = #tpu.dot_dimension_numbers<[1], [0], [0], [1], [0, 0, 1, 1], [], []>} : vector<16x128xbf16>, vector<128x128xbf16>, vector<16x128xf32> -> vector<16x128xf32>
    %20 = vector.broadcast %18 : vector<1x128xf32> to vector<16x128xf32>
    %21 = arith.addf %19, %20 : vector<16x128xf32>
    %cst_17 = arith.constant 0.000000e+00 : f32
    %22 = vector.broadcast %cst_17 : f32 to vector<16x128xf32>
    %23 = arith.maximumf %21, %22 : vector<16x128xf32>
    %24 = arith.truncf %23 : vector<16x128xf32> to vector<16x128xbf16>
    %c0_18 = arith.constant 0 : index
    %c0_19 = arith.constant 0 : index
    %25 = vector.load %arg8[%c0_18, %c0_19] : memref<128x128xbf16, #tpu.memory_space<vmem>>, vector<128x128xbf16>
    %c0_20 = arith.constant 0 : index
    %c0_21 = arith.constant 0 : index
    %26 = vector.load %arg9[%c0_20, %c0_21] : memref<1x128xf32, #tpu.memory_space<vmem>>, vector<1x128xf32>
    %cst_22 = arith.constant dense<0.000000e+00> : vector<16x128xf32>
    %27 = tpu.matmul %24, %25, %cst_22 {dimension_numbers = #tpu.dot_dimension_numbers<[1], [0], [0], [1], [0, 0, 1, 1], [], []>} : vector<16x128xbf16>, vector<128x128xbf16>, vector<16x128xf32> -> vector<16x128xf32>
    %28 = vector.broadcast %26 : vector<1x128xf32> to vector<16x128xf32>
    %29 = arith.addf %27, %28 : vector<16x128xf32>
    %cst_23 = arith.constant 0.000000e+00 : f32
    %30 = vector.broadcast %cst_23 : f32 to vector<16x128xf32>
    %31 = arith.maximumf %29, %30 : vector<16x128xf32>
    %32 = arith.truncf %31 : vector<16x128xf32> to vector<16x128xbf16>
    %c0_24 = arith.constant 0 : index
    %c0_25 = arith.constant 0 : index
    %33 = vector.load %arg10[%c0_24, %c0_25] : memref<128x128xbf16, #tpu.memory_space<vmem>>, vector<128x128xbf16>
    %c0_26 = arith.constant 0 : index
    %c0_27 = arith.constant 0 : index
    %34 = vector.load %arg11[%c0_26, %c0_27] : memref<1x128xf32, #tpu.memory_space<vmem>>, vector<1x128xf32>
    %cst_28 = arith.constant dense<0.000000e+00> : vector<16x128xf32>
    %35 = tpu.matmul %32, %33, %cst_28 {dimension_numbers = #tpu.dot_dimension_numbers<[1], [0], [0], [1], [0, 0, 1, 1], [], []>} : vector<16x128xbf16>, vector<128x128xbf16>, vector<16x128xf32> -> vector<16x128xf32>
    %36 = vector.broadcast %34 : vector<1x128xf32> to vector<16x128xf32>
    %37 = arith.addf %35, %36 : vector<16x128xf32>
    %cst_29 = arith.constant 0.000000e+00 : f32
    %38 = vector.broadcast %cst_29 : f32 to vector<16x128xf32>
    %39 = arith.maximumf %37, %38 : vector<16x128xf32>
    %40 = arith.truncf %39 : vector<16x128xf32> to vector<16x128xbf16>
    %c0_30 = arith.constant 0 : index
    %c0_31 = arith.constant 0 : index
    %41 = vector.load %arg12[%c0_30, %c0_31] : memref<128x1024xbf16, #tpu.memory_space<vmem>>, vector<128x1024xbf16>
    %c0_32 = arith.constant 0 : index
    %c0_33 = arith.constant 0 : index
    %42 = vector.load %arg13[%c0_32, %c0_33] : memref<1x1024xf32, #tpu.memory_space<vmem>>, vector<1x1024xf32>
    %cst_34 = arith.constant dense<0.000000e+00> : vector<16x1024xf32>
    %43 = tpu.matmul %40, %41, %cst_34 {dimension_numbers = #tpu.dot_dimension_numbers<[1], [0], [0], [1], [0, 0, 1, 1], [], []>} : vector<16x128xbf16>, vector<128x1024xbf16>, vector<16x1024xf32> -> vector<16x1024xf32>
    %44 = vector.broadcast %42 : vector<1x1024xf32> to vector<16x1024xf32>
    %45 = arith.addf %43, %44 : vector<16x1024xf32>
    %46 = arith.negf %45 : vector<16x1024xf32>
    %47 = math.exp %46 : vector<16x1024xf32>
    %cst_35 = arith.constant 1.000000e+00 : f32
    %48 = vector.broadcast %cst_35 : f32 to vector<16x1024xf32>
    %49 = arith.addf %48, %47 : vector<16x1024xf32>
    %50 = arith.divf %48, %49 : vector<16x1024xf32>
    %51 = arith.truncf %50 : vector<16x1024xf32> to vector<16x1024xbf16>
    %c0_36 = arith.constant 0 : index
    %c0_37 = arith.constant 0 : index
    %52 = vector.load %arg14[%c0_36, %c0_37] : memref<16x1024xbf16, #tpu.memory_space<vmem>>, vector<16x1024xbf16>
    tpu.vector_store %arg14[%c0_36, %c0_37], %51 {strides = array<i32>} : memref<16x1024xbf16, #tpu.memory_space<vmem>>, vector<16x1024xbf16>,
    return
  }
  func.func @transform_0(%arg0: i32) -> (i32, i32) {
    %c0_i32 = arith.constant 0 : i32
    %c0_i32_0 = arith.constant 0 : i32
    return %arg0, %c0_i32 : i32, i32
  }
  func.func @transform_1(%arg0: i32) -> (i32, i32) {
    %c0_i32 = arith.constant 0 : i32
    %c0_i32_0 = arith.constant 0 : i32
    %c0_i32_1 = arith.constant 0 : i32
    return %c0_i32, %c0_i32_0 : i32, i32
  }
  func.func @transform_2(%arg0: i32) -> (i32, i32) {
    %c0_i32 = arith.constant 0 : i32
    %c0_i32_0 = arith.constant 0 : i32
    %c0_i32_1 = arith.constant 0 : i32
    return %c0_i32, %c0_i32_0 : i32, i32
  }
  func.func @transform_3(%arg0: i32) -> (i32, i32) {
    %c0_i32 = arith.constant 0 : i32
    %c0_i32_0 = arith.constant 0 : i32
    %c0_i32_1 = arith.constant 0 : i32
    return %c0_i32, %c0_i32_0 : i32, i32
  }
  func.func @transform_4(%arg0: i32) -> (i32, i32) {
    %c0_i32 = arith.constant 0 : i32
    %c0_i32_0 = arith.constant 0 : i32
    %c0_i32_1 = arith.constant 0 : i32
    return %c0_i32, %c0_i32_0 : i32, i32
  }
  func.func @transform_5(%arg0: i32) -> (i32, i32) {
    %c0_i32 = arith.constant 0 : i32
    %c0_i32_0 = arith.constant 0 : i32
    %c0_i32_1 = arith.constant 0 : i32
    return %c0_i32, %c0_i32_0 : i32, i32
  }
  func.func @transform_6(%arg0: i32) -> (i32, i32) {
    %c0_i32 = arith.constant 0 : i32
    %c0_i32_0 = arith.constant 0 : i32
    %c0_i32_1 = arith.constant 0 : i32
    return %c0_i32, %c0_i32_0 : i32, i32
  }
  func.func @transform_7(%arg0: i32) -> (i32, i32) {
    %c0_i32 = arith.constant 0 : i32
    %c0_i32_0 = arith.constant 0 : i32
    %c0_i32_1 = arith.constant 0 : i32
    return %c0_i32, %c0_i32_0 : i32, i32
  }
  func.func @transform_8(%arg0: i32) -> (i32, i32) {
    %c0_i32 = arith.constant 0 : i32
    %c0_i32_0 = arith.constant 0 : i32
    %c0_i32_1 = arith.constant 0 : i32
    return %c0_i32, %c0_i32_0 : i32, i32
  }
  func.func @transform_9(%arg0: i32) -> (i32, i32) {
    %c0_i32 = arith.constant 0 : i32
    %c0_i32_0 = arith.constant 0 : i32
    %c0_i32_1 = arith.constant 0 : i32
    return %c0_i32, %c0_i32_0 : i32, i32
  }
  func.func @transform_10(%arg0: i32) -> (i32, i32) {
    %c0_i32 = arith.constant 0 : i32
    %c0_i32_0 = arith.constant 0 : i32
    %c0_i32_1 = arith.constant 0 : i32
    return %c0_i32, %c0_i32_0 : i32, i32
  }
  func.func @transform_11(%arg0: i32) -> (i32, i32) {
    %c0_i32 = arith.constant 0 : i32
    %c0_i32_0 = arith.constant 0 : i32
    %c0_i32_1 = arith.constant 0 : i32
    return %c0_i32, %c0_i32_0 : i32, i32
  }
  func.func @transform_12(%arg0: i32) -> (i32, i32) {
    %c0_i32 = arith.constant 0 : i32
    %c0_i32_0 = arith.constant 0 : i32
    %c0_i32_1 = arith.constant 0 : i32
    return %c0_i32, %c0_i32_0 : i32, i32
  }
  func.func @transform_13(%arg0: i32) -> (i32, i32) {
    %c0_i32 = arith.constant 0 : i32
    %c0_i32_0 = arith.constant 0 : i32
    return %arg0, %c0_i32 : i32, i32
  }
}

</mosaic_0001>

<llo_original>
// kernel: tpu_custom_call.1
$region0: #{tpu_custom_call.1}
  #allocation0 [shape = 'u32[]', space=smem, size = 0x4, offset = 0x4, fixed_abs, tag = 'smem constant byte address 0x4 - core index']
  #allocation1 [shape = 'u32[144,128]{1,0:T(1,128)}', space=vmem, size = 0x12000, scoped, tag = 'internal scratch']
  %s0 = inlined_call_operand.hbm [shape: bf16[16,1024], index: 0, kind: input, shape index: {}]
  %s1 = inlined_call_operand.hbm [shape: bf16[1024,128], index: 1, kind: input, shape index: {}]
  %s2 = inlined_call_operand.vmem [shape: f32[1,128], index: 2, kind: input, shape index: {}]
  %s3 = inlined_call_operand.hbm [shape: bf16[128,128], index: 3, kind: input, shape index: {}]
  %s4 = inlined_call_operand.vmem [shape: f32[1,128], index: 4, kind: input, shape index: {}]
  %s5 = inlined_call_operand.hbm [shape: bf16[128,128], index: 5, kind: input, shape index: {}]
  %s6 = inlined_call_operand.vmem [shape: f32[1,128], index: 6, kind: input, shape index: {}]
  %s7 = inlined_call_operand.hbm [shape: bf16[128,128], index: 7, kind: input, shape index: {}]
  %s8 = inlined_call_operand.vmem [shape: f32[1,128], index: 8, kind: input, shape index: {}]
  %s9 = inlined_call_operand.hbm [shape: bf16[128,128], index: 9, kind: input, shape index: {}]
  %s10 = inlined_call_operand.vmem [shape: f32[1,128], index: 10, kind: input, shape index: {}]
  %s11 = inlined_call_operand.hbm [shape: bf16[128,1024], index: 11, kind: input, shape index: {}]
  %s12 = inlined_call_operand.vmem [shape: f32[1,1024], index: 12, kind: input, shape index: {}]
  %s13 = inlined_call_operand.hbm [shape: bf16[16,1024], index: 13, kind: output, shape index: {}]
  %s14 = sld [smem:[#allocation0]]
  $region90: #{tpu_custom_call.1} parent=0
    _
  %s16 = ssub.s32 1, %s14
  %s17 = scalar_select 0, %s16, %s14
  $region1: #{tpu_custom_call.1} parent=0
    #allocation2 [shape = 'u8[32768]{0}', space=vmem, size = 0x8000, scoped, tag = 'input window, operand 0, single buffered']
    #allocation3 [shape = 's32[1]{0}', space=sflag, size = 0x4, scoped, tag = 'scoped memory for tpu_custom_call.1']
    #allocation4 [shape = 's32[1]{0}', space=sflag, size = 0x4, scoped, tag = 'scoped memory for tpu_custom_call.1']
    #allocation5 [shape = 'u8[262144]{0}', space=vmem, size = 0x40000, scoped, tag = 'input window, operand 1, single buffered']
    #allocation6 [shape = 's32[1]{0}', space=sflag, size = 0x4, scoped, tag = 'scoped memory for tpu_custom_call.1']
    #allocation7 [shape = 'u8[32768]{0}', space=vmem, size = 0x8000, scoped, tag = 'input window, operand 3, single buffered']
    #allocation8 [shape = 'u8[32768]{0}', space=vmem, size = 0x8000, scoped, tag = 'input window, operand 5, single buffered']
    #allocation9 [shape = 's32[1]{0}', space=sflag, size = 0x4, scoped, tag = 'scoped memory for tpu_custom_call.1']
    #allocation10 [shape = 'u8[32768]{0}', space=vmem, size = 0x8000, scoped, tag = 'input window, operand 7, single buffered']
    #allocation11 [shape = 'u8[32768]{0}', space=vmem, size = 0x8000, scoped, tag = 'input window, operand 9, single buffered']
    #allocation12 [shape = 's32[1]{0}', space=sflag, size = 0x4, scoped, tag = 'scoped memory for tpu_custom_call.1']
    #allocation13 [shape = 'u8[262144]{0}', space=vmem, size = 0x40000, scoped, tag = 'input window, operand 11, single buffered']
    #allocation14 [shape = 'u8[32768]{0}', space=vmem, size = 0x8000, scoped, tag = 'output window, operand 0, single buffered']
    %18 = vsyncpa [#allocation3], 0
    %19 = vsyncpa [#allocation6], 0
    %20 = vsyncpa [#allocation9], 0
    %21 = vsyncpa [#allocation12], 0
    %22 = vsyncpa [#allocation4], 0
    // Predicated region
    $region2: #{tpu_custom_call.1} parent=1 // pred_check
      _
    $region3: #{tpu_custom_call.1} parent=1 // pred_check_branch
      %24 = sbr.rel (0) target = $region5
    $region4: #{tpu_custom_call.1} parent=1 // pred_region
      %s26 = ssub.s32 1024, 1024
      %27 = vsyncadd [#allocation3], %s26
      %s28 = sshll.u32 [#allocation2], 4
      %s29 = int_to_ptr.vmem [resolvable:$true] %s28
      %34 = dma.hbm_to_vmem [thread:$0]  %s0, 1024, %s29, [#allocation3], 512, 512, 32
    $region5: #{tpu_custom_call.1} parent=1 // pred_fallthru
      _
    // Predicated region
    $region6: #{tpu_custom_call.1} parent=1 // pred_check
      _
    $region7: #{tpu_custom_call.1} parent=1 // pred_check_branch
      %36 = sbr.rel (0) target = $region9
    $region8: #{tpu_custom_call.1} parent=1 // pred_region
      %s38 = ssub.s32 8192, 8192
      %39 = vsyncadd [#allocation6], %s38
      %s40 = sshll.u32 [#allocation5], 4
      %s41 = int_to_ptr.vmem [resolvable:$true] %s40
      %46 = dma.hbm_to_vmem [thread:$0]  %s1, 8192, %s41, [#allocation6], 64, 64, 4
    $region9: #{tpu_custom_call.1} parent=1 // pred_fallthru
      _
    // Predicated region
    $region10: #{tpu_custom_call.1} parent=1 // pred_check
      _
    $region11: #{tpu_custom_call.1} parent=1 // pred_check_branch
      %48 = sbr.rel (0) target = $region13
    $region12: #{tpu_custom_call.1} parent=1 // pred_region
      _
    $region13: #{tpu_custom_call.1} parent=1 // pred_fallthru
      _
    // Predicated region
    $region14: #{tpu_custom_call.1} parent=1 // pred_check
      _
    $region15: #{tpu_custom_call.1} parent=1 // pred_check_branch
      %50 = sbr.rel (0) target = $region17
    $region16: #{tpu_custom_call.1} parent=1 // pred_region
      %s52 = ssub.s32 1024, 1024
      %53 = vsyncadd [#allocation6], %s52
      %s54 = sshll.u32 [#allocation7], 4
      %s55 = int_to_ptr.vmem [resolvable:$true] %s54
      %60 = dma.hbm_to_vmem [thread:$0]  %s3, 1024, %s55, [#allocation6], 64, 64, 4
    $region17: #{tpu_custom_call.1} parent=1 // pred_fallthru
      _
    // Predicated region
    $region18: #{tpu_custom_call.1} parent=1 // pred_check
      _
    $region19: #{tpu_custom_call.1} parent=1 // pred_check_branch
      %62 = sbr.rel (0) target = $region21
    $region20: #{tpu_custom_call.1} parent=1 // pred_region
      _
    $region21: #{tpu_custom_call.1} parent=1 // pred_fallthru
      _
    // Predicated region
    $region22: #{tpu_custom_call.1} parent=1 // pred_check
      _
    $region23: #{tpu_custom_call.1} parent=1 // pred_check_branch
      %64 = sbr.rel (0) target = $region25
    $region24: #{tpu_custom_call.1} parent=1 // pred_region
      %s66 = ssub.s32 1024, 1024
      %67 = vsyncadd [#allocation9], %s66
      %s68 = sshll.u32 [#allocation8], 4
      %s69 = int_to_ptr.vmem [resolvable:$true] %s68
      %74 = dma.hbm_to_vmem [thread:$0]  %s5, 1024, %s69, [#allocation9], 64, 64, 4
    $region25: #{tpu_custom_call.1} parent=1 // pred_fallthru
      _
    // Predicated region
    $region26: #{tpu_custom_call.1} parent=1 // pred_check
      _
    $region27: #{tpu_custom_call.1} parent=1 // pred_check_branch
      %76 = sbr.rel (0) target = $region29
    $region28: #{tpu_custom_call.1} parent=1 // pred_region
      _
    $region29: #{tpu_custom_call.1} parent=1 // pred_fallthru
      _
    // Predicated region
    $region30: #{tpu_custom_call.1} parent=1 // pred_check
      _
    $region31: #{tpu_custom_call.1} parent=1 // pred_check_branch
      %78 = sbr.rel (0) target = $region33
    $region32: #{tpu_custom_call.1} parent=1 // pred_region
      %s80 = ssub.s32 1024, 1024
      %81 = vsyncadd [#allocation9], %s80
      %s82 = sshll.u32 [#allocation10], 4
      %s83 = int_to_ptr.vmem [resolvable:$true] %s82
      %88 = dma.hbm_to_vmem [thread:$0]  %s7, 1024, %s83, [#allocation9], 64, 64, 4
    $region33: #{tpu_custom_call.1} parent=1 // pred_fallthru
      _
    // Predicated region
    $region34: #{tpu_custom_call.1} parent=1 // pred_check
      _
    $region35: #{tpu_custom_call.1} parent=1 // pred_check_branch
      %90 = sbr.rel (0) target = $region37
    $region36: #{tpu_custom_call.1} parent=1 // pred_region
      _
    $region37: #{tpu_custom_call.1} parent=1 // pred_fallthru
      _
    // Predicated region
    $region38: #{tpu_custom_call.1} parent=1 // pred_check
      _
    $region39: #{tpu_custom_call.1} parent=1 // pred_check_branch
      %92 = sbr.rel (0) target = $region41
    $region40: #{tpu_custom_call.1} parent=1 // pred_region
      %s94 = ssub.s32 1024, 1024
      %95 = vsyncadd [#allocation12], %s94
      %s96 = sshll.u32 [#allocation11], 4
      %s97 = int_to_ptr.vmem [resolvable:$true] %s96
      %102 = dma.hbm_to_vmem [thread:$0]  %s9, 1024, %s97, [#allocation12], 64, 64, 4
    $region41: #{tpu_custom_call.1} parent=1 // pred_fallthru
      _
    // Predicated region
    $region42: #{tpu_custom_call.1} parent=1 // pred_check
      _
    $region43: #{tpu_custom_call.1} parent=1 // pred_check_branch
      %104 = sbr.rel (0) target = $region45
    $region44: #{tpu_custom_call.1} parent=1 // pred_region
      _
    $region45: #{tpu_custom_call.1} parent=1 // pred_fallthru
      _
    // Predicated region
    $region46: #{tpu_custom_call.1} parent=1 // pred_check
      _
    $region47: #{tpu_custom_call.1} parent=1 // pred_check_branch
      %106 = sbr.rel (0) target = $region49
    $region48: #{tpu_custom_call.1} parent=1 // pred_region
      %s108 = ssub.s32 8192, 8192
      %109 = vsyncadd [#allocation12], %s108
      %s110 = sshll.u32 [#allocation13], 4
      %s111 = int_to_ptr.vmem [resolvable:$true] %s110
      %116 = dma.hbm_to_vmem [thread:$0]  %s11, 8192, %s111, [#allocation12], 512, 512, 32
    $region49: #{tpu_custom_call.1} parent=1 // pred_fallthru
      _
    // Predicated region
    $region50: #{tpu_custom_call.1} parent=1 // pred_check
      _
    $region51: #{tpu_custom_call.1} parent=1 // pred_check_branch
      %118 = sbr.rel (0) target = $region53
    $region52: #{tpu_custom_call.1} parent=1 // pred_region
      _
    $region53: #{tpu_custom_call.1} parent=1 // pred_fallthru
      _
    // Predicated region
    $region54: #{tpu_custom_call.1} parent=1 // pred_check
      _
    $region55: #{tpu_custom_call.1} parent=1 // pred_check_branch
      %120 = sbr.rel (0) target = $region57
    $region56: #{tpu_custom_call.1} parent=1 // pred_region
      %121 = dma.done [#allocation3], 1024
    $region57: #{tpu_custom_call.1} parent=1 // pred_fallthru
      _
    // Predicated region
    $region58: #{tpu_custom_call.1} parent=1 // pred_check
      _
    $region59: #{tpu_custom_call.1} parent=1 // pred_check_branch
      %123 = sbr.rel (0) target = $region61
    $region60: #{tpu_custom_call.1} parent=1 // pred_region
      %124 = dma.done [#allocation6], 8192
    $region61: #{tpu_custom_call.1} parent=1 // pred_fallthru
      _
    // Predicated region
    $region62: #{tpu_custom_call.1} parent=1 // pred_check
      _
    $region63: #{tpu_custom_call.1} parent=1 // pred_check_branch
      %126 = sbr.rel (0) target = $region65
    $region64: #{tpu_custom_call.1} parent=1 // pred_region
      %127 = dma.done [#allocation6], 1024
    $region65: #{tpu_custom_call.1} parent=1 // pred_fallthru
      _
    // Predicated region
    $region66: #{tpu_custom_call.1} parent=1 // pred_check
      _
    $region67: #{tpu_custom_call.1} parent=1 // pred_check_branch
      %129 = sbr.rel (0) target = $region69
    $region68: #{tpu_custom_call.1} parent=1 // pred_region
      %130 = dma.done [#allocation9], 1024
    $region69: #{tpu_custom_call.1} parent=1 // pred_fallthru
      _
    // Predicated region
    $region70: #{tpu_custom_call.1} parent=1 // pred_check
      _
    $region71: #{tpu_custom_call.1} parent=1 // pred_check_branch
      %132 = sbr.rel (0) target = $region73
    $region72: #{tpu_custom_call.1} parent=1 // pred_region
      %133 = dma.done [#allocation9], 1024
    $region73: #{tpu_custom_call.1} parent=1 // pred_fallthru
      _
    // Predicated region
    $region74: #{tpu_custom_call.1} parent=1 // pred_check
      _
    $region75: #{tpu_custom_call.1} parent=1 // pred_check_branch
      %135 = sbr.rel (0) target = $region77
    $region76: #{tpu_custom_call.1} parent=1 // pred_region
      %136 = dma.done [#allocation12], 1024
    $region77: #{tpu_custom_call.1} parent=1 // pred_fallthru
      _
    // Predicated region
    $region78: #{tpu_custom_call.1} parent=1 // pred_check
      _
    $region79: #{tpu_custom_call.1} parent=1 // pred_check_branch
      %138 = sbr.rel (0) target = $region81
    $region80: #{tpu_custom_call.1} parent=1 // pred_region
      %139 = dma.done [#allocation12], 8192
    $region81: #{tpu_custom_call.1} parent=1 // pred_fallthru
      _
    %v141 = vld [vmem:[#allocation2] sm:$0xff]
    %v142 = vld [vmem:[#allocation2 + $0x8] sm:$0xff]
    %v143 = vld [vmem:[#allocation2 + $0x10] sm:$0xff]
    %v144 = vld [vmem:[#allocation2 + $0x18] sm:$0xff]
    %v145 = vld [vmem:[#allocation2 + $0x20] sm:$0xff]
    %v146 = vld [vmem:[#allocation2 + $0x28] sm:$0xff]
    %v147 = vld [vmem:[#allocation2 + $0x30] sm:$0xff]
    %v148 = vld [vmem:[#allocation2 + $0x38] sm:$0xff]
    %v149 = vld [vmem:[#allocation5] sm:$0xf]
    %v150 = vld [vmem:[#allocation5 + $0x4] sm:$0xf]
    %v151 = vld [vmem:[#allocation5 + $0x8] sm:$0xf]
    %v152 = vld [vmem:[#allocation5 + $0xc] sm:$0xf]
    %v153 = vld [vmem:[#allocation5 + $0x10] sm:$0xf]
    %v154 = vld [vmem:[#allocation5 + $0x14] sm:$0xf]
    %v155 = vld [vmem:[#allocation5 + $0x18] sm:$0xf]
    %v156 = vld [vmem:[#allocation5 + $0x1c] sm:$0xf]
    %v157 = vld [vmem:[#allocation5 + $0x20] sm:$0xf]
    %v158 = vld [vmem:[#allocation5 + $0x24] sm:$0xf]
    %v159 = vld [vmem:[#allocation5 + $0x28] sm:$0xf]
    %v160 = vld [vmem:[#allocation5 + $0x2c] sm:$0xf]
    %v161 = vld [vmem:[#allocation5 + $0x30] sm:$0xf]
    %v162 = vld [vmem:[#allocation5 + $0x34] sm:$0xf]
    %v163 = vld [vmem:[#allocation5 + $0x38] sm:$0xf]
    %v164 = vld [vmem:[#allocation5 + $0x3c] sm:$0xf]
    %v165 = vld [vmem:[#allocation5 + $0x40] sm:$0xf]
    %v166 = vld [vmem:[#allocation5 + $0x44] sm:$0xf]
    %v167 = vld [vmem:[#allocation5 + $0x48] sm:$0xf]
    %v168 = vld [vmem:[#allocation5 + $0x4c] sm:$0xf]
    %v169 = vld [vmem:[#allocation5 + $0x50] sm:$0xf]
    %v170 = vld [vmem:[#allocation5 + $0x54] sm:$0xf]
    %v171 = vld [vmem:[#allocation5 + $0x58] sm:$0xf]
    %v172 = vld [vmem:[#allocation5 + $0x5c] sm:$0xf]
    %v173 = vld [vmem:[#allocation5 + $0x60] sm:$0xf]
    %v174 = vld [vmem:[#allocation5 + $0x64] sm:$0xf]
    %v175 = vld [vmem:[#allocation5 + $0x68] sm:$0xf]
    %v176 = vld [vmem:[#allocation5 + $0x6c] sm:$0xf]
    %v177 = vld [vmem:[#allocation5 + $0x70] sm:$0xf]
    %v178 = vld [vmem:[#allocation5 + $0x74] sm:$0xf]
    %v179 = vld [vmem:[#allocation5 + $0x78] sm:$0xf]
    %v180 = vld [vmem:[#allocation5 + $0x7c] sm:$0xf]
    %v181 = vld [vmem:[#allocation5 + $0x80] sm:$0xf]
    %v182 = vld [vmem:[#allocation5 + $0x84] sm:$0xf]
    %v183 = vld [vmem:[#allocation5 + $0x88] sm:$0xf]
    %v184 = vld [vmem:[#allocation5 + $0x8c] sm:$0xf]
    %v185 = vld [vmem:[#allocation5 + $0x90] sm:$0xf]
    %v186 = vld [vmem:[#allocation5 + $0x94] sm:$0xf]
    %v187 = vld [vmem:[#allocation5 + $0x98] sm:$0xf]
    %v188 = vld [vmem:[#allocation5 + $0x9c] sm:$0xf]
    %v189 = vld [vmem:[#allocation5 + $0xa0] sm:$0xf]
    %v190 = vld [vmem:[#allocation5 + $0xa4] sm:$0xf]
    %v191 = vld [vmem:[#allocation5 + $0xa8] sm:$0xf]
    %v192 = vld [vmem:[#allocation5 + $0xac] sm:$0xf]
    %v193 = vld [vmem:[#allocation5 + $0xb0] sm:$0xf]
    %v194 = vld [vmem:[#allocation5 + $0xb4] sm:$0xf]
    %v195 = vld [vmem:[#allocation5 + $0xb8] sm:$0xf]
    %v196 = vld [vmem:[#allocation5 + $0xbc] sm:$0xf]
    %v197 = vld [vmem:[#allocation5 + $0xc0] sm:$0xf]
    %v198 = vld [vmem:[#allocation5 + $0xc4] sm:$0xf]
    %v199 = vld [vmem:[#allocation5 + $0xc8] sm:$0xf]
    %v200 = vld [vmem:[#allocation5 + $0xcc] sm:$0xf]
    %v201 = vld [vmem:[#allocation5 + $0xd0] sm:$0xf]
    %v202 = vld [vmem:[#allocation5 + $0xd4] sm:$0xf]
    %v203 = vld [vmem:[#allocation5 + $0xd8] sm:$0xf]
    %v204 = vld [vmem:[#allocation5 + $0xdc] sm:$0xf]
    %v205 = vld [vmem:[#allocation5 + $0xe0] sm:$0xf]
    %v206 = vld [vmem:[#allocation5 + $0xe4] sm:$0xf]
    %v207 = vld [vmem:[#allocation5 + $0xe8] sm:$0xf]
    %v208 = vld [vmem:[#allocation5 + $0xec] sm:$0xf]
    %v209 = vld [vmem:[#allocation5 + $0xf0] sm:$0xf]
    %v210 = vld [vmem:[#allocation5 + $0xf4] sm:$0xf]
    %v211 = vld [vmem:[#allocation5 + $0xf8] sm:$0xf]
    %v212 = vld [vmem:[#allocation5 + $0xfc] sm:$0xf]
    %v213 = vld [vmem:[#allocation5 + $0x100] sm:$0xf]
    %v214 = vld [vmem:[#allocation5 + $0x104] sm:$0xf]
    %v215 = vld [vmem:[#allocation5 + $0x108] sm:$0xf]
    %v216 = vld [vmem:[#allocation5 + $0x10c] sm:$0xf]
    %v217 = vld [vmem:[#allocation5 + $0x110] sm:$0xf]
    %v218 = vld [vmem:[#allocation5 + $0x114] sm:$0xf]
    %v219 = vld [vmem:[#allocation5 + $0x118] sm:$0xf]
    %v220 = vld [vmem:[#allocation5 + $0x11c] sm:$0xf]
    %v221 = vld [vmem:[#allocation5 + $0x120] sm:$0xf]
    %v222 = vld [vmem:[#allocation5 + $0x124] sm:$0xf]
    %v223 = vld [vmem:[#allocation5 + $0x128] sm:$0xf]
    %v224 = vld [vmem:[#allocation5 + $0x12c] sm:$0xf]
    %v225 = vld [vmem:[#allocation5 + $0x130] sm:$0xf]
    %v226 = vld [vmem:[#allocation5 + $0x134] sm:$0xf]
    %v227 = vld [vmem:[#allocation5 + $0x138] sm:$0xf]
    %v228 = vld [vmem:[#allocation5 + $0x13c] sm:$0xf]
    %v229 = vld [vmem:[#allocation5 + $0x140] sm:$0xf]
    %v230 = vld [vmem:[#allocation5 + $0x144] sm:$0xf]
    %v231 = vld [vmem:[#allocation5 + $0x148] sm:$0xf]
    %v232 = vld [vmem:[#allocation5 + $0x14c] sm:$0xf]
    %v233 = vld [vmem:[#allocation5 + $0x150] sm:$0xf]
    %v234 = vld [vmem:[#allocation5 + $0x154] sm:$0xf]
    %v235 = vld [vmem:[#allocation5 + $0x158] sm:$0xf]
    %v236 = vld [vmem:[#allocation5 + $0x15c] sm:$0xf]
    %v237 = vld [vmem:[#allocation5 + $0x160] sm:$0xf]
    %v238 = vld [vmem:[#allocation5 + $0x164] sm:$0xf]
    %v239 = vld [vmem:[#allocation5 + $0x168] sm:$0xf]
    %v240 = vld [vmem:[#allocation5 + $0x16c] sm:$0xf]
    %v241 = vld [vmem:[#allocation5 + $0x170] sm:$0xf]
    %v242 = vld [vmem:[#allocation5 + $0x174] sm:$0xf]
    %v243 = vld [vmem:[#allocation5 + $0x178] sm:$0xf]
    %v244 = vld [vmem:[#allocation5 + $0x17c] sm:$0xf]
    %v245 = vld [vmem:[#allocation5 + $0x180] sm:$0xf]
    %v246 = vld [vmem:[#allocation5 + $0x184] sm:$0xf]
    %v247 = vld [vmem:[#allocation5 + $0x188] sm:$0xf]
    %v248 = vld [vmem:[#allocation5 + $0x18c] sm:$0xf]
    %v249 = vld [vmem:[#allocation5 + $0x190] sm:$0xf]
    %v250 = vld [vmem:[#allocation5 + $0x194] sm:$0xf]
    %v251 = vld [vmem:[#allocation5 + $0x198] sm:$0xf]
    %v252 = vld [vmem:[#allocation5 + $0x19c] sm:$0xf]
    %v253 = vld [vmem:[#allocation5 + $0x1a0] sm:$0xf]
    %v254 = vld [vmem:[#allocation5 + $0x1a4] sm:$0xf]
    %v255 = vld [vmem:[#allocation5 + $0x1a8] sm:$0xf]
    %v256 = vld [vmem:[#allocation5 + $0x1ac] sm:$0xf]
    %v257 = vld [vmem:[#allocation5 + $0x1b0] sm:$0xf]
    %v258 = vld [vmem:[#allocation5 + $0x1b4] sm:$0xf]
    %v259 = vld [vmem:[#allocation5 + $0x1b8] sm:$0xf]
    %v260 = vld [vmem:[#allocation5 + $0x1bc] sm:$0xf]
    %v261 = vld [vmem:[#allocation5 + $0x1c0] sm:$0xf]
    %v262 = vld [vmem:[#allocation5 + $0x1c4] sm:$0xf]
    %v263 = vld [vmem:[#allocation5 + $0x1c8] sm:$0xf]
    %v264 = vld [vmem:[#allocation5 + $0x1cc] sm:$0xf]
    %v265 = vld [vmem:[#allocation5 + $0x1d0] sm:$0xf]
    %v266 = vld [vmem:[#allocation5 + $0x1d4] sm:$0xf]
    %v267 = vld [vmem:[#allocation5 + $0x1d8] sm:$0xf]
    %v268 = vld [vmem:[#allocation5 + $0x1dc] sm:$0xf]
    %v269 = vld [vmem:[#allocation5 + $0x1e0] sm:$0xf]
    %v270 = vld [vmem:[#allocation5 + $0x1e4] sm:$0xf]
    %v271 = vld [vmem:[#allocation5 + $0x1e8] sm:$0xf]
    %v272 = vld [vmem:[#allocation5 + $0x1ec] sm:$0xf]
    %v273 = vld [vmem:[#allocation5 + $0x1f0] sm:$0xf]
    %v274 = vld [vmem:[#allocation5 + $0x1f4] sm:$0xf]
    %v275 = vld [vmem:[#allocation5 + $0x1f8] sm:$0xf]
    %v276 = vld [vmem:[#allocation5 + $0x1fc] sm:$0xf]
    %v277 = vld [vmem:[%s2] sm:$0x1]
    %v279 = vlaneseq
    %v280 = vshrl.u32 %v279, 7
    %v281 = vsub.s32 0, %v280
    %v282 = vrot.slane %v277, %v281
    %v292 = vunpack.c.l.b16 %v141
    %v293 = vunpack.c.h.b16 %v141
    %v294 = vunpack.c.l.b16 %v142
    %v295 = vunpack.c.h.b16 %v142
    %v296 = vunpack.c.l.b16 %v143
    %v297 = vunpack.c.h.b16 %v143
    %v298 = vunpack.c.l.b16 %v144
    %v299 = vunpack.c.h.b16 %v144
    %v300 = vunpack.c.l.b16 %v145
    %v301 = vunpack.c.h.b16 %v145
    %v302 = vunpack.c.l.b16 %v146
    %v303 = vunpack.c.h.b16 %v146
    %v304 = vunpack.c.l.b16 %v147
    %v305 = vunpack.c.h.b16 %v147
    %v306 = vunpack.c.l.b16 %v148
    %v307 = vunpack.c.h.b16 %v148
    %v308 = vpack.c.b16 %v300, %v292
    %v309 = vpack.c.b16 %v301, %v293
    %v310 = vpack.c.b16 %v302, %v294
    %v311 = vpack.c.b16 %v303, %v295
    %v312 = vpack.c.b16 %v304, %v296
    %v313 = vpack.c.b16 %v305, %v297
    %v314 = vpack.c.b16 %v306, %v298
    %v315 = vpack.c.b16 %v307, %v299
    %v452 = vunpack.c.l.b16 %v149
    %v453 = vunpack.c.l.b16 %v150
    %v454 = vunpack.c.l.b16 %v151
    %v455 = vunpack.c.l.b16 %v152
    %v456 = vunpack.c.l.b16 %v153
    %v457 = vunpack.c.l.b16 %v154
    %v458 = vunpack.c.l.b16 %v155
    %v459 = vunpack.c.l.b16 %v156
    %v460 = vunpack.c.l.b16 %v157
    %v461 = vunpack.c.l.b16 %v158
    %v462 = vunpack.c.l.b16 %v159
    %v463 = vunpack.c.l.b16 %v160
    %v464 = vunpack.c.l.b16 %v161
    %v465 = vunpack.c.l.b16 %v162
    %v466 = vunpack.c.l.b16 %v163
    %v467 = vunpack.c.l.b16 %v164
    %v468 = vunpack.c.l.b16 %v165
    %v469 = vunpack.c.l.b16 %v166
    %v470 = vunpack.c.l.b16 %v167
    %v471 = vunpack.c.l.b16 %v168
    %v472 = vunpack.c.l.b16 %v169
    %v473 = vunpack.c.l.b16 %v170
    %v474 = vunpack.c.l.b16 %v171
    %v475 = vunpack.c.l.b16 %v172
    %v476 = vunpack.c.l.b16 %v173
    %v477 = vunpack.c.l.b16 %v174
    %v478 = vunpack.c.l.b16 %v175
    %v479 = vunpack.c.l.b16 %v176
    %v480 = vunpack.c.l.b16 %v177
    %v481 = vunpack.c.l.b16 %v178
    %v482 = vunpack.c.l.b16 %v179
    %v483 = vunpack.c.l.b16 %v180
    %v484 = vunpack.c.l.b16 %v181
    %v485 = vunpack.c.l.b16 %v182
    %v486 = vunpack.c.l.b16 %v183
    %v487 = vunpack.c.l.b16 %v184
    %v488 = vunpack.c.l.b16 %v185
    %v489 = vunpack.c.l.b16 %v186
    %v490 = vunpack.c.l.b16 %v187
    %v491 = vunpack.c.l.b16 %v188
    %v492 = vunpack.c.l.b16 %v189
    %v493 = vunpack.c.l.b16 %v190
    %v494 = vunpack.c.l.b16 %v191
    %v495 = vunpack.c.l.b16 %v192
    %v496 = vunpack.c.l.b16 %v193
    %v497 = vunpack.c.l.b16 %v194
    %v498 = vunpack.c.l.b16 %v195
    %v499 = vunpack.c.l.b16 %v196
    %v500 = vunpack.c.l.b16 %v197
    %v501 = vunpack.c.l.b16 %v198
    %v502 = vunpack.c.l.b16 %v199
    %v503 = vunpack.c.l.b16 %v200
    %v504 = vunpack.c.l.b16 %v201
    %v505 = vunpack.c.l.b16 %v202
    %v506 = vunpack.c.l.b16 %v203
    %v507 = vunpack.c.l.b16 %v204
    %v508 = vunpack.c.l.b16 %v205
    %v509 = vunpack.c.l.b16 %v206
    %v510 = vunpack.c.l.b16 %v207
    %v511 = vunpack.c.l.b16 %v208
    %v512 = vunpack.c.l.b16 %v209
    %v513 = vunpack.c.l.b16 %v210
    %v514 = vunpack.c.l.b16 %v211
    %v515 = vunpack.c.l.b16 %v212
    %v516 = vunpack.c.l.b16 %v213
    %v517 = vunpack.c.l.b16 %v214
    %v518 = vunpack.c.l.b16 %v215
    %v519 = vunpack.c.l.b16 %v216
    %v520 = vunpack.c.l.b16 %v217
    %v521 = vunpack.c.l.b16 %v218
    %v522 = vunpack.c.l.b16 %v219
    %v523 = vunpack.c.l.b16 %v220
    %v524 = vunpack.c.l.b16 %v221
    %v525 = vunpack.c.l.b16 %v222
    %v526 = vunpack.c.l.b16 %v223
    %v527 = vunpack.c.l.b16 %v224
    %v528 = vunpack.c.l.b16 %v225
    %v529 = vunpack.c.l.b16 %v226
    %v530 = vunpack.c.l.b16 %v227
    %v531 = vunpack.c.l.b16 %v228
    %v532 = vunpack.c.l.b16 %v229
    %v533 = vunpack.c.l.b16 %v230
    %v534 = vunpack.c.l.b16 %v231
    %v535 = vunpack.c.l.b16 %v232
    %v536 = vunpack.c.l.b16 %v233
    %v537 = vunpack.c.l.b16 %v234
    %v538 = vunpack.c.l.b16 %v235
    %v539 = vunpack.c.l.b16 %v236
    %v540 = vunpack.c.l.b16 %v237
    %v541 = vunpack.c.l.b16 %v238
    %v542 = vunpack.c.l.b16 %v239
    %v543 = vunpack.c.l.b16 %v240
    %v544 = vunpack.c.l.b16 %v241
    %v545 = vunpack.c.l.b16 %v242
    %v546 = vunpack.c.l.b16 %v243
    %v547 = vunpack.c.l.b16 %v244
    %v548 = vunpack.c.l.b16 %v245
    %v549 = vunpack.c.l.b16 %v246
    %v550 = vunpack.c.l.b16 %v247
    %v551 = vunpack.c.l.b16 %v248
    %v552 = vunpack.c.l.b16 %v249
    %v553 = vunpack.c.l.b16 %v250
    %v554 = vunpack.c.l.b16 %v251
    %v555 = vunpack.c.l.b16 %v252
    %v556 = vunpack.c.l.b16 %v253
    %v557 = vunpack.c.l.b16 %v254
    %v558 = vunpack.c.l.b16 %v255
    %v559 = vunpack.c.l.b16 %v256
    %v560 = vunpack.c.l.b16 %v257
    %v561 = vunpack.c.l.b16 %v258
    %v562 = vunpack.c.l.b16 %v259
    %v563 = vunpack.c.l.b16 %v260
    %v564 = vunpack.c.l.b16 %v261
    %v565 = vunpack.c.l.b16 %v262
    %v566 = vunpack.c.l.b16 %v263
    %v567 = vunpack.c.l.b16 %v264
    %v568 = vunpack.c.l.b16 %v265
    %v569 = vunpack.c.l.b16 %v266
    %v570 = vunpack.c.l.b16 %v267
    %v571 = vunpack.c.l.b16 %v268
    %v572 = vunpack.c.l.b16 %v269
    %v573 = vunpack.c.l.b16 %v270
    %v574 = vunpack.c.l.b16 %v271
    %v575 = vunpack.c.l.b16 %v272
    %v576 = vunpack.c.l.b16 %v273
    %v577 = vunpack.c.l.b16 %v274
    %v578 = vunpack.c.l.b16 %v275
    %v579 = vunpack.c.l.b16 %v276
    %v580 = vpack.c.b16 %v453, %v452
    %v581 = vpack.c.b16 %v455, %v454
    %v582 = vpack.c.b16 %v457, %v456
    %v583 = vpack.c.b16 %v459, %v458
    %v584 = vpack.c.b16 %v461, %v460
    %v585 = vpack.c.b16 %v463, %v462
    %v586 = vpack.c.b16 %v465, %v464
    %v587 = vpack.c.b16 %v467, %v466
    %v588 = vpack.c.b16 %v469, %v468
    %v589 = vpack.c.b16 %v471, %v470
    %v590 = vpack.c.b16 %v473, %v472
    %v591 = vpack.c.b16 %v475, %v474
    %v592 = vpack.c.b16 %v477, %v476
    %v593 = vpack.c.b16 %v479, %v478
    %v594 = vpack.c.b16 %v481, %v480
    %v595 = vpack.c.b16 %v483, %v482
    %v596 = vpack.c.b16 %v485, %v484
    %v597 = vpack.c.b16 %v487, %v486
    %v598 = vpack.c.b16 %v489, %v488
    %v599 = vpack.c.b16 %v491, %v490
    %v600 = vpack.c.b16 %v493, %v492
    %v601 = vpack.c.b16 %v495, %v494
    %v602 = vpack.c.b16 %v497, %v496
    %v603 = vpack.c.b16 %v499, %v498
    %v604 = vpack.c.b16 %v501, %v500
    %v605 = vpack.c.b16 %v503, %v502
    %v606 = vpack.c.b16 %v505, %v504
    %v607 = vpack.c.b16 %v507, %v506
    %v608 = vpack.c.b16 %v509, %v508
    %v609 = vpack.c.b16 %v511, %v510
    %v610 = vpack.c.b16 %v513, %v512
    %v611 = vpack.c.b16 %v515, %v514
    %v612 = vpack.c.b16 %v517, %v516
    %v613 = vpack.c.b16 %v519, %v518
    %v614 = vpack.c.b16 %v521, %v520
    %v615 = vpack.c.b16 %v523, %v522
    %v616 = vpack.c.b16 %v525, %v524
    %v617 = vpack.c.b16 %v527, %v526
    %v618 = vpack.c.b16 %v529, %v528
    %v619 = vpack.c.b16 %v531, %v530
    %v620 = vpack.c.b16 %v533, %v532
    %v621 = vpack.c.b16 %v535, %v534
    %v622 = vpack.c.b16 %v537, %v536
    %v623 = vpack.c.b16 %v539, %v538
    %v624 = vpack.c.b16 %v541, %v540
    %v625 = vpack.c.b16 %v543, %v542
    %v626 = vpack.c.b16 %v545, %v544
    %v627 = vpack.c.b16 %v547, %v546
    %v628 = vpack.c.b16 %v549, %v548
    %v629 = vpack.c.b16 %v551, %v550
    %v630 = vpack.c.b16 %v553, %v552
    %v631 = vpack.c.b16 %v555, %v554
    %v632 = vpack.c.b16 %v557, %v556
    %v633 = vpack.c.b16 %v559, %v558
    %v634 = vpack.c.b16 %v561, %v560
    %v635 = vpack.c.b16 %v563, %v562
    %v636 = vpack.c.b16 %v565, %v564
    %v637 = vpack.c.b16 %v567, %v566
    %v638 = vpack.c.b16 %v569, %v568
    %v639 = vpack.c.b16 %v571, %v570
    %v640 = vpack.c.b16 %v573, %v572
    %v641 = vpack.c.b16 %v575, %v574
    %v642 = vpack.c.b16 %v577, %v576
    %v643 = vpack.c.b16 %v579, %v578
    %708 = vmatprep.subr.bf16.mxu0 0
    %709 = vmatpush1.bf16.msra.mxu0 %v580
    %710 = vmatprep.subr.bf16.mxu0 0
    %711 = vmatpush1.bf16.msra.mxu0 %v581
    %712 = vmatprep.subr.bf16.mxu0 0
    %713 = vmatpush1.bf16.msra.mxu0 %v582
    %714 = vmatprep.subr.bf16.mxu0 0
    %715 = vmatpush1.bf16.msra.mxu0 %v583
    %716 = vmatprep.subr.bf16.mxu0 0
    %717 = vmatpush1.bf16.msra.mxu0 %v584
    %718 = vmatprep.subr.bf16.mxu0 0
    %719 = vmatpush1.bf16.msra.mxu0 %v585
    %720 = vmatprep.subr.bf16.mxu0 0
    %721 = vmatpush1.bf16.msra.mxu0 %v586
    %722 = vmatprep.subr.bf16.mxu0 0
    %723 = vmatpush1.bf16.msra.mxu0 %v587
    %724 = vmatprep.subr.bf16.mxu0 0
    %725 = vmatpush1.bf16.msra.mxu0 %v588
    %726 = vmatprep.subr.bf16.mxu0 0
    %727 = vmatpush1.bf16.msra.mxu0 %v589
    %728 = vmatprep.subr.bf16.mxu0 0
    %729 = vmatpush1.bf16.msra.mxu0 %v590
    %730 = vmatprep.subr.bf16.mxu0 0
    %731 = vmatpush1.bf16.msra.mxu0 %v591
    %732 = vmatprep.subr.bf16.mxu0 0
    %733 = vmatpush1.bf16.msra.mxu0 %v592
    %734 = vmatprep.subr.bf16.mxu0 0
    %735 = vmatpush1.bf16.msra.mxu0 %v593
    %736 = vmatprep.subr.bf16.mxu0 0
    %737 = vmatpush1.bf16.msra.mxu0 %v594
    %738 = vmatprep.subr.bf16.mxu0 0
    %739 = vmatpush1.bf16.msra.mxu0 %v595
    %740 = vmatprep.mubr.bf16.mxu0 %v309
    %741 = vmatmul.mubr.bf16.gmra.mrb[0].mxu0 %v308
    %v742 = vpop.f32.mrb[0].mxu0
    %v743 = vadd.f32 %v282, %v742
    %v744 = vpop.f32.mrb[0].mxu0
    %v745 = vpop.f32.mrb[0].mxu0
    %v746 = vadd.f32 %v282, %v745
    %v747 = vpop.f32.mrb[0].mxu0
    %748 = vdwg.mxu0
    %749 = vmatprep.subr.bf16.mxu0 0
    %750 = vmatpush1.bf16.msra.mxu0 %v596
    %751 = vmatprep.subr.bf16.mxu0 0
    %752 = vmatpush1.bf16.msra.mxu0 %v597
    %753 = vmatprep.subr.bf16.mxu0 0
    %754 = vmatpush1.bf16.msra.mxu0 %v598
    %755 = vmatprep.subr.bf16.mxu0 0
    %756 = vmatpush1.bf16.msra.mxu0 %v599
    %757 = vmatprep.subr.bf16.mxu0 0
    %758 = vmatpush1.bf16.msra.mxu0 %v600
    %759 = vmatprep.subr.bf16.mxu0 0
    %760 = vmatpush1.bf16.msra.mxu0 %v601
    %761 = vmatprep.subr.bf16.mxu0 0
    %762 = vmatpush1.bf16.msra.mxu0 %v602
    %763 = vmatprep.subr.bf16.mxu0 0
    %764 = vmatpush1.bf16.msra.mxu0 %v603
    %765 = vmatprep.subr.bf16.mxu0 0
    %766 = vmatpush1.bf16.msra.mxu0 %v604
    %767 = vmatprep.subr.bf16.mxu0 0
    %768 = vmatpush1.bf16.msra.mxu0 %v605
    %769 = vmatprep.subr.bf16.mxu0 0
    %770 = vmatpush1.bf16.msra.mxu0 %v606
    %771 = vmatprep.subr.bf16.mxu0 0
    %772 = vmatpush1.bf16.msra.mxu0 %v607
    %773 = vmatprep.subr.bf16.mxu0 0
    %774 = vmatpush1.bf16.msra.mxu0 %v608
    %775 = vmatprep.subr.bf16.mxu0 0
    %776 = vmatpush1.bf16.msra.mxu0 %v609
    %777 = vmatprep.subr.bf16.mxu0 0
    %778 = vmatpush1.bf16.msra.mxu0 %v610
    %779 = vmatprep.subr.bf16.mxu0 0
    %780 = vmatpush1.bf16.msra.mxu0 %v611
    %781 = vmatprep.mubr.bf16.mxu0 %v311
    %782 = vmatmul.mubr.bf16.gmra.mrb[0].mxu0 %v310
    %v783 = vpop.f32.mrb[0].mxu0
    %v784 = vadd.f32 %v743, %v783
    %v785 = vpop.f32.mrb[0].mxu0
    %v786 = vpop.f32.mrb[0].mxu0
    %v787 = vadd.f32 %v746, %v786
    %v788 = vpop.f32.mrb[0].mxu0
    %789 = vdwg.mxu0
    %790 = vmatprep.subr.bf16.mxu0 0
    %791 = vmatpush1.bf16.msra.mxu0 %v612
    %792 = vmatprep.subr.bf16.mxu0 0
    %793 = vmatpush1.bf16.msra.mxu0 %v613
    %794 = vmatprep.subr.bf16.mxu0 0
    %795 = vmatpush1.bf16.msra.mxu0 %v614
    %796 = vmatprep.subr.bf16.mxu0 0
    %797 = vmatpush1.bf16.msra.mxu0 %v615
    %798 = vmatprep.subr.bf16.mxu0 0
    %799 = vmatpush1.bf16.msra.mxu0 %v616
    %800 = vmatprep.subr.bf16.mxu0 0
    %801 = vmatpush1.bf16.msra.mxu0 %v617
    %802 = vmatprep.subr.bf16.mxu0 0
    %803 = vmatpush1.bf16.msra.mxu0 %v618
    %804 = vmatprep.subr.bf16.mxu0 0
    %805 = vmatpush1.bf16.msra.mxu0 %v619
    %806 = vmatprep.subr.bf16.mxu0 0
    %807 = vmatpush1.bf16.msra.mxu0 %v620
    %808 = vmatprep.subr.bf16.mxu0 0
    %809 = vmatpush1.bf16.msra.mxu0 %v621
    %810 = vmatprep.subr.bf16.mxu0 0
    %811 = vmatpush1.bf16.msra.mxu0 %v622
    %812 = vmatprep.subr.bf16.mxu0 0
    %813 = vmatpush1.bf16.msra.mxu0 %v623
    %814 = vmatprep.subr.bf16.mxu0 0
    %815 = vmatpush1.bf16.msra.mxu0 %v624
    %816 = vmatprep.subr.bf16.mxu0 0
    %817 = vmatpush1.bf16.msra.mxu0 %v625
    %818 = vmatprep.subr.bf16.mxu0 0
    %819 = vmatpush1.bf16.msra.mxu0 %v626
    %820 = vmatprep.subr.bf16.mxu0 0
    %821 = vmatpush1.bf16.msra.mxu0 %v627
    %822 = vmatprep.mubr.bf16.mxu0 %v313
    %823 = vmatmul.mubr.bf16.gmra.mrb[0].mxu0 %v312
    %v824 = vpop.f32.mrb[0].mxu0
    %v825 = vadd.f32 %v784, %v824
    %v826 = vpop.f32.mrb[0].mxu0
    %v827 = vpop.f32.mrb[0].mxu0
    %v828 = vadd.f32 %v787, %v827
    %v829 = vpop.f32.mrb[0].mxu0
    %830 = vdwg.mxu0
    %831 = vmatprep.subr.bf16.mxu0 0
    %832 = vmatpush1.bf16.msra.mxu0 %v628
    %833 = vmatprep.subr.bf16.mxu0 0
    %834 = vmatpush1.bf16.msra.mxu0 %v629
    %835 = vmatprep.subr.bf16.mxu0 0
    %836 = vmatpush1.bf16.msra.mxu0 %v630
    %837 = vmatprep.subr.bf16.mxu0 0
    %838 = vmatpush1.bf16.msra.mxu0 %v631
    %839 = vmatprep.subr.bf16.mxu0 0
    %840 = vmatpush1.bf16.msra.mxu0 %v632
    %841 = vmatprep.subr.bf16.mxu0 0
    %842 = vmatpush1.bf16.msra.mxu0 %v633
    %843 = vmatprep.subr.bf16.mxu0 0
    %844 = vmatpush1.bf16.msra.mxu0 %v634
    %845 = vmatprep.subr.bf16.mxu0 0
    %846 = vmatpush1.bf16.msra.mxu0 %v635
    %847 = vmatprep.subr.bf16.mxu0 0
    %848 = vmatpush1.bf16.msra.mxu0 %v636
    %849 = vmatprep.subr.bf16.mxu0 0
    %850 = vmatpush1.bf16.msra.mxu0 %v637
    %851 = vmatprep.subr.bf16.mxu0 0
    %852 = vmatpush1.bf16.msra.mxu0 %v638
    %853 = vmatprep.subr.bf16.mxu0 0
    %854 = vmatpush1.bf16.msra.mxu0 %v639
    %855 = vmatprep.subr.bf16.mxu0 0
    %856 = vmatpush1.bf16.msra.mxu0 %v640
    %857 = vmatprep.subr.bf16.mxu0 0
    %858 = vmatpush1.bf16.msra.mxu0 %v641
    %859 = vmatprep.subr.bf16.mxu0 0
    %860 = vmatpush1.bf16.msra.mxu0 %v642
    %861 = vmatprep.subr.bf16.mxu0 0
    %862 = vmatpush1.bf16.msra.mxu0 %v643
    %863 = vmatprep.mubr.bf16.mxu0 %v315
    %864 = vmatmul.mubr.bf16.gmra.mrb[0].mxu0 %v314
    %v865 = vpop.f32.mrb[0].mxu0
    %v866 = vadd.f32 %v825, %v865
    %v867 = vpop.f32.mrb[0].mxu0
    %v868 = vpop.f32.mrb[0].mxu0
    %v869 = vadd.f32 %v828, %v868
    %v870 = vpop.f32.mrb[0].mxu0
    %871 = vdwg.mxu0
    %v872 = vmax.f32 %v866, 0.0
    %v873 = vmax.f32 %v869, 0.0
    %v874 = vpack.c.bf16 %v873, %v872
    %v875 = vld [vmem:[#allocation7] sm:$0xf]
    %v876 = vld [vmem:[#allocation7 + $0x4] sm:$0xf]
    %v877 = vld [vmem:[#allocation7 + $0x8] sm:$0xf]
    %v878 = vld [vmem:[#allocation7 + $0xc] sm:$0xf]
    %v879 = vld [vmem:[#allocation7 + $0x10] sm:$0xf]
    %v880 = vld [vmem:[#allocation7 + $0x14] sm:$0xf]
    %v881 = vld [vmem:[#allocation7 + $0x18] sm:$0xf]
    %v882 = vld [vmem:[#allocation7 + $0x1c] sm:$0xf]
    %v883 = vld [vmem:[#allocation7 + $0x20] sm:$0xf]
    %v884 = vld [vmem:[#allocation7 + $0x24] sm:$0xf]
    %v885 = vld [vmem:[#allocation7 + $0x28] sm:$0xf]
    %v886 = vld [vmem:[#allocation7 + $0x2c] sm:$0xf]
    %v887 = vld [vmem:[#allocation7 + $0x30] sm:$0xf]
    %v888 = vld [vmem:[#allocation7 + $0x34] sm:$0xf]
    %v889 = vld [vmem:[#allocation7 + $0x38] sm:$0xf]
    %v890 = vld [vmem:[#allocation7 + $0x3c] sm:$0xf]
    %v891 = vld [vmem:[%s4] sm:$0x1]
    %v893 = vlaneseq
    %v894 = vshrl.u32 %v893, 7
    %v895 = vsub.s32 0, %v894
    %v896 = vrot.slane %v891, %v895
    %v914 = vunpack.c.l.b16 %v875
    %v915 = vunpack.c.l.b16 %v876
    %v916 = vunpack.c.l.b16 %v877
    %v917 = vunpack.c.l.b16 %v878
    %v918 = vunpack.c.l.b16 %v879
    %v919 = vunpack.c.l.b16 %v880
    %v920 = vunpack.c.l.b16 %v881
    %v921 = vunpack.c.l.b16 %v882
    %v922 = vunpack.c.l.b16 %v883
    %v923 = vunpack.c.l.b16 %v884
    %v924 = vunpack.c.l.b16 %v885
    %v925 = vunpack.c.l.b16 %v886
    %v926 = vunpack.c.l.b16 %v887
    %v927 = vunpack.c.l.b16 %v888
    %v928 = vunpack.c.l.b16 %v889
    %v929 = vunpack.c.l.b16 %v890
    %v930 = vpack.c.b16 %v915, %v914
    %v931 = vpack.c.b16 %v917, %v916
    %v932 = vpack.c.b16 %v919, %v918
    %v933 = vpack.c.b16 %v921, %v920
    %v934 = vpack.c.b16 %v923, %v922
    %v935 = vpack.c.b16 %v925, %v924
    %v936 = vpack.c.b16 %v927, %v926
    %v937 = vpack.c.b16 %v929, %v928
    %946 = vmatprep.subr.bf16.mxu0 0
    %947 = vmatpush1.bf16.msra.mxu0 %v930
    %948 = vmatprep.subr.bf16.mxu0 0
    %949 = vmatpush1.bf16.msra.mxu0 %v931
    %950 = vmatprep.subr.bf16.mxu0 0
    %951 = vmatpush1.bf16.msra.mxu0 %v932
    %952 = vmatprep.subr.bf16.mxu0 0
    %953 = vmatpush1.bf16.msra.mxu0 %v933
    %954 = vmatprep.subr.bf16.mxu0 0
    %955 = vmatpush1.bf16.msra.mxu0 %v934
    %956 = vmatprep.subr.bf16.mxu0 0
    %957 = vmatpush1.bf16.msra.mxu0 %v935
    %958 = vmatprep.subr.bf16.mxu0 0
    %959 = vmatpush1.bf16.msra.mxu0 %v936
    %960 = vmatprep.subr.bf16.mxu0 0
    %961 = vmatpush1.bf16.msra.mxu0 %v937
    %962 = vmatprep.subr.bf16.mxu0 0
    %963 = vmatpush1.bf16.msra.mxu0 0
    %964 = vmatprep.subr.bf16.mxu0 0
    %965 = vmatpush1.bf16.msra.mxu0 0
    %966 = vmatprep.subr.bf16.mxu0 0
    %967 = vmatpush1.bf16.msra.mxu0 0
    %968 = vmatprep.subr.bf16.mxu0 0
    %969 = vmatpush1.bf16.msra.mxu0 0
    %970 = vmatprep.subr.bf16.mxu0 0
    %971 = vmatpush1.bf16.msra.mxu0 0
    %972 = vmatprep.subr.bf16.mxu0 0
    %973 = vmatpush1.bf16.msra.mxu0 0
    %974 = vmatprep.subr.bf16.mxu0 0
    %975 = vmatpush1.bf16.msra.mxu0 0
    %976 = vmatprep.subr.bf16.mxu0 0
    %977 = vmatpush1.bf16.msra.mxu0 0
    %978 = vmatprep.mubr.bf16.mxu0 0
    %979 = vmatmul.mubr.bf16.gmra.mrb[0].mxu0 %v874
    %v980 = vpop.f32.mrb[0].mxu0
    %v981 = vadd.f32 %v896, %v980
    %v982 = vpop.f32.mrb[0].mxu0
    %v983 = vpop.f32.mrb[0].mxu0
    %v984 = vadd.f32 %v896, %v983
    %v985 = vpop.f32.mrb[0].mxu0
    %986 = vdwg.mxu0
    %v987 = vmax.f32 %v981, 0.0
    %v988 = vmax.f32 %v984, 0.0
    %v989 = vpack.c.bf16 %v988, %v987
    %v990 = vld [vmem:[#allocation8] sm:$0xf]
    %v991 = vld [vmem:[#allocation8 + $0x4] sm:$0xf]
    %v992 = vld [vmem:[#allocation8 + $0x8] sm:$0xf]
    %v993 = vld [vmem:[#allocation8 + $0xc] sm:$0xf]
    %v994 = vld [vmem:[#allocation8 + $0x10] sm:$0xf]
    %v995 = vld [vmem:[#allocation8 + $0x14] sm:$0xf]
    %v996 = vld [vmem:[#allocation8 + $0x18] sm:$0xf]
    %v997 = vld [vmem:[#allocation8 + $0x1c] sm:$0xf]
    %v998 = vld [vmem:[#allocation8 + $0x20] sm:$0xf]
    %v999 = vld [vmem:[#allocation8 + $0x24] sm:$0xf]
    %v1000 = vld [vmem:[#allocation8 + $0x28] sm:$0xf]
    %v1001 = vld [vmem:[#allocation8 + $0x2c] sm:$0xf]
    %v1002 = vld [vmem:[#allocation8 + $0x30] sm:$0xf]
    %v1003 = vld [vmem:[#allocation8 + $0x34] sm:$0xf]
    %v1004 = vld [vmem:[#allocation8 + $0x38] sm:$0xf]
    %v1005 = vld [vmem:[#allocation8 + $0x3c] sm:$0xf]
    %v1006 = vld [vmem:[%s6] sm:$0x1]
    %v1008 = vlaneseq
    %v1009 = vshrl.u32 %v1008, 7
    %v1010 = vsub.s32 0, %v1009
    %v1011 = vrot.slane %v1006, %v1010
    %v1029 = vunpack.c.l.b16 %v990
    %v1030 = vunpack.c.l.b16 %v991
    %v1031 = vunpack.c.l.b16 %v992
    %v1032 = vunpack.c.l.b16 %v993
    %v1033 = vunpack.c.l.b16 %v994
    %v1034 = vunpack.c.l.b16 %v995
    %v1035 = vunpack.c.l.b16 %v996
    %v1036 = vunpack.c.l.b16 %v997
    %v1037 = vunpack.c.l.b16 %v998
    %v1038 = vunpack.c.l.b16 %v999
    %v1039 = vunpack.c.l.b16 %v1000
    %v1040 = vunpack.c.l.b16 %v1001
    %v1041 = vunpack.c.l.b16 %v1002
    %v1042 = vunpack.c.l.b16 %v1003
    %v1043 = vunpack.c.l.b16 %v1004
    %v1044 = vunpack.c.l.b16 %v1005
    %v1045 = vpack.c.b16 %v1030, %v1029
    %v1046 = vpack.c.b16 %v1032, %v1031
    %v1047 = vpack.c.b16 %v1034, %v1033
    %v1048 = vpack.c.b16 %v1036, %v1035
    %v1049 = vpack.c.b16 %v1038, %v1037
    %v1050 = vpack.c.b16 %v1040, %v1039
    %v1051 = vpack.c.b16 %v1042, %v1041
    %v1052 = vpack.c.b16 %v1044, %v1043
    %1061 = vmatprep.subr.bf16.mxu0 0
    %1062 = vmatpush1.bf16.msra.mxu0 %v1045
    %1063 = vmatprep.subr.bf16.mxu0 0
    %1064 = vmatpush1.bf16.msra.mxu0 %v1046
    %1065 = vmatprep.subr.bf16.mxu0 0
    %1066 = vmatpush1.bf16.msra.mxu0 %v1047
    %1067 = vmatprep.subr.bf16.mxu0 0
    %1068 = vmatpush1.bf16.msra.mxu0 %v1048
    %1069 = vmatprep.subr.bf16.mxu0 0
    %1070 = vmatpush1.bf16.msra.mxu0 %v1049
    %1071 = vmatprep.subr.bf16.mxu0 0
    %1072 = vmatpush1.bf16.msra.mxu0 %v1050
    %1073 = vmatprep.subr.bf16.mxu0 0
    %1074 = vmatpush1.bf16.msra.mxu0 %v1051
    %1075 = vmatprep.subr.bf16.mxu0 0
    %1076 = vmatpush1.bf16.msra.mxu0 %v1052
    %1077 = vmatprep.subr.bf16.mxu0 0
    %1078 = vmatpush1.bf16.msra.mxu0 0
    %1079 = vmatprep.subr.bf16.mxu0 0
    %1080 = vmatpush1.bf16.msra.mxu0 0
    %1081 = vmatprep.subr.bf16.mxu0 0
    %1082 = vmatpush1.bf16.msra.mxu0 0
    %1083 = vmatprep.subr.bf16.mxu0 0
    %1084 = vmatpush1.bf16.msra.mxu0 0
    %1085 = vmatprep.subr.bf16.mxu0 0
    %1086 = vmatpush1.bf16.msra.mxu0 0
    %1087 = vmatprep.subr.bf16.mxu0 0
    %1088 = vmatpush1.bf16.msra.mxu0 0
    %1089 = vmatprep.subr.bf16.mxu0 0
    %1090 = vmatpush1.bf16.msra.mxu0 0
    %1091 = vmatprep.subr.bf16.mxu0 0
    %1092 = vmatpush1.bf16.msra.mxu0 0
    %1093 = vmatprep.mubr.bf16.mxu0 0
    %1094 = vmatmul.mubr.bf16.gmra.mrb[0].mxu0 %v989
    %v1095 = vpop.f32.mrb[0].mxu0
    %v1096 = vadd.f32 %v1011, %v1095
    %v1097 = vpop.f32.mrb[0].mxu0
    %v1098 = vpop.f32.mrb[0].mxu0
    %v1099 = vadd.f32 %v1011, %v1098
    %v1100 = vpop.f32.mrb[0].mxu0
    %1101 = vdwg.mxu0
    %v1102 = vmax.f32 %v1096, 0.0
    %v1103 = vmax.f32 %v1099, 0.0
    %v1104 = vpack.c.bf16 %v1103, %v1102
    %v1105 = vld [vmem:[#allocation10] sm:$0xf]
    %v1106 = vld [vmem:[#allocation10 + $0x4] sm:$0xf]
    %v1107 = vld [vmem:[#allocation10 + $0x8] sm:$0xf]
    %v1108 = vld [vmem:[#allocation10 + $0xc] sm:$0xf]
    %v1109 = vld [vmem:[#allocation10 + $0x10] sm:$0xf]
    %v1110 = vld [vmem:[#allocation10 + $0x14] sm:$0xf]
    %v1111 = vld [vmem:[#allocation10 + $0x18] sm:$0xf]
    %v1112 = vld [vmem:[#allocation10 + $0x1c] sm:$0xf]
    %v1113 = vld [vmem:[#allocation10 + $0x20] sm:$0xf]
    %v1114 = vld [vmem:[#allocation10 + $0x24] sm:$0xf]
    %v1115 = vld [vmem:[#allocation10 + $0x28] sm:$0xf]
    %v1116 = vld [vmem:[#allocation10 + $0x2c] sm:$0xf]
    %v1117 = vld [vmem:[#allocation10 + $0x30] sm:$0xf]
    %v1118 = vld [vmem:[#allocation10 + $0x34] sm:$0xf]
    %v1119 = vld [vmem:[#allocation10 + $0x38] sm:$0xf]
    %v1120 = vld [vmem:[#allocation10 + $0x3c] sm:$0xf]
    %v1121 = vld [vmem:[%s8] sm:$0x1]
    %v1123 = vlaneseq
    %v1124 = vshrl.u32 %v1123, 7
    %v1125 = vsub.s32 0, %v1124
    %v1126 = vrot.slane %v1121, %v1125
    %v1144 = vunpack.c.l.b16 %v1105
    %v1145 = vunpack.c.l.b16 %v1106
    %v1146 = vunpack.c.l.b16 %v1107
    %v1147 = vunpack.c.l.b16 %v1108
    %v1148 = vunpack.c.l.b16 %v1109
    %v1149 = vunpack.c.l.b16 %v1110
    %v1150 = vunpack.c.l.b16 %v1111
    %v1151 = vunpack.c.l.b16 %v1112
    %v1152 = vunpack.c.l.b16 %v1113
    %v1153 = vunpack.c.l.b16 %v1114
    %v1154 = vunpack.c.l.b16 %v1115
    %v1155 = vunpack.c.l.b16 %v1116
    %v1156 = vunpack.c.l.b16 %v1117
    %v1157 = vunpack.c.l.b16 %v1118
    %v1158 = vunpack.c.l.b16 %v1119
    %v1159 = vunpack.c.l.b16 %v1120
    %v1160 = vpack.c.b16 %v1145, %v1144
    %v1161 = vpack.c.b16 %v1147, %v1146
    %v1162 = vpack.c.b16 %v1149, %v1148
    %v1163 = vpack.c.b16 %v1151, %v1150
    %v1164 = vpack.c.b16 %v1153, %v1152
    %v1165 = vpack.c.b16 %v1155, %v1154
    %v1166 = vpack.c.b16 %v1157, %v1156
    %v1167 = vpack.c.b16 %v1159, %v1158
    %1176 = vmatprep.subr.bf16.mxu0 0
    %1177 = vmatpush1.bf16.msra.mxu0 %v1160
    %1178 = vmatprep.subr.bf16.mxu0 0
    %1179 = vmatpush1.bf16.msra.mxu0 %v1161
    %1180 = vmatprep.subr.bf16.mxu0 0
    %1181 = vmatpush1.bf16.msra.mxu0 %v1162
    %1182 = vmatprep.subr.bf16.mxu0 0
    %1183 = vmatpush1.bf16.msra.mxu0 %v1163
    %1184 = vmatprep.subr.bf16.mxu0 0
    %1185 = vmatpush1.bf16.msra.mxu0 %v1164
    %1186 = vmatprep.subr.bf16.mxu0 0
    %1187 = vmatpush1.bf16.msra.mxu0 %v1165
    %1188 = vmatprep.subr.bf16.mxu0 0
    %1189 = vmatpush1.bf16.msra.mxu0 %v1166
    %1190 = vmatprep.subr.bf16.mxu0 0
    %1191 = vmatpush1.bf16.msra.mxu0 %v1167
    %1192 = vmatprep.subr.bf16.mxu0 0
    %1193 = vmatpush1.bf16.msra.mxu0 0
    %1194 = vmatprep.subr.bf16.mxu0 0
    %1195 = vmatpush1.bf16.msra.mxu0 0
    %1196 = vmatprep.subr.bf16.mxu0 0
    %1197 = vmatpush1.bf16.msra.mxu0 0
    %1198 = vmatprep.subr.bf16.mxu0 0
    %1199 = vmatpush1.bf16.msra.mxu0 0
    %1200 = vmatprep.subr.bf16.mxu0 0
    %1201 = vmatpush1.bf16.msra.mxu0 0
    %1202 = vmatprep.subr.bf16.mxu0 0
    %1203 = vmatpush1.bf16.msra.mxu0 0
    %1204 = vmatprep.subr.bf16.mxu0 0
    %1205 = vmatpush1.bf16.msra.mxu0 0
    %1206 = vmatprep.subr.bf16.mxu0 0
    %1207 = vmatpush1.bf16.msra.mxu0 0
    %1208 = vmatprep.mubr.bf16.mxu0 0
    %1209 = vmatmul.mubr.bf16.gmra.mrb[0].mxu0 %v1104
    %v1210 = vpop.f32.mrb[0].mxu0
    %v1211 = vadd.f32 %v1126, %v1210
    %v1212 = vpop.f32.mrb[0].mxu0
    %v1213 = vpop.f32.mrb[0].mxu0
    %v1214 = vadd.f32 %v1126, %v1213
    %v1215 = vpop.f32.mrb[0].mxu0
    %1216 = vdwg.mxu0
    %v1217 = vmax.f32 %v1211, 0.0
    %v1218 = vmax.f32 %v1214, 0.0
    %v1219 = vpack.c.bf16 %v1218, %v1217
    %v1220 = vld [vmem:[#allocation11] sm:$0xf]
    %v1221 = vld [vmem:[#allocation11 + $0x4] sm:$0xf]
    %v1222 = vld [vmem:[#allocation11 + $0x8] sm:$0xf]
    %v1223 = vld [vmem:[#allocation11 + $0xc] sm:$0xf]
    %v1224 = vld [vmem:[#allocation11 + $0x10] sm:$0xf]
    %v1225 = vld [vmem:[#allocation11 + $0x14] sm:$0xf]
    %v1226 = vld [vmem:[#allocation11 + $0x18] sm:$0xf]
    %v1227 = vld [vmem:[#allocation11 + $0x1c] sm:$0xf]
    %v1228 = vld [vmem:[#allocation11 + $0x20] sm:$0xf]
    %v1229 = vld [vmem:[#allocation11 + $0x24] sm:$0xf]
    %v1230 = vld [vmem:[#allocation11 + $0x28] sm:$0xf]
    %v1231 = vld [vmem:[#allocation11 + $0x2c] sm:$0xf]
    %v1232 = vld [vmem:[#allocation11 + $0x30] sm:$0xf]
    %v1233 = vld [vmem:[#allocation11 + $0x34] sm:$0xf]
    %v1234 = vld [vmem:[#allocation11 + $0x38] sm:$0xf]
    %v1235 = vld [vmem:[#allocation11 + $0x3c] sm:$0xf]
    %v1236 = vld [vmem:[%s10] sm:$0x1]
    %v1238 = vlaneseq
    %v1239 = vshrl.u32 %v1238, 7
    %v1240 = vsub.s32 0, %v1239
    %v1241 = vrot.slane %v1236, %v1240
    %v1259 = vunpack.c.l.b16 %v1220
    %v1260 = vunpack.c.l.b16 %v1221
    %v1261 = vunpack.c.l.b16 %v1222
    %v1262 = vunpack.c.l.b16 %v1223
    %v1263 = vunpack.c.l.b16 %v1224
    %v1264 = vunpack.c.l.b16 %v1225
    %v1265 = vunpack.c.l.b16 %v1226
    %v1266 = vunpack.c.l.b16 %v1227
    %v1267 = vunpack.c.l.b16 %v1228
    %v1268 = vunpack.c.l.b16 %v1229
    %v1269 = vunpack.c.l.b16 %v1230
    %v1270 = vunpack.c.l.b16 %v1231
    %v1271 = vunpack.c.l.b16 %v1232
    %v1272 = vunpack.c.l.b16 %v1233
    %v1273 = vunpack.c.l.b16 %v1234
    %v1274 = vunpack.c.l.b16 %v1235
    %v1275 = vpack.c.b16 %v1260, %v1259
    %v1276 = vpack.c.b16 %v1262, %v1261
    %v1277 = vpack.c.b16 %v1264, %v1263
    %v1278 = vpack.c.b16 %v1266, %v1265
    %v1279 = vpack.c.b16 %v1268, %v1267
    %v1280 = vpack.c.b16 %v1270, %v1269
    %v1281 = vpack.c.b16 %v1272, %v1271
    %v1282 = vpack.c.b16 %v1274, %v1273
    %1291 = vmatprep.subr.bf16.mxu0 0
    %1292 = vmatpush1.bf16.msra.mxu0 %v1275
    %1293 = vmatprep.subr.bf16.mxu0 0
    %1294 = vmatpush1.bf16.msra.mxu0 %v1276
    %1295 = vmatprep.subr.bf16.mxu0 0
    %1296 = vmatpush1.bf16.msra.mxu0 %v1277
    %1297 = vmatprep.subr.bf16.mxu0 0
    %1298 = vmatpush1.bf16.msra.mxu0 %v1278
    %1299 = vmatprep.subr.bf16.mxu0 0
    %1300 = vmatpush1.bf16.msra.mxu0 %v1279
    %1301 = vmatprep.subr.bf16.mxu0 0
    %1302 = vmatpush1.bf16.msra.mxu0 %v1280
    %1303 = vmatprep.subr.bf16.mxu0 0
    %1304 = vmatpush1.bf16.msra.mxu0 %v1281
    %1305 = vmatprep.subr.bf16.mxu0 0
    %1306 = vmatpush1.bf16.msra.mxu0 %v1282
    %1307 = vmatprep.subr.bf16.mxu0 0
    %1308 = vmatpush1.bf16.msra.mxu0 0
    %1309 = vmatprep.subr.bf16.mxu0 0
    %1310 = vmatpush1.bf16.msra.mxu0 0
    %1311 = vmatprep.subr.bf16.mxu0 0
    %1312 = vmatpush1.bf16.msra.mxu0 0
    %1313 = vmatprep.subr.bf16.mxu0 0
    %1314 = vmatpush1.bf16.msra.mxu0 0
    %1315 = vmatprep.subr.bf16.mxu0 0
    %1316 = vmatpush1.bf16.msra.mxu0 0
    %1317 = vmatprep.subr.bf16.mxu0 0
    %1318 = vmatpush1.bf16.msra.mxu0 0
    %1319 = vmatprep.subr.bf16.mxu0 0
    %1320 = vmatpush1.bf16.msra.mxu0 0
    %1321 = vmatprep.subr.bf16.mxu0 0
    %1322 = vmatpush1.bf16.msra.mxu0 0
    %1323 = vmatprep.mubr.bf16.mxu0 0
    %1324 = vmatmul.mubr.bf16.gmra.mrb[0].mxu0 %v1219
    %v1325 = vpop.f32.mrb[0].mxu0
    %v1326 = vadd.f32 %v1241, %v1325
    %v1327 = vpop.f32.mrb[0].mxu0
    %v1328 = vpop.f32.mrb[0].mxu0
    %v1329 = vadd.f32 %v1241, %v1328
    %v1330 = vpop.f32.mrb[0].mxu0
    %1331 = vdwg.mxu0
    %v1332 = vmax.f32 %v1326, 0.0
    %v1333 = vmax.f32 %v1329, 0.0
    %v1334 = vpack.c.bf16 %v1333, %v1332
    %v1335 = vld [vmem:[#allocation13] sm:$0xff]
    %v1336 = vld [vmem:[#allocation13 + $0x8] sm:$0xff]
    %v1337 = vld [vmem:[#allocation13 + $0x10] sm:$0xff]
    %v1338 = vld [vmem:[#allocation13 + $0x18] sm:$0xff]
    %v1339 = vld [vmem:[#allocation13 + $0x20] sm:$0xff]
    %v1340 = vld [vmem:[#allocation13 + $0x28] sm:$0xff]
    %v1341 = vld [vmem:[#allocation13 + $0x30] sm:$0xff]
    %v1342 = vld [vmem:[#allocation13 + $0x38] sm:$0xff]
    %v1343 = vld [vmem:[#allocation13 + $0x40] sm:$0xff]
    %v1344 = vld [vmem:[#allocation13 + $0x48] sm:$0xff]
    %v1345 = vld [vmem:[#allocation13 + $0x50] sm:$0xff]
    %v1346 = vld [vmem:[#allocation13 + $0x58] sm:$0xff]
    %v1347 = vld [vmem:[#allocation13 + $0x60] sm:$0xff]
    %v1348 = vld [vmem:[#allocation13 + $0x68] sm:$0xff]
    %v1349 = vld [vmem:[#allocation13 + $0x70] sm:$0xff]
    %v1350 = vld [vmem:[#allocation13 + $0x78] sm:$0xff]
    %v1351 = vld [vmem:[#allocation13 + $0x80] sm:$0xff]
    %v1352 = vld [vmem:[#allocation13 + $0x88] sm:$0xff]
    %v1353 = vld [vmem:[#allocation13 + $0x90] sm:$0xff]
    %v1354 = vld [vmem:[#allocation13 + $0x98] sm:$0xff]
    %v1355 = vld [vmem:[#allocation13 + $0xa0] sm:$0xff]
    %v1356 = vld [vmem:[#allocation13 + $0xa8] sm:$0xff]
    %v1357 = vld [vmem:[#allocation13 + $0xb0] sm:$0xff]
    %v1358 = vld [vmem:[#allocation13 + $0xb8] sm:$0xff]
    %v1359 = vld [vmem:[#allocation13 + $0xc0] sm:$0xff]
    %v1360 = vld [vmem:[#allocation13 + $0xc8] sm:$0xff]
    %v1361 = vld [vmem:[#allocation13 + $0xd0] sm:$0xff]
    %v1362 = vld [vmem:[#allocation13 + $0xd8] sm:$0xff]
    %v1363 = vld [vmem:[#allocation13 + $0xe0] sm:$0xff]
    %v1364 = vld [vmem:[#allocation13 + $0xe8] sm:$0xff]
    %v1365 = vld [vmem:[#allocation13 + $0xf0] sm:$0xff]
    %v1366 = vld [vmem:[#allocation13 + $0xf8] sm:$0xff]
    %v1367 = vld [vmem:[#allocation13 + $0x100] sm:$0xff]
    %v1368 = vld [vmem:[#allocation13 + $0x108] sm:$0xff]
    %v1369 = vld [vmem:[#allocation13 + $0x110] sm:$0xff]
    %v1370 = vld [vmem:[#allocation13 + $0x118] sm:$0xff]
    %v1371 = vld [vmem:[#allocation13 + $0x120] sm:$0xff]
    %v1372 = vld [vmem:[#allocation13 + $0x128] sm:$0xff]
    %v1373 = vld [vmem:[#allocation13 + $0x130] sm:$0xff]
    %v1374 = vld [vmem:[#allocation13 + $0x138] sm:$0xff]
    %v1375 = vld [vmem:[#allocation13 + $0x140] sm:$0xff]
    %v1376 = vld [vmem:[#allocation13 + $0x148] sm:$0xff]
    %v1377 = vld [vmem:[#allocation13 + $0x150] sm:$0xff]
    %v1378 = vld [vmem:[#allocation13 + $0x158] sm:$0xff]
    %v1379 = vld [vmem:[#allocation13 + $0x160] sm:$0xff]
    %v1380 = vld [vmem:[#allocation13 + $0x168] sm:$0xff]
    %v1381 = vld [vmem:[#allocation13 + $0x170] sm:$0xff]
    %v1382 = vld [vmem:[#allocation13 + $0x178] sm:$0xff]
    %v1383 = vld [vmem:[#allocation13 + $0x180] sm:$0xff]
    %v1384 = vld [vmem:[#allocation13 + $0x188] sm:$0xff]
    %v1385 = vld [vmem:[#allocation13 + $0x190] sm:$0xff]
    %v1386 = vld [vmem:[#allocation13 + $0x198] sm:$0xff]
    %v1387 = vld [vmem:[#allocation13 + $0x1a0] sm:$0xff]
    %v1388 = vld [vmem:[#allocation13 + $0x1a8] sm:$0xff]
    %v1389 = vld [vmem:[#allocation13 + $0x1b0] sm:$0xff]
    %v1390 = vld [vmem:[#allocation13 + $0x1b8] sm:$0xff]
    %v1391 = vld [vmem:[#allocation13 + $0x1c0] sm:$0xff]
    %v1392 = vld [vmem:[#allocation13 + $0x1c8] sm:$0xff]
    %v1393 = vld [vmem:[#allocation13 + $0x1d0] sm:$0xff]
    %v1394 = vld [vmem:[#allocation13 + $0x1d8] sm:$0xff]
    %v1395 = vld [vmem:[#allocation13 + $0x1e0] sm:$0xff]
    %v1396 = vld [vmem:[#allocation13 + $0x1e8] sm:$0xff]
    %v1397 = vld [vmem:[#allocation13 + $0x1f0] sm:$0xff]
    %v1398 = vld [vmem:[#allocation13 + $0x1f8] sm:$0xff]
    %v1399 = vld [vmem:[%s12] sm:$0xff]
    %v1401 = vlaneseq
    %v1402 = vshrl.u32 %v1401, 7
    %v1403 = vsub.s32 0, %v1402
    %v1404 = vrot.slane %v1399, %v1403
    %v1405 = vlaneseq
    %v1406 = vshrl.u32 %v1405, 7
    %v1407 = vsub.s32 1, %v1406
    %v1408 = vrot.slane %v1399, %v1407
    %v1409 = vlaneseq
    %v1410 = vshrl.u32 %v1409, 7
    %v1411 = vsub.s32 2, %v1410
    %v1412 = vrot.slane %v1399, %v1411
    %v1413 = vlaneseq
    %v1414 = vshrl.u32 %v1413, 7
    %v1415 = vsub.s32 3, %v1414
    %v1416 = vrot.slane %v1399, %v1415
    %v1417 = vlaneseq
    %v1418 = vshrl.u32 %v1417, 7
    %v1419 = vsub.s32 4, %v1418
    %v1420 = vrot.slane %v1399, %v1419
    %v1421 = vlaneseq
    %v1422 = vshrl.u32 %v1421, 7
    %v1423 = vsub.s32 5, %v1422
    %v1424 = vrot.slane %v1399, %v1423
    %v1425 = vlaneseq
    %v1426 = vshrl.u32 %v1425, 7
    %v1427 = vsub.s32 6, %v1426
    %v1428 = vrot.slane %v1399, %v1427
    %v1429 = vlaneseq
    %v1430 = vshrl.u32 %v1429, 7
    %v1431 = vsub.s32 7, %v1430
    %v1432 = vrot.slane %v1399, %v1431
    %v1505 = vunpack.c.l.b16 %v1335
    %v1506 = vunpack.c.h.b16 %v1335
    %v1507 = vunpack.c.l.b16 %v1336
    %v1508 = vunpack.c.h.b16 %v1336
    %v1509 = vunpack.c.l.b16 %v1337
    %v1510 = vunpack.c.h.b16 %v1337
    %v1511 = vunpack.c.l.b16 %v1338
    %v1512 = vunpack.c.h.b16 %v1338
    %v1513 = vunpack.c.l.b16 %v1339
    %v1514 = vunpack.c.h.b16 %v1339
    %v1515 = vunpack.c.l.b16 %v1340
    %v1516 = vunpack.c.h.b16 %v1340
    %v1517 = vunpack.c.l.b16 %v1341
    %v1518 = vunpack.c.h.b16 %v1341
    %v1519 = vunpack.c.l.b16 %v1342
    %v1520 = vunpack.c.h.b16 %v1342
    %v1521 = vunpack.c.l.b16 %v1343
    %v1522 = vunpack.c.h.b16 %v1343
    %v1523 = vunpack.c.l.b16 %v1344
    %v1524 = vunpack.c.h.b16 %v1344
    %v1525 = vunpack.c.l.b16 %v1345
    %v1526 = vunpack.c.h.b16 %v1345
    %v1527 = vunpack.c.l.b16 %v1346
    %v1528 = vunpack.c.h.b16 %v1346
    %v1529 = vunpack.c.l.b16 %v1347
    %v1530 = vunpack.c.h.b16 %v1347
    %v1531 = vunpack.c.l.b16 %v1348
    %v1532 = vunpack.c.h.b16 %v1348
    %v1533 = vunpack.c.l.b16 %v1349
    %v1534 = vunpack.c.h.b16 %v1349
    %v1535 = vunpack.c.l.b16 %v1350
    %v1536 = vunpack.c.h.b16 %v1350
    %v1537 = vunpack.c.l.b16 %v1351
    %v1538 = vunpack.c.h.b16 %v1351
    %v1539 = vunpack.c.l.b16 %v1352
    %v1540 = vunpack.c.h.b16 %v1352
    %v1541 = vunpack.c.l.b16 %v1353
    %v1542 = vunpack.c.h.b16 %v1353
    %v1543 = vunpack.c.l.b16 %v1354
    %v1544 = vunpack.c.h.b16 %v1354
    %v1545 = vunpack.c.l.b16 %v1355
    %v1546 = vunpack.c.h.b16 %v1355
    %v1547 = vunpack.c.l.b16 %v1356
    %v1548 = vunpack.c.h.b16 %v1356
    %v1549 = vunpack.c.l.b16 %v1357
    %v1550 = vunpack.c.h.b16 %v1357
    %v1551 = vunpack.c.l.b16 %v1358
    %v1552 = vunpack.c.h.b16 %v1358
    %v1553 = vunpack.c.l.b16 %v1359
    %v1554 = vunpack.c.h.b16 %v1359
    %v1555 = vunpack.c.l.b16 %v1360
    %v1556 = vunpack.c.h.b16 %v1360
    %v1557 = vunpack.c.l.b16 %v1361
    %v1558 = vunpack.c.h.b16 %v1361
    %v1559 = vunpack.c.l.b16 %v1362
    %v1560 = vunpack.c.h.b16 %v1362
    %v1561 = vunpack.c.l.b16 %v1363
    %v1562 = vunpack.c.h.b16 %v1363
    %v1563 = vunpack.c.l.b16 %v1364
    %v1564 = vunpack.c.h.b16 %v1364
    %v1565 = vunpack.c.l.b16 %v1365
    %v1566 = vunpack.c.h.b16 %v1365
    %v1567 = vunpack.c.l.b16 %v1366
    %v1568 = vunpack.c.h.b16 %v1366
    %v1569 = vunpack.c.l.b16 %v1367
    %v1570 = vunpack.c.h.b16 %v1367
    %v1571 = vunpack.c.l.b16 %v1368
    %v1572 = vunpack.c.h.b16 %v1368
    %v1573 = vunpack.c.l.b16 %v1369
    %v1574 = vunpack.c.h.b16 %v1369
    %v1575 = vunpack.c.l.b16 %v1370
    %v1576 = vunpack.c.h.b16 %v1370
    %v1577 = vunpack.c.l.b16 %v1371
    %v1578 = vunpack.c.h.b16 %v1371
    %v1579 = vunpack.c.l.b16 %v1372
    %v1580 = vunpack.c.h.b16 %v1372
    %v1581 = vunpack.c.l.b16 %v1373
    %v1582 = vunpack.c.h.b16 %v1373
    %v1583 = vunpack.c.l.b16 %v1374
    %v1584 = vunpack.c.h.b16 %v1374
    %v1585 = vunpack.c.l.b16 %v1375
    %v1586 = vunpack.c.h.b16 %v1375
    %v1587 = vunpack.c.l.b16 %v1376
    %v1588 = vunpack.c.h.b16 %v1376
    %v1589 = vunpack.c.l.b16 %v1377
    %v1590 = vunpack.c.h.b16 %v1377
    %v1591 = vunpack.c.l.b16 %v1378
    %v1592 = vunpack.c.h.b16 %v1378
    %v1593 = vunpack.c.l.b16 %v1379
    %v1594 = vunpack.c.h.b16 %v1379
    %v1595 = vunpack.c.l.b16 %v1380
    %v1596 = vunpack.c.h.b16 %v1380
    %v1597 = vunpack.c.l.b16 %v1381
    %v1598 = vunpack.c.h.b16 %v1381
    %v1599 = vunpack.c.l.b16 %v1382
    %v1600 = vunpack.c.h.b16 %v1382
    %v1601 = vunpack.c.l.b16 %v1383
    %v1602 = vunpack.c.h.b16 %v1383
    %v1603 = vunpack.c.l.b16 %v1384
    %v1604 = vunpack.c.h.b16 %v1384
    %v1605 = vunpack.c.l.b16 %v1385
    %v1606 = vunpack.c.h.b16 %v1385
    %v1607 = vunpack.c.l.b16 %v1386
    %v1608 = vunpack.c.h.b16 %v1386
    %v1609 = vunpack.c.l.b16 %v1387
    %v1610 = vunpack.c.h.b16 %v1387
    %v1611 = vunpack.c.l.b16 %v1388
    %v1612 = vunpack.c.h.b16 %v1388
    %v1613 = vunpack.c.l.b16 %v1389
    %v1614 = vunpack.c.h.b16 %v1389
    %v1615 = vunpack.c.l.b16 %v1390
    %v1616 = vunpack.c.h.b16 %v1390
    %v1617 = vunpack.c.l.b16 %v1391
    %v1618 = vunpack.c.h.b16 %v1391
    %v1619 = vunpack.c.l.b16 %v1392
    %v1620 = vunpack.c.h.b16 %v1392
    %v1621 = vunpack.c.l.b16 %v1393
    %v1622 = vunpack.c.h.b16 %v1393
    %v1623 = vunpack.c.l.b16 %v1394
    %v1624 = vunpack.c.h.b16 %v1394
    %v1625 = vunpack.c.l.b16 %v1395
    %v1626 = vunpack.c.h.b16 %v1395
    %v1627 = vunpack.c.l.b16 %v1396
    %v1628 = vunpack.c.h.b16 %v1396
    %v1629 = vunpack.c.l.b16 %v1397
    %v1630 = vunpack.c.h.b16 %v1397
    %v1631 = vunpack.c.l.b16 %v1398
    %v1632 = vunpack.c.h.b16 %v1398
    %v1633 = vpack.c.b16 %v1513, %v1505
    %v1634 = vpack.c.b16 %v1514, %v1506
    %v1635 = vpack.c.b16 %v1515, %v1507
    %v1636 = vpack.c.b16 %v1516, %v1508
    %v1637 = vpack.c.b16 %v1517, %v1509
    %v1638 = vpack.c.b16 %v1518, %v1510
    %v1639 = vpack.c.b16 %v1519, %v1511
    %v1640 = vpack.c.b16 %v1520, %v1512
    %v1641 = vpack.c.b16 %v1529, %v1521
    %v1642 = vpack.c.b16 %v1530, %v1522
    %v1643 = vpack.c.b16 %v1531, %v1523
    %v1644 = vpack.c.b16 %v1532, %v1524
    %v1645 = vpack.c.b16 %v1533, %v1525
    %v1646 = vpack.c.b16 %v1534, %v1526
    %v1647 = vpack.c.b16 %v1535, %v1527
    %v1648 = vpack.c.b16 %v1536, %v1528
    %v1649 = vpack.c.b16 %v1545, %v1537
    %v1650 = vpack.c.b16 %v1546, %v1538
    %v1651 = vpack.c.b16 %v1547, %v1539
    %v1652 = vpack.c.b16 %v1548, %v1540
    %v1653 = vpack.c.b16 %v1549, %v1541
    %v1654 = vpack.c.b16 %v1550, %v1542
    %v1655 = vpack.c.b16 %v1551, %v1543
    %v1656 = vpack.c.b16 %v1552, %v1544
    %v1657 = vpack.c.b16 %v1561, %v1553
    %v1658 = vpack.c.b16 %v1562, %v1554
    %v1659 = vpack.c.b16 %v1563, %v1555
    %v1660 = vpack.c.b16 %v1564, %v1556
    %v1661 = vpack.c.b16 %v1565, %v1557
    %v1662 = vpack.c.b16 %v1566, %v1558
    %v1663 = vpack.c.b16 %v1567, %v1559
    %v1664 = vpack.c.b16 %v1568, %v1560
    %v1665 = vpack.c.b16 %v1577, %v1569
    %v1666 = vpack.c.b16 %v1578, %v1570
    %v1667 = vpack.c.b16 %v1579, %v1571
    %v1668 = vpack.c.b16 %v1580, %v1572
    %v1669 = vpack.c.b16 %v1581, %v1573
    %v1670 = vpack.c.b16 %v1582, %v1574
    %v1671 = vpack.c.b16 %v1583, %v1575
    %v1672 = vpack.c.b16 %v1584, %v1576
    %v1673 = vpack.c.b16 %v1593, %v1585
    %v1674 = vpack.c.b16 %v1594, %v1586
    %v1675 = vpack.c.b16 %v1595, %v1587
    %v1676 = vpack.c.b16 %v1596, %v1588
    %v1677 = vpack.c.b16 %v1597, %v1589
    %v1678 = vpack.c.b16 %v1598, %v1590
    %v1679 = vpack.c.b16 %v1599, %v1591
    %v1680 = vpack.c.b16 %v1600, %v1592
    %v1681 = vpack.c.b16 %v1609, %v1601
    %v1682 = vpack.c.b16 %v1610, %v1602
    %v1683 = vpack.c.b16 %v1611, %v1603
    %v1684 = vpack.c.b16 %v1612, %v1604
    %v1685 = vpack.c.b16 %v1613, %v1605
    %v1686 = vpack.c.b16 %v1614, %v1606
    %v1687 = vpack.c.b16 %v1615, %v1607
    %v1688 = vpack.c.b16 %v1616, %v1608
    %v1689 = vpack.c.b16 %v1625, %v1617
    %v1690 = vpack.c.b16 %v1626, %v1618
    %v1691 = vpack.c.b16 %v1627, %v1619
    %v1692 = vpack.c.b16 %v1628, %v1620
    %v1693 = vpack.c.b16 %v1629, %v1621
    %v1694 = vpack.c.b16 %v1630, %v1622
    %v1695 = vpack.c.b16 %v1631, %v1623
    %v1696 = vpack.c.b16 %v1632, %v1624
    %1761 = vmatprep.subr.bf16.mxu0 %v1634
    %1762 = vmatpush1.bf16.msra.mxu0 %v1633
    %1763 = vmatprep.subr.bf16.mxu0 %v1642
    %1764 = vmatpush1.bf16.msra.mxu0 %v1641
    %1765 = vmatprep.subr.bf16.mxu0 %v1650
    %1766 = vmatpush1.bf16.msra.mxu0 %v1649
    %1767 = vmatprep.subr.bf16.mxu0 %v1658
    %1768 = vmatpush1.bf16.msra.mxu0 %v1657
    %1769 = vmatprep.subr.bf16.mxu0 %v1666
    %1770 = vmatpush1.bf16.msra.mxu0 %v1665
    %1771 = vmatprep.subr.bf16.mxu0 %v1674
    %1772 = vmatpush1.bf16.msra.mxu0 %v1673
    %1773 = vmatprep.subr.bf16.mxu0 %v1682
    %1774 = vmatpush1.bf16.msra.mxu0 %v1681
    %1775 = vmatprep.subr.bf16.mxu0 %v1690
    %1776 = vmatpush1.bf16.msra.mxu0 %v1689
    %1777 = vmatprep.subr.bf16.mxu0 0
    %1778 = vmatpush1.bf16.msra.mxu0 0
    %1779 = vmatprep.subr.bf16.mxu0 0
    %1780 = vmatpush1.bf16.msra.mxu0 0
    %1781 = vmatprep.subr.bf16.mxu0 0
    %1782 = vmatpush1.bf16.msra.mxu0 0
    %1783 = vmatprep.subr.bf16.mxu0 0
    %1784 = vmatpush1.bf16.msra.mxu0 0
    %1785 = vmatprep.subr.bf16.mxu0 0
    %1786 = vmatpush1.bf16.msra.mxu0 0
    %1787 = vmatprep.subr.bf16.mxu0 0
    %1788 = vmatpush1.bf16.msra.mxu0 0
    %1789 = vmatprep.subr.bf16.mxu0 0
    %1790 = vmatpush1.bf16.msra.mxu0 0
    %1791 = vmatprep.subr.bf16.mxu0 0
    %1792 = vmatpush1.bf16.msra.mxu0 0
    %1793 = vmatprep.mubr.bf16.mxu0 0
    %1794 = vmatmul.mubr.bf16.gmra.mrb[0].mxu0 %v1334
    %v1795 = vpop.f32.mrb[0].mxu0
    %v1796 = vadd.f32 %v1404, %v1795
    %v1797 = vpop.f32.mrb[0].mxu0
    %v1798 = vadd.f32 %v1408, %v1797
    %v1799 = vpop.f32.mrb[0].mxu0
    %v1800 = vadd.f32 %v1404, %v1799
    %v1801 = vpop.f32.mrb[0].mxu0
    %v1802 = vadd.f32 %v1408, %v1801
    %1803 = vdwg.mxu0
    %1804 = vmatprep.subr.bf16.mxu0 %v1636
    %1805 = vmatpush1.bf16.msra.mxu0 %v1635
    %1806 = vmatprep.subr.bf16.mxu0 %v1644
    %1807 = vmatpush1.bf16.msra.mxu0 %v1643
    %1808 = vmatprep.subr.bf16.mxu0 %v1652
    %1809 = vmatpush1.bf16.msra.mxu0 %v1651
    %1810 = vmatprep.subr.bf16.mxu0 %v1660
    %1811 = vmatpush1.bf16.msra.mxu0 %v1659
    %1812 = vmatprep.subr.bf16.mxu0 %v1668
    %1813 = vmatpush1.bf16.msra.mxu0 %v1667
    %1814 = vmatprep.subr.bf16.mxu0 %v1676
    %1815 = vmatpush1.bf16.msra.mxu0 %v1675
    %1816 = vmatprep.subr.bf16.mxu0 %v1684
    %1817 = vmatpush1.bf16.msra.mxu0 %v1683
    %1818 = vmatprep.subr.bf16.mxu0 %v1692
    %1819 = vmatpush1.bf16.msra.mxu0 %v1691
    %1820 = vmatprep.subr.bf16.mxu0 0
    %1821 = vmatpush1.bf16.msra.mxu0 0
    %1822 = vmatprep.subr.bf16.mxu0 0
    %1823 = vmatpush1.bf16.msra.mxu0 0
    %1824 = vmatprep.subr.bf16.mxu0 0
    %1825 = vmatpush1.bf16.msra.mxu0 0
    %1826 = vmatprep.subr.bf16.mxu0 0
    %1827 = vmatpush1.bf16.msra.mxu0 0
    %1828 = vmatprep.subr.bf16.mxu0 0
    %1829 = vmatpush1.bf16.msra.mxu0 0
    %1830 = vmatprep.subr.bf16.mxu0 0
    %1831 = vmatpush1.bf16.msra.mxu0 0
    %1832 = vmatprep.subr.bf16.mxu0 0
    %1833 = vmatpush1.bf16.msra.mxu0 0
    %1834 = vmatprep.subr.bf16.mxu0 0
    %1835 = vmatpush1.bf16.msra.mxu0 0
    %1836 = vmatprep.mubr.bf16.mxu0 0
    %1837 = vmatmul.mubr.bf16.gmra.mrb[0].mxu0 %v1334
    %v1838 = vpop.f32.mrb[0].mxu0
    %v1839 = vadd.f32 %v1412, %v1838
    %v1840 = vpop.f32.mrb[0].mxu0
    %v1841 = vadd.f32 %v1416, %v1840
    %v1842 = vpop.f32.mrb[0].mxu0
    %v1843 = vadd.f32 %v1412, %v1842
    %v1844 = vpop.f32.mrb[0].mxu0
    %v1845 = vadd.f32 %v1416, %v1844
    %1846 = vdwg.mxu0
    %1847 = vmatprep.subr.bf16.mxu0 %v1638
    %1848 = vmatpush1.bf16.msra.mxu0 %v1637
    %1849 = vmatprep.subr.bf16.mxu0 %v1646
    %1850 = vmatpush1.bf16.msra.mxu0 %v1645
    %1851 = vmatprep.subr.bf16.mxu0 %v1654
    %1852 = vmatpush1.bf16.msra.mxu0 %v1653
    %1853 = vmatprep.subr.bf16.mxu0 %v1662
    %1854 = vmatpush1.bf16.msra.mxu0 %v1661
    %1855 = vmatprep.subr.bf16.mxu0 %v1670
    %1856 = vmatpush1.bf16.msra.mxu0 %v1669
    %1857 = vmatprep.subr.bf16.mxu0 %v1678
    %1858 = vmatpush1.bf16.msra.mxu0 %v1677
    %1859 = vmatprep.subr.bf16.mxu0 %v1686
    %1860 = vmatpush1.bf16.msra.mxu0 %v1685
    %1861 = vmatprep.subr.bf16.mxu0 %v1694
    %1862 = vmatpush1.bf16.msra.mxu0 %v1693
    %1863 = vmatprep.subr.bf16.mxu0 0
    %1864 = vmatpush1.bf16.msra.mxu0 0
    %1865 = vmatprep.subr.bf16.mxu0 0
    %1866 = vmatpush1.bf16.msra.mxu0 0
    %1867 = vmatprep.subr.bf16.mxu0 0
    %1868 = vmatpush1.bf16.msra.mxu0 0
    %1869 = vmatprep.subr.bf16.mxu0 0
    %1870 = vmatpush1.bf16.msra.mxu0 0
    %1871 = vmatprep.subr.bf16.mxu0 0
    %1872 = vmatpush1.bf16.msra.mxu0 0
    %1873 = vmatprep.subr.bf16.mxu0 0
    %1874 = vmatpush1.bf16.msra.mxu0 0
    %1875 = vmatprep.subr.bf16.mxu0 0
    %1876 = vmatpush1.bf16.msra.mxu0 0
    %1877 = vmatprep.subr.bf16.mxu0 0
    %1878 = vmatpush1.bf16.msra.mxu0 0
    %1879 = vmatprep.mubr.bf16.mxu0 0
    %1880 = vmatmul.mubr.bf16.gmra.mrb[0].mxu0 %v1334
    %v1881 = vpop.f32.mrb[0].mxu0
    %v1882 = vadd.f32 %v1420, %v1881
    %v1883 = vpop.f32.mrb[0].mxu0
    %v1884 = vadd.f32 %v1424, %v1883
    %v1885 = vpop.f32.mrb[0].mxu0
    %v1886 = vadd.f32 %v1420, %v1885
    %v1887 = vpop.f32.mrb[0].mxu0
    %v1888 = vadd.f32 %v1424, %v1887
    %1889 = vdwg.mxu0
    %1890 = vmatprep.subr.bf16.mxu0 %v1640
    %1891 = vmatpush1.bf16.msra.mxu0 %v1639
    %1892 = vmatprep.subr.bf16.mxu0 %v1648
    %1893 = vmatpush1.bf16.msra.mxu0 %v1647
    %1894 = vmatprep.subr.bf16.mxu0 %v1656
    %1895 = vmatpush1.bf16.msra.mxu0 %v1655
    %1896 = vmatprep.subr.bf16.mxu0 %v1664
    %1897 = vmatpush1.bf16.msra.mxu0 %v1663
    %1898 = vmatprep.subr.bf16.mxu0 %v1672
    %1899 = vmatpush1.bf16.msra.mxu0 %v1671
    %1900 = vmatprep.subr.bf16.mxu0 %v1680
    %1901 = vmatpush1.bf16.msra.mxu0 %v1679
    %1902 = vmatprep.subr.bf16.mxu0 %v1688
    %1903 = vmatpush1.bf16.msra.mxu0 %v1687
    %1904 = vmatprep.subr.bf16.mxu0 %v1696
    %1905 = vmatpush1.bf16.msra.mxu0 %v1695
    %1906 = vmatprep.subr.bf16.mxu0 0
    %1907 = vmatpush1.bf16.msra.mxu0 0
    %1908 = vmatprep.subr.bf16.mxu0 0
    %1909 = vmatpush1.bf16.msra.mxu0 0
    %1910 = vmatprep.subr.bf16.mxu0 0
    %1911 = vmatpush1.bf16.msra.mxu0 0
    %1912 = vmatprep.subr.bf16.mxu0 0
    %1913 = vmatpush1.bf16.msra.mxu0 0
    %1914 = vmatprep.subr.bf16.mxu0 0
    %1915 = vmatpush1.bf16.msra.mxu0 0
    %1916 = vmatprep.subr.bf16.mxu0 0
    %1917 = vmatpush1.bf16.msra.mxu0 0
    %1918 = vmatprep.subr.bf16.mxu0 0
    %1919 = vmatpush1.bf16.msra.mxu0 0
    %1920 = vmatprep.subr.bf16.mxu0 0
    %1921 = vmatpush1.bf16.msra.mxu0 0
    %1922 = vmatprep.mubr.bf16.mxu0 0
    %1923 = vmatmul.mubr.bf16.gmra.mrb[0].mxu0 %v1334
    %v1924 = vpop.f32.mrb[0].mxu0
    %v1925 = vadd.f32 %v1428, %v1924
    %v1926 = vpop.f32.mrb[0].mxu0
    %v1927 = vadd.f32 %v1432, %v1926
    %v1928 = vpop.f32.mrb[0].mxu0
    %v1929 = vadd.f32 %v1428, %v1928
    %v1930 = vpop.f32.mrb[0].mxu0
    %v1931 = vadd.f32 %v1432, %v1930
    %1932 = vdwg.mxu0
    %v1933 = vxor.u32 %v1796, 2147483648
    %v1934 = vxor.u32 %v1798, 2147483648
    %v1935 = vxor.u32 %v1839, 2147483648
    %v1936 = vxor.u32 %v1841, 2147483648
    %v1937 = vxor.u32 %v1882, 2147483648
    %v1938 = vxor.u32 %v1884, 2147483648
    %v1939 = vxor.u32 %v1925, 2147483648
    %v1940 = vxor.u32 %v1927, 2147483648
    %v1941 = vxor.u32 %v1800, 2147483648
    %v1942 = vxor.u32 %v1802, 2147483648
    %v1943 = vxor.u32 %v1843, 2147483648
    %v1944 = vxor.u32 %v1845, 2147483648
    %v1945 = vxor.u32 %v1886, 2147483648
    %v1946 = vxor.u32 %v1888, 2147483648
    %v1947 = vxor.u32 %v1929, 2147483648
    %v1948 = vxor.u32 %v1931, 2147483648
    %v1949 = vmul.f32 %v1933, 1.442695
    %v1950 = vpow.pop %v1949
    %v1951 = vmul.f32 %v1934, 1.442695
    %v1952 = vpow.pop %v1951
    %v1953 = vmul.f32 %v1935, 1.442695
    %v1954 = vpow.pop %v1953
    %v1955 = vmul.f32 %v1936, 1.442695
    %v1956 = vpow.pop %v1955
    %v1957 = vmul.f32 %v1937, 1.442695
    %v1958 = vpow.pop %v1957
    %v1959 = vmul.f32 %v1938, 1.442695
    %v1960 = vpow.pop %v1959
    %v1961 = vmul.f32 %v1939, 1.442695
    %v1962 = vpow.pop %v1961
    %v1963 = vmul.f32 %v1940, 1.442695
    %v1964 = vpow.pop %v1963
    %v1965 = vmul.f32 %v1941, 1.442695
    %v1966 = vpow.pop %v1965
    %v1967 = vmul.f32 %v1942, 1.442695
    %v1968 = vpow.pop %v1967
    %v1969 = vmul.f32 %v1943, 1.442695
    %v1970 = vpow.pop %v1969
    %v1971 = vmul.f32 %v1944, 1.442695
    %v1972 = vpow.pop %v1971
    %v1973 = vmul.f32 %v1945, 1.442695
    %v1974 = vpow.pop %v1973
    %v1975 = vmul.f32 %v1946, 1.442695
    %v1976 = vpow.pop %v1975
    %v1977 = vmul.f32 %v1947, 1.442695
    %v1978 = vpow.pop %v1977
    %v1979 = vmul.f32 %v1948, 1.442695
    %v1980 = vpow.pop %v1979
    %v1981 = vadd.f32 %v1950, 1.0
    %v1982 = vadd.f32 %v1952, 1.0
    %v1983 = vadd.f32 %v1954, 1.0
    %v1984 = vadd.f32 %v1956, 1.0
    %v1985 = vadd.f32 %v1958, 1.0
    %v1986 = vadd.f32 %v1960, 1.0
    %v1987 = vadd.f32 %v1962, 1.0
    %v1988 = vadd.f32 %v1964, 1.0
    %v1989 = vadd.f32 %v1966, 1.0
    %v1990 = vadd.f32 %v1968, 1.0
    %v1991 = vadd.f32 %v1970, 1.0
    %v1992 = vadd.f32 %v1972, 1.0
    %v1993 = vadd.f32 %v1974, 1.0
    %v1994 = vadd.f32 %v1976, 1.0
    %v1995 = vadd.f32 %v1978, 1.0
    %v1996 = vadd.f32 %v1980, 1.0
    %v1997 = vrcp.pop %v1981
    %v1998 = vmul.f32 1.0, %v1997
    %v1999 = vrcp.pop %v1982
    %v2000 = vmul.f32 1.0, %v1999
    %v2001 = vrcp.pop %v1983
    %v2002 = vmul.f32 1.0, %v2001
    %v2003 = vrcp.pop %v1984
    %v2004 = vmul.f32 1.0, %v2003
    %v2005 = vrcp.pop %v1985
    %v2006 = vmul.f32 1.0, %v2005
    %v2007 = vrcp.pop %v1986
    %v2008 = vmul.f32 1.0, %v2007
    %v2009 = vrcp.pop %v1987
    %v2010 = vmul.f32 1.0, %v2009
    %v2011 = vrcp.pop %v1988
    %v2012 = vmul.f32 1.0, %v2011
    %v2013 = vrcp.pop %v1989
    %v2014 = vmul.f32 1.0, %v2013
    %v2015 = vrcp.pop %v1990
    %v2016 = vmul.f32 1.0, %v2015
    %v2017 = vrcp.pop %v1991
    %v2018 = vmul.f32 1.0, %v2017
    %v2019 = vrcp.pop %v1992
    %v2020 = vmul.f32 1.0, %v2019
    %v2021 = vrcp.pop %v1993
    %v2022 = vmul.f32 1.0, %v2021
    %v2023 = vrcp.pop %v1994
    %v2024 = vmul.f32 1.0, %v2023
    %v2025 = vrcp.pop %v1995
    %v2026 = vmul.f32 1.0, %v2025
    %v2027 = vrcp.pop %v1996
    %v2028 = vmul.f32 1.0, %v2027
    %v2029 = vpack.c.bf16 %v2014, %v1998
    %v2030 = vpack.c.bf16 %v2016, %v2000
    %v2031 = vpack.c.bf16 %v2018, %v2002
    %v2032 = vpack.c.bf16 %v2020, %v2004
    %v2033 = vpack.c.bf16 %v2022, %v2006
    %v2034 = vpack.c.bf16 %v2024, %v2008
    %v2035 = vpack.c.bf16 %v2026, %v2010
    %v2036 = vpack.c.bf16 %v2028, %v2012
    %v2045 = vunpack.c.l.b16 %v2029
    %v2046 = vunpack.c.l.b16 %v2030
    %v2047 = vunpack.c.l.b16 %v2031
    %v2048 = vunpack.c.l.b16 %v2032
    %v2049 = vunpack.c.l.b16 %v2033
    %v2050 = vunpack.c.l.b16 %v2034
    %v2051 = vunpack.c.l.b16 %v2035
    %v2052 = vunpack.c.l.b16 %v2036
    %v2053 = vunpack.c.h.b16 %v2029
    %v2054 = vunpack.c.h.b16 %v2030
    %v2055 = vunpack.c.h.b16 %v2031
    %v2056 = vunpack.c.h.b16 %v2032
    %v2057 = vunpack.c.h.b16 %v2033
    %v2058 = vunpack.c.h.b16 %v2034
    %v2059 = vunpack.c.h.b16 %v2035
    %v2060 = vunpack.c.h.b16 %v2036
    %v2061 = vpack.c.b16 %v2046, %v2045
    %v2062 = vpack.c.b16 %v2048, %v2047
    %v2063 = vpack.c.b16 %v2050, %v2049
    %v2064 = vpack.c.b16 %v2052, %v2051
    %v2065 = vpack.c.b16 %v2054, %v2053
    %v2066 = vpack.c.b16 %v2056, %v2055
    %v2067 = vpack.c.b16 %v2058, %v2057
    %v2068 = vpack.c.b16 %v2060, %v2059
    %2077 = vst [vmem:[#allocation14] sm:$0xff] %v2061
    %2078 = vst [vmem:[#allocation14 + $0x8] sm:$0xff] %v2062
    %2079 = vst [vmem:[#allocation14 + $0x10] sm:$0xff] %v2063
    %2080 = vst [vmem:[#allocation14 + $0x18] sm:$0xff] %v2064
    %2081 = vst [vmem:[#allocation14 + $0x20] sm:$0xff] %v2065
    %2082 = vst [vmem:[#allocation14 + $0x28] sm:$0xff] %v2066
    %2083 = vst [vmem:[#allocation14 + $0x30] sm:$0xff] %v2067
    %2084 = vst [vmem:[#allocation14 + $0x38] sm:$0xff] %v2068
    // Predicated region
    $region82: #{tpu_custom_call.1} parent=1 // pred_check
      _
    $region83: #{tpu_custom_call.1} parent=1 // pred_check_branch
      %2086 = sbr.rel (0) target = $region85
    $region84: #{tpu_custom_call.1} parent=1 // pred_region
      %s2088 = ssub.s32 1024, 1024
      %2089 = vsyncadd [#allocation4], %s2088
      %s2090 = sshll.u32 [#allocation14], 4
      %s2091 = int_to_ptr.vmem [resolvable:$true] %s2090
      %2096 = dma.vmem_to_hbm [thread:$0]  %s2091, 1024, %s13, [#allocation4], 512, 512, 32
    $region85: #{tpu_custom_call.1} parent=1 // pred_fallthru
      _
    // Predicated region
    $region86: #{tpu_custom_call.1} parent=1 // pred_check
      _
    $region87: #{tpu_custom_call.1} parent=1 // pred_check_branch
      %2098 = sbr.rel (0) target = $region89
    $region88: #{tpu_custom_call.1} parent=1 // pred_region
      %2099 = dma.done [#allocation4], 1024
    $region89: #{tpu_custom_call.1} parent=1 // pred_fallthru
      _
    %2100 = vsyncpa [#allocation3], 1
    %2101 = vsyncpa [#allocation6], 1
    %2102 = vsyncpa [#allocation9], 1
    %2103 = vsyncpa [#allocation12], 1
    %2104 = vsyncpa [#allocation4], 1

// kernel: tpu_custom_call.1
$region0: #{tpu_custom_call.1}
  #allocation0 [shape = 'u32[]', space=smem, size = 0x4, offset = 0x4, fixed_abs, tag = 'smem constant byte address 0x4 - core index']
  #allocation1 [shape = 'u32[144,128]{1,0:T(1,128)}', space=vmem, size = 0x12000, scoped, tag = 'internal scratch']
  %s0 = inlined_call_operand.hbm [shape: bf16[16,1024], index: 0, kind: input, shape index: {}]
  %s1 = inlined_call_operand.hbm [shape: bf16[1024,128], index: 1, kind: input, shape index: {}]
  %s2 = inlined_call_operand.vmem [shape: f32[1,128], index: 2, kind: input, shape index: {}]
  %s3 = inlined_call_operand.hbm [shape: bf16[128,128], index: 3, kind: input, shape index: {}]
  %s4 = inlined_call_operand.vmem [shape: f32[1,128], index: 4, kind: input, shape index: {}]
  %s5 = inlined_call_operand.hbm [shape: bf16[128,128], index: 5, kind: input, shape index: {}]
  %s6 = inlined_call_operand.vmem [shape: f32[1,128], index: 6, kind: input, shape index: {}]
  %s7 = inlined_call_operand.hbm [shape: bf16[128,128], index: 7, kind: input, shape index: {}]
  %s8 = inlined_call_operand.vmem [shape: f32[1,128], index: 8, kind: input, shape index: {}]
  %s9 = inlined_call_operand.hbm [shape: bf16[128,128], index: 9, kind: input, shape index: {}]
  %s10 = inlined_call_operand.vmem [shape: f32[1,128], index: 10, kind: input, shape index: {}]
  %s11 = inlined_call_operand.hbm [shape: bf16[128,1024], index: 11, kind: input, shape index: {}]
  %s12 = inlined_call_operand.vmem [shape: f32[1,1024], index: 12, kind: input, shape index: {}]
  %s13 = inlined_call_operand.hbm [shape: bf16[16,1024], index: 13, kind: output, shape index: {}]
  %s14 = sld [smem:[#allocation0]]
  $region90: #{tpu_custom_call.1} parent=0
    _
  %s16 = ssub.s32 1, %s14
  %s17 = scalar_select 0, %s16, %s14
  $region1: #{tpu_custom_call.1} parent=0
    #allocation2 [shape = 'u8[32768]{0}', space=vmem, size = 0x8000, scoped, tag = 'input window, operand 0, single buffered']
    #allocation3 [shape = 's32[1]{0}', space=sflag, size = 0x4, scoped, tag = 'scoped memory for tpu_custom_call.1']
    #allocation4 [shape = 's32[1]{0}', space=sflag, size = 0x4, scoped, tag = 'scoped memory for tpu_custom_call.1']
    #allocation5 [shape = 'u8[262144]{0}', space=vmem, size = 0x40000, scoped, tag = 'input window, operand 1, single buffered']
    #allocation6 [shape = 's32[1]{0}', space=sflag, size = 0x4, scoped, tag = 'scoped memory for tpu_custom_call.1']
    #allocation7 [shape = 'u8[32768]{0}', space=vmem, size = 0x8000, scoped, tag = 'input window, operand 3, single buffered']
    #allocation8 [shape = 'u8[32768]{0}', space=vmem, size = 0x8000, scoped, tag = 'input window, operand 5, single buffered']
    #allocation9 [shape = 's32[1]{0}', space=sflag, size = 0x4, scoped, tag = 'scoped memory for tpu_custom_call.1']
    #allocation10 [shape = 'u8[32768]{0}', space=vmem, size = 0x8000, scoped, tag = 'input window, operand 7, single buffered']
    #allocation11 [shape = 'u8[32768]{0}', space=vmem, size = 0x8000, scoped, tag = 'input window, operand 9, single buffered']
    #allocation12 [shape = 's32[1]{0}', space=sflag, size = 0x4, scoped, tag = 'scoped memory for tpu_custom_call.1']
    #allocation13 [shape = 'u8[262144]{0}', space=vmem, size = 0x40000, scoped, tag = 'input window, operand 11, single buffered']
    #allocation14 [shape = 'u8[32768]{0}', space=vmem, size = 0x8000, scoped, tag = 'output window, operand 0, single buffered']
    %18 = vsyncpa [#allocation3], 0
    %19 = vsyncpa [#allocation6], 0
    %20 = vsyncpa [#allocation9], 0
    %21 = vsyncpa [#allocation12], 0
    %22 = vsyncpa [#allocation4], 0
    // Predicated region
    $region2: #{tpu_custom_call.1} parent=1 // pred_check
      _
    $region3: #{tpu_custom_call.1} parent=1 // pred_check_branch
      %24 = sbr.rel (0) target = $region5
    $region4: #{tpu_custom_call.1} parent=1 // pred_region
      %s26 = ssub.s32 1024, 1024
      %27 = vsyncadd [#allocation3], %s26
      %s28 = sshll.u32 [#allocation2], 4
      %s29 = int_to_ptr.vmem [resolvable:$true] %s28
      %34 = dma.hbm_to_vmem [thread:$0]  %s0, 1024, %s29, [#allocation3], 512, 512, 32
    $region5: #{tpu_custom_call.1} parent=1 // pred_fallthru
      _
    // Predicated region
    $region6: #{tpu_custom_call.1} parent=1 // pred_check
      _
    $region7: #{tpu_custom_call.1} parent=1 // pred_check_branch
      %36 = sbr.rel (0) target = $region9
    $region8: #{tpu_custom_call.1} parent=1 // pred_region
      %s38 = ssub.s32 8192, 8192
      %39 = vsyncadd [#allocation6], %s38
      %s40 = sshll.u32 [#allocation5], 4
      %s41 = int_to_ptr.vmem [resolvable:$true] %s40
      %46 = dma.hbm_to_vmem [thread:$0]  %s1, 8192, %s41, [#allocation6], 64, 64, 4
    $region9: #{tpu_custom_call.1} parent=1 // pred_fallthru
      _
    // Predicated region
    $region10: #{tpu_custom_call.1} parent=1 // pred_check
      _
    $region11: #{tpu_custom_call.1} parent=1 // pred_check_branch
      %48 = sbr.rel (0) target = $region13
    $region12: #{tpu_custom_call.1} parent=1 // pred_region
      _
    $region13: #{tpu_custom_call.1} parent=1 // pred_fallthru
      _
    // Predicated region
    $region14: #{tpu_custom_call.1} parent=1 // pred_check
      _
    $region15: #{tpu_custom_call.1} parent=1 // pred_check_branch
      %50 = sbr.rel (0) target = $region17
    $region16: #{tpu_custom_call.1} parent=1 // pred_region
      %s52 = ssub.s32 1024, 1024
      %53 = vsyncadd [#allocation6], %s52
      %s54 = sshll.u32 [#allocation7], 4
      %s55 = int_to_ptr.vmem [resolvable:$true] %s54
      %60 = dma.hbm_to_vmem [thread:$0]  %s3, 1024, %s55, [#allocation6], 64, 64, 4
    $region17: #{tpu_custom_call.1} parent=1 // pred_fallthru
      _
    // Predicated region
    $region18: #{tpu_custom_call.1} parent=1 // pred_check
      _
    $region19: #{tpu_custom_call.1} parent=1 // pred_check_branch
      %62 = sbr.rel (0) target = $region21
    $region20: #{tpu_custom_call.1} parent=1 // pred_region
      _
    $region21: #{tpu_custom_call.1} parent=1 // pred_fallthru
      _
    // Predicated region
    $region22: #{tpu_custom_call.1} parent=1 // pred_check
      _
    $region23: #{tpu_custom_call.1} parent=1 // pred_check_branch
      %64 = sbr.rel (0) target = $region25
    $region24: #{tpu_custom_call.1} parent=1 // pred_region
      %s66 = ssub.s32 1024, 1024
      %67 = vsyncadd [#allocation9], %s66
      %s68 = sshll.u32 [#allocation8], 4
      %s69 = int_to_ptr.vmem [resolvable:$true] %s68
      %74 = dma.hbm_to_vmem [thread:$0]  %s5, 1024, %s69, [#allocation9], 64, 64, 4
    $region25: #{tpu_custom_call.1} parent=1 // pred_fallthru
      _
    // Predicated region
    $region26: #{tpu_custom_call.1} parent=1 // pred_check
      _
    $region27: #{tpu_custom_call.1} parent=1 // pred_check_branch
      %76 = sbr.rel (0) target = $region29
    $region28: #{tpu_custom_call.1} parent=1 // pred_region
      _
    $region29: #{tpu_custom_call.1} parent=1 // pred_fallthru
      _
    // Predicated region
    $region30: #{tpu_custom_call.1} parent=1 // pred_check
      _
    $region31: #{tpu_custom_call.1} parent=1 // pred_check_branch
      %78 = sbr.rel (0) target = $region33
    $region32: #{tpu_custom_call.1} parent=1 // pred_region
      %s80 = ssub.s32 1024, 1024
      %81 = vsyncadd [#allocation9], %s80
      %s82 = sshll.u32 [#allocation10], 4
      %s83 = int_to_ptr.vmem [resolvable:$true] %s82
      %88 = dma.hbm_to_vmem [thread:$0]  %s7, 1024, %s83, [#allocation9], 64, 64, 4
    $region33: #{tpu_custom_call.1} parent=1 // pred_fallthru
      _
    // Predicated region
    $region34: #{tpu_custom_call.1} parent=1 // pred_check
      _
    $region35: #{tpu_custom_call.1} parent=1 // pred_check_branch
      %90 = sbr.rel (0) target = $region37
    $region36: #{tpu_custom_call.1} parent=1 // pred_region
      _
    $region37: #{tpu_custom_call.1} parent=1 // pred_fallthru
      _
    // Predicated region
    $region38: #{tpu_custom_call.1} parent=1 // pred_check
      _
    $region39: #{tpu_custom_call.1} parent=1 // pred_check_branch
      %92 = sbr.rel (0) target = $region41
    $region40: #{tpu_custom_call.1} parent=1 // pred_region
      %s94 = ssub.s32 1024, 1024
      %95 = vsyncadd [#allocation12], %s94
      %s96 = sshll.u32 [#allocation11], 4
      %s97 = int_to_ptr.vmem [resolvable:$true] %s96
      %102 = dma.hbm_to_vmem [thread:$0]  %s9, 1024, %s97, [#allocation12], 64, 64, 4
    $region41: #{tpu_custom_call.1} parent=1 // pred_fallthru
      _
    // Predicated region
    $region42: #{tpu_custom_call.1} parent=1 // pred_check
      _
    $region43: #{tpu_custom_call.1} parent=1 // pred_check_branch
      %104 = sbr.rel (0) target = $region45
    $region44: #{tpu_custom_call.1} parent=1 // pred_region
      _
    $region45: #{tpu_custom_call.1} parent=1 // pred_fallthru
      _
    // Predicated region
    $region46: #{tpu_custom_call.1} parent=1 // pred_check
      _
    $region47: #{tpu_custom_call.1} parent=1 // pred_check_branch
      %106 = sbr.rel (0) target = $region49
    $region48: #{tpu_custom_call.1} parent=1 // pred_region
      %s108 = ssub.s32 8192, 8192
      %109 = vsyncadd [#allocation12], %s108
      %s110 = sshll.u32 [#allocation13], 4
      %s111 = int_to_ptr.vmem [resolvable:$true] %s110
      %116 = dma.hbm_to_vmem [thread:$0]  %s11, 8192, %s111, [#allocation12], 512, 512, 32
    $region49: #{tpu_custom_call.1} parent=1 // pred_fallthru
      _
    // Predicated region
    $region50: #{tpu_custom_call.1} parent=1 // pred_check
      _
    $region51: #{tpu_custom_call.1} parent=1 // pred_check_branch
      %118 = sbr.rel (0) target = $region53
    $region52: #{tpu_custom_call.1} parent=1 // pred_region
      _
    $region53: #{tpu_custom_call.1} parent=1 // pred_fallthru
      _
    // Predicated region
    $region54: #{tpu_custom_call.1} parent=1 // pred_check
      _
    $region55: #{tpu_custom_call.1} parent=1 // pred_check_branch
      %120 = sbr.rel (0) target = $region57
    $region56: #{tpu_custom_call.1} parent=1 // pred_region
      %121 = dma.done [#allocation3], 1024
    $region57: #{tpu_custom_call.1} parent=1 // pred_fallthru
      _
    // Predicated region
    $region58: #{tpu_custom_call.1} parent=1 // pred_check
      _
    $region59: #{tpu_custom_call.1} parent=1 // pred_check_branch
      %123 = sbr.rel (0) target = $region61
    $region60: #{tpu_custom_call.1} parent=1 // pred_region
      %124 = dma.done [#allocation6], 8192
    $region61: #{tpu_custom_call.1} parent=1 // pred_fallthru
      _
    // Predicated region
    $region62: #{tpu_custom_call.1} parent=1 // pred_check
      _
    $region63: #{tpu_custom_call.1} parent=1 // pred_check_branch
      %126 = sbr.rel (0) target = $region65
    $region64: #{tpu_custom_call.1} parent=1 // pred_region
      %127 = dma.done [#allocation6], 1024
    $region65: #{tpu_custom_call.1} parent=1 // pred_fallthru
      _
    // Predicated region
    $region66: #{tpu_custom_call.1} parent=1 // pred_check
      _
    $region67: #{tpu_custom_call.1} parent=1 // pred_check_branch
      %129 = sbr.rel (0) target = $region69
    $region68: #{tpu_custom_call.1} parent=1 // pred_region
      %130 = dma.done [#allocation9], 1024
    $region69: #{tpu_custom_call.1} parent=1 // pred_fallthru
      _
    // Predicated region
    $region70: #{tpu_custom_call.1} parent=1 // pred_check
      _
    $region71: #{tpu_custom_call.1} parent=1 // pred_check_branch
      %132 = sbr.rel (0) target = $region73
    $region72: #{tpu_custom_call.1} parent=1 // pred_region
      %133 = dma.done [#allocation9], 1024
    $region73: #{tpu_custom_call.1} parent=1 // pred_fallthru
      _
    // Predicated region
    $region74: #{tpu_custom_call.1} parent=1 // pred_check
      _
    $region75: #{tpu_custom_call.1} parent=1 // pred_check_branch
      %135 = sbr.rel (0) target = $region77
    $region76: #{tpu_custom_call.1} parent=1 // pred_region
      %136 = dma.done [#allocation12], 1024
    $region77: #{tpu_custom_call.1} parent=1 // pred_fallthru
      _
    // Predicated region
    $region78: #{tpu_custom_call.1} parent=1 // pred_check
      _
    $region79: #{tpu_custom_call.1} parent=1 // pred_check_branch
      %138 = sbr.rel (0) target = $region81
    $region80: #{tpu_custom_call.1} parent=1 // pred_region
      %139 = dma.done [#allocation12], 8192
    $region81: #{tpu_custom_call.1} parent=1 // pred_fallthru
      _
    %v141 = vld [vmem:[#allocation2] sm:$0xff]
    %v142 = vld [vmem:[#allocation2 + $0x8] sm:$0xff]
    %v143 = vld [vmem:[#allocation2 + $0x10] sm:$0xff]
    %v144 = vld [vmem:[#allocation2 + $0x18] sm:$0xff]
    %v145 = vld [vmem:[#allocation2 + $0x20] sm:$0xff]
    %v146 = vld [vmem:[#allocation2 + $0x28] sm:$0xff]
    %v147 = vld [vmem:[#allocation2 + $0x30] sm:$0xff]
    %v148 = vld [vmem:[#allocation2 + $0x38] sm:$0xff]
    %v149 = vld [vmem:[#allocation5] sm:$0xf]
    %v150 = vld [vmem:[#allocation5 + $0x4] sm:$0xf]
    %v151 = vld [vmem:[#allocation5 + $0x8] sm:$0xf]
    %v152 = vld [vmem:[#allocation5 + $0xc] sm:$0xf]
    %v153 = vld [vmem:[#allocation5 + $0x10] sm:$0xf]
    %v154 = vld [vmem:[#allocation5 + $0x14] sm:$0xf]
    %v155 = vld [vmem:[#allocation5 + $0x18] sm:$0xf]
    %v156 = vld [vmem:[#allocation5 + $0x1c] sm:$0xf]
    %v157 = vld [vmem:[#allocation5 + $0x20] sm:$0xf]
    %v158 = vld [vmem:[#allocation5 + $0x24] sm:$0xf]
    %v159 = vld [vmem:[#allocation5 + $0x28] sm:$0xf]
    %v160 = vld [vmem:[#allocation5 + $0x2c] sm:$0xf]
    %v161 = vld [vmem:[#allocation5 + $0x30] sm:$0xf]
    %v162 = vld [vmem:[#allocation5 + $0x34] sm:$0xf]
    %v163 = vld [vmem:[#allocation5 + $0x38] sm:$0xf]
    %v164 = vld [vmem:[#allocation5 + $0x3c] sm:$0xf]
    %v165 = vld [vmem:[#allocation5 + $0x40] sm:$0xf]
    %v166 = vld [vmem:[#allocation5 + $0x44] sm:$0xf]
    %v167 = vld [vmem:[#allocation5 + $0x48] sm:$0xf]
    %v168 = vld [vmem:[#allocation5 + $0x4c] sm:$0xf]
    %v169 = vld [vmem:[#allocation5 + $0x50] sm:$0xf]
    %v170 = vld [vmem:[#allocation5 + $0x54] sm:$0xf]
    %v171 = vld [vmem:[#allocation5 + $0x58] sm:$0xf]
    %v172 = vld [vmem:[#allocation5 + $0x5c] sm:$0xf]
    %v173 = vld [vmem:[#allocation5 + $0x60] sm:$0xf]
    %v174 = vld [vmem:[#allocation5 + $0x64] sm:$0xf]
    %v175 = vld [vmem:[#allocation5 + $0x68] sm:$0xf]
    %v176 = vld [vmem:[#allocation5 + $0x6c] sm:$0xf]
    %v177 = vld [vmem:[#allocation5 + $0x70] sm:$0xf]
    %v178 = vld [vmem:[#allocation5 + $0x74] sm:$0xf]
    %v179 = vld [vmem:[#allocation5 + $0x78] sm:$0xf]
    %v180 = vld [vmem:[#allocation5 + $0x7c] sm:$0xf]
    %v181 = vld [vmem:[#allocation5 + $0x80] sm:$0xf]
    %v182 = vld [vmem:[#allocation5 + $0x84] sm:$0xf]
    %v183 = vld [vmem:[#allocation5 + $0x88] sm:$0xf]
    %v184 = vld [vmem:[#allocation5 + $0x8c] sm:$0xf]
    %v185 = vld [vmem:[#allocation5 + $0x90] sm:$0xf]
    %v186 = vld [vmem:[#allocation5 + $0x94] sm:$0xf]
    %v187 = vld [vmem:[#allocation5 + $0x98] sm:$0xf]
    %v188 = vld [vmem:[#allocation5 + $0x9c] sm:$0xf]
    %v189 = vld [vmem:[#allocation5 + $0xa0] sm:$0xf]
    %v190 = vld [vmem:[#allocation5 + $0xa4] sm:$0xf]
    %v191 = vld [vmem:[#allocation5 + $0xa8] sm:$0xf]
    %v192 = vld [vmem:[#allocation5 + $0xac] sm:$0xf]
    %v193 = vld [vmem:[#allocation5 + $0xb0] sm:$0xf]
    %v194 = vld [vmem:[#allocation5 + $0xb4] sm:$0xf]
    %v195 = vld [vmem:[#allocation5 + $0xb8] sm:$0xf]
    %v196 = vld [vmem:[#allocation5 + $0xbc] sm:$0xf]
    %v197 = vld [vmem:[#allocation5 + $0xc0] sm:$0xf]
    %v198 = vld [vmem:[#allocation5 + $0xc4] sm:$0xf]
    %v199 = vld [vmem:[#allocation5 + $0xc8] sm:$0xf]
    %v200 = vld [vmem:[#allocation5 + $0xcc] sm:$0xf]
    %v201 = vld [vmem:[#allocation5 + $0xd0] sm:$0xf]
    %v202 = vld [vmem:[#allocation5 + $0xd4] sm:$0xf]
    %v203 = vld [vmem:[#allocation5 + $0xd8] sm:$0xf]
    %v204 = vld [vmem:[#allocation5 + $0xdc] sm:$0xf]
    %v205 = vld [vmem:[#allocation5 + $0xe0] sm:$0xf]
    %v206 = vld [vmem:[#allocation5 + $0xe4] sm:$0xf]
    %v207 = vld [vmem:[#allocation5 + $0xe8] sm:$0xf]
    %v208 = vld [vmem:[#allocation5 + $0xec] sm:$0xf]
    %v209 = vld [vmem:[#allocation5 + $0xf0] sm:$0xf]
    %v210 = vld [vmem:[#allocation5 + $0xf4] sm:$0xf]
    %v211 = vld [vmem:[#allocation5 + $0xf8] sm:$0xf]
    %v212 = vld [vmem:[#allocation5 + $0xfc] sm:$0xf]
    %v213 = vld [vmem:[#allocation5 + $0x100] sm:$0xf]
    %v214 = vld [vmem:[#allocation5 + $0x104] sm:$0xf]
    %v215 = vld [vmem:[#allocation5 + $0x108] sm:$0xf]
    %v216 = vld [vmem:[#allocation5 + $0x10c] sm:$0xf]
    %v217 = vld [vmem:[#allocation5 + $0x110] sm:$0xf]
    %v218 = vld [vmem:[#allocation5 + $0x114] sm:$0xf]
    %v219 = vld [vmem:[#allocation5 + $0x118] sm:$0xf]
    %v220 = vld [vmem:[#allocation5 + $0x11c] sm:$0xf]
    %v221 = vld [vmem:[#allocation5 + $0x120] sm:$0xf]
    %v222 = vld [vmem:[#allocation5 + $0x124] sm:$0xf]
    %v223 = vld [vmem:[#allocation5 + $0x128] sm:$0xf]
    %v224 = vld [vmem:[#allocation5 + $0x12c] sm:$0xf]
    %v225 = vld [vmem:[#allocation5 + $0x130] sm:$0xf]
    %v226 = vld [vmem:[#allocation5 + $0x134] sm:$0xf]
    %v227 = vld [vmem:[#allocation5 + $0x138] sm:$0xf]
    %v228 = vld [vmem:[#allocation5 + $0x13c] sm:$0xf]
    %v229 = vld [vmem:[#allocation5 + $0x140] sm:$0xf]
    %v230 = vld [vmem:[#allocation5 + $0x144] sm:$0xf]
    %v231 = vld [vmem:[#allocation5 + $0x148] sm:$0xf]
    %v232 = vld [vmem:[#allocation5 + $0x14c] sm:$0xf]
    %v233 = vld [vmem:[#allocation5 + $0x150] sm:$0xf]
    %v234 = vld [vmem:[#allocation5 + $0x154] sm:$0xf]
    %v235 = vld [vmem:[#allocation5 + $0x158] sm:$0xf]
    %v236 = vld [vmem:[#allocation5 + $0x15c] sm:$0xf]
    %v237 = vld [vmem:[#allocation5 + $0x160] sm:$0xf]
    %v238 = vld [vmem:[#allocation5 + $0x164] sm:$0xf]
    %v239 = vld [vmem:[#allocation5 + $0x168] sm:$0xf]
    %v240 = vld [vmem:[#allocation5 + $0x16c] sm:$0xf]
    %v241 = vld [vmem:[#allocation5 + $0x170] sm:$0xf]
    %v242 = vld [vmem:[#allocation5 + $0x174] sm:$0xf]
    %v243 = vld [vmem:[#allocation5 + $0x178] sm:$0xf]
    %v244 = vld [vmem:[#allocation5 + $0x17c] sm:$0xf]
    %v245 = vld [vmem:[#allocation5 + $0x180] sm:$0xf]
    %v246 = vld [vmem:[#allocation5 + $0x184] sm:$0xf]
    %v247 = vld [vmem:[#allocation5 + $0x188] sm:$0xf]
    %v248 = vld [vmem:[#allocation5 + $0x18c] sm:$0xf]
    %v249 = vld [vmem:[#allocation5 + $0x190] sm:$0xf]
    %v250 = vld [vmem:[#allocation5 + $0x194] sm:$0xf]
    %v251 = vld [vmem:[#allocation5 + $0x198] sm:$0xf]
    %v252 = vld [vmem:[#allocation5 + $0x19c] sm:$0xf]
    %v253 = vld [vmem:[#allocation5 + $0x1a0] sm:$0xf]
    %v254 = vld [vmem:[#allocation5 + $0x1a4] sm:$0xf]
    %v255 = vld [vmem:[#allocation5 + $0x1a8] sm:$0xf]
    %v256 = vld [vmem:[#allocation5 + $0x1ac] sm:$0xf]
    %v257 = vld [vmem:[#allocation5 + $0x1b0] sm:$0xf]
    %v258 = vld [vmem:[#allocation5 + $0x1b4] sm:$0xf]
    %v259 = vld [vmem:[#allocation5 + $0x1b8] sm:$0xf]
    %v260 = vld [vmem:[#allocation5 + $0x1bc] sm:$0xf]
    %v261 = vld [vmem:[#allocation5 + $0x1c0] sm:$0xf]
    %v262 = vld [vmem:[#allocation5 + $0x1c4] sm:$0xf]
    %v263 = vld [vmem:[#allocation5 + $0x1c8] sm:$0xf]
    %v264 = vld [vmem:[#allocation5 + $0x1cc] sm:$0xf]
    %v265 = vld [vmem:[#allocation5 + $0x1d0] sm:$0xf]
    %v266 = vld [vmem:[#allocation5 + $0x1d4] sm:$0xf]
    %v267 = vld [vmem:[#allocation5 + $0x1d8] sm:$0xf]
    %v268 = vld [vmem:[#allocation5 + $0x1dc] sm:$0xf]
    %v269 = vld [vmem:[#allocation5 + $0x1e0] sm:$0xf]
    %v270 = vld [vmem:[#allocation5 + $0x1e4] sm:$0xf]
    %v271 = vld [vmem:[#allocation5 + $0x1e8] sm:$0xf]
    %v272 = vld [vmem:[#allocation5 + $0x1ec] sm:$0xf]
    %v273 = vld [vmem:[#allocation5 + $0x1f0] sm:$0xf]
    %v274 = vld [vmem:[#allocation5 + $0x1f4] sm:$0xf]
    %v275 = vld [vmem:[#allocation5 + $0x1f8] sm:$0xf]
    %v276 = vld [vmem:[#allocation5 + $0x1fc] sm:$0xf]
    %v277 = vld [vmem:[%s2] sm:$0x1]
    %v279 = vlaneseq
    %v280 = vshrl.u32 %v279, 7
    %v281 = vsub.s32 0, %v280
    %v282 = vrot.slane %v277, %v281
    %v292 = vunpack.c.l.b16 %v141
    %v293 = vunpack.c.h.b16 %v141
    %v294 = vunpack.c.l.b16 %v142
    %v295 = vunpack.c.h.b16 %v142
    %v296 = vunpack.c.l.b16 %v143
    %v297 = vunpack.c.h.b16 %v143
    %v298 = vunpack.c.l.b16 %v144
    %v299 = vunpack.c.h.b16 %v144
    %v300 = vunpack.c.l.b16 %v145
    %v301 = vunpack.c.h.b16 %v145
    %v302 = vunpack.c.l.b16 %v146
    %v303 = vunpack.c.h.b16 %v146
    %v304 = vunpack.c.l.b16 %v147
    %v305 = vunpack.c.h.b16 %v147
    %v306 = vunpack.c.l.b16 %v148
    %v307 = vunpack.c.h.b16 %v148
    %v308 = vpack.c.b16 %v300, %v292
    %v309 = vpack.c.b16 %v301, %v293
    %v310 = vpack.c.b16 %v302, %v294
    %v311 = vpack.c.b16 %v303, %v295
    %v312 = vpack.c.b16 %v304, %v296
    %v313 = vpack.c.b16 %v305, %v297
    %v314 = vpack.c.b16 %v306, %v298
    %v315 = vpack.c.b16 %v307, %v299
    %v452 = vunpack.c.l.b16 %v149
    %v453 = vunpack.c.l.b16 %v150
    %v454 = vunpack.c.l.b16 %v151
    %v455 = vunpack.c.l.b16 %v152
    %v456 = vunpack.c.l.b16 %v153
    %v457 = vunpack.c.l.b16 %v154
    %v458 = vunpack.c.l.b16 %v155
    %v459 = vunpack.c.l.b16 %v156
    %v460 = vunpack.c.l.b16 %v157
    %v461 = vunpack.c.l.b16 %v158
    %v462 = vunpack.c.l.b16 %v159
    %v463 = vunpack.c.l.b16 %v160
    %v464 = vunpack.c.l.b16 %v161
    %v465 = vunpack.c.l.b16 %v162
    %v466 = vunpack.c.l.b16 %v163
    %v467 = vunpack.c.l.b16 %v164
    %v468 = vunpack.c.l.b16 %v165
    %v469 = vunpack.c.l.b16 %v166
    %v470 = vunpack.c.l.b16 %v167
    %v471 = vunpack.c.l.b16 %v168
    %v472 = vunpack.c.l.b16 %v169
    %v473 = vunpack.c.l.b16 %v170
    %v474 = vunpack.c.l.b16 %v171
    %v475 = vunpack.c.l.b16 %v172
    %v476 = vunpack.c.l.b16 %v173
    %v477 = vunpack.c.l.b16 %v174
    %v478 = vunpack.c.l.b16 %v175
    %v479 = vunpack.c.l.b16 %v176
    %v480 = vunpack.c.l.b16 %v177
    %v481 = vunpack.c.l.b16 %v178
    %v482 = vunpack.c.l.b16 %v179
    %v483 = vunpack.c.l.b16 %v180
    %v484 = vunpack.c.l.b16 %v181
    %v485 = vunpack.c.l.b16 %v182
    %v486 = vunpack.c.l.b16 %v183
    %v487 = vunpack.c.l.b16 %v184
    %v488 = vunpack.c.l.b16 %v185
    %v489 = vunpack.c.l.b16 %v186
    %v490 = vunpack.c.l.b16 %v187
    %v491 = vunpack.c.l.b16 %v188
    %v492 = vunpack.c.l.b16 %v189
    %v493 = vunpack.c.l.b16 %v190
    %v494 = vunpack.c.l.b16 %v191
    %v495 = vunpack.c.l.b16 %v192
    %v496 = vunpack.c.l.b16 %v193
    %v497 = vunpack.c.l.b16 %v194
    %v498 = vunpack.c.l.b16 %v195
    %v499 = vunpack.c.l.b16 %v196
    %v500 = vunpack.c.l.b16 %v197
    %v501 = vunpack.c.l.b16 %v198
    %v502 = vunpack.c.l.b16 %v199
    %v503 = vunpack.c.l.b16 %v200
    %v504 = vunpack.c.l.b16 %v201
    %v505 = vunpack.c.l.b16 %v202
    %v506 = vunpack.c.l.b16 %v203
    %v507 = vunpack.c.l.b16 %v204
    %v508 = vunpack.c.l.b16 %v205
    %v509 = vunpack.c.l.b16 %v206
    %v510 = vunpack.c.l.b16 %v207
    %v511 = vunpack.c.l.b16 %v208
    %v512 = vunpack.c.l.b16 %v209
    %v513 = vunpack.c.l.b16 %v210
    %v514 = vunpack.c.l.b16 %v211
    %v515 = vunpack.c.l.b16 %v212
    %v516 = vunpack.c.l.b16 %v213
    %v517 = vunpack.c.l.b16 %v214
    %v518 = vunpack.c.l.b16 %v215
    %v519 = vunpack.c.l.b16 %v216
    %v520 = vunpack.c.l.b16 %v217
    %v521 = vunpack.c.l.b16 %v218
    %v522 = vunpack.c.l.b16 %v219
    %v523 = vunpack.c.l.b16 %v220
    %v524 = vunpack.c.l.b16 %v221
    %v525 = vunpack.c.l.b16 %v222
    %v526 = vunpack.c.l.b16 %v223
    %v527 = vunpack.c.l.b16 %v224
    %v528 = vunpack.c.l.b16 %v225
    %v529 = vunpack.c.l.b16 %v226
    %v530 = vunpack.c.l.b16 %v227
    %v531 = vunpack.c.l.b16 %v228
    %v532 = vunpack.c.l.b16 %v229
    %v533 = vunpack.c.l.b16 %v230
    %v534 = vunpack.c.l.b16 %v231
    %v535 = vunpack.c.l.b16 %v232
    %v536 = vunpack.c.l.b16 %v233
    %v537 = vunpack.c.l.b16 %v234
    %v538 = vunpack.c.l.b16 %v235
    %v539 = vunpack.c.l.b16 %v236
    %v540 = vunpack.c.l.b16 %v237
    %v541 = vunpack.c.l.b16 %v238
    %v542 = vunpack.c.l.b16 %v239
    %v543 = vunpack.c.l.b16 %v240
    %v544 = vunpack.c.l.b16 %v241
    %v545 = vunpack.c.l.b16 %v242
    %v546 = vunpack.c.l.b16 %v243
    %v547 = vunpack.c.l.b16 %v244
    %v548 = vunpack.c.l.b16 %v245
    %v549 = vunpack.c.l.b16 %v246
    %v550 = vunpack.c.l.b16 %v247
    %v551 = vunpack.c.l.b16 %v248
    %v552 = vunpack.c.l.b16 %v249
    %v553 = vunpack.c.l.b16 %v250
    %v554 = vunpack.c.l.b16 %v251
    %v555 = vunpack.c.l.b16 %v252
    %v556 = vunpack.c.l.b16 %v253
    %v557 = vunpack.c.l.b16 %v254
    %v558 = vunpack.c.l.b16 %v255
    %v559 = vunpack.c.l.b16 %v256
    %v560 = vunpack.c.l.b16 %v257
    %v561 = vunpack.c.l.b16 %v258
    %v562 = vunpack.c.l.b16 %v259
    %v563 = vunpack.c.l.b16 %v260
    %v564 = vunpack.c.l.b16 %v261
    %v565 = vunpack.c.l.b16 %v262
    %v566 = vunpack.c.l.b16 %v263
    %v567 = vunpack.c.l.b16 %v264
    %v568 = vunpack.c.l.b16 %v265
    %v569 = vunpack.c.l.b16 %v266
    %v570 = vunpack.c.l.b16 %v267
    %v571 = vunpack.c.l.b16 %v268
    %v572 = vunpack.c.l.b16 %v269
    %v573 = vunpack.c.l.b16 %v270
    %v574 = vunpack.c.l.b16 %v271
    %v575 = vunpack.c.l.b16 %v272
    %v576 = vunpack.c.l.b16 %v273
    %v577 = vunpack.c.l.b16 %v274
    %v578 = vunpack.c.l.b16 %v275
    %v579 = vunpack.c.l.b16 %v276
    %v580 = vpack.c.b16 %v453, %v452
    %v581 = vpack.c.b16 %v455, %v454
    %v582 = vpack.c.b16 %v457, %v456
    %v583 = vpack.c.b16 %v459, %v458
    %v584 = vpack.c.b16 %v461, %v460
    %v585 = vpack.c.b16 %v463, %v462
    %v586 = vpack.c.b16 %v465, %v464
    %v587 = vpack.c.b16 %v467, %v466
    %v588 = vpack.c.b16 %v469, %v468
    %v589 = vpack.c.b16 %v471, %v470
    %v590 = vpack.c.b16 %v473, %v472
    %v591 = vpack.c.b16 %v475, %v474
    %v592 = vpack.c.b16 %v477, %v476
    %v593 = vpack.c.b16 %v479, %v478
    %v594 = vpack.c.b16 %v481, %v480
    %v595 = vpack.c.b16 %v483, %v482
    %v596 = vpack.c.b16 %v485, %v484
    %v597 = vpack.c.b16 %v487, %v486
    %v598 = vpack.c.b16 %v489, %v488
    %v599 = vpack.c.b16 %v491, %v490
    %v600 = vpack.c.b16 %v493, %v492
    %v601 = vpack.c.b16 %v495, %v494
    %v602 = vpack.c.b16 %v497, %v496
    %v603 = vpack.c.b16 %v499, %v498
    %v604 = vpack.c.b16 %v501, %v500
    %v605 = vpack.c.b16 %v503, %v502
    %v606 = vpack.c.b16 %v505, %v504
    %v607 = vpack.c.b16 %v507, %v506
    %v608 = vpack.c.b16 %v509, %v508
    %v609 = vpack.c.b16 %v511, %v510
    %v610 = vpack.c.b16 %v513, %v512
    %v611 = vpack.c.b16 %v515, %v514
    %v612 = vpack.c.b16 %v517, %v516
    %v613 = vpack.c.b16 %v519, %v518
    %v614 = vpack.c.b16 %v521, %v520
    %v615 = vpack.c.b16 %v523, %v522
    %v616 = vpack.c.b16 %v525, %v524
    %v617 = vpack.c.b16 %v527, %v526
    %v618 = vpack.c.b16 %v529, %v528
    %v619 = vpack.c.b16 %v531, %v530
    %v620 = vpack.c.b16 %v533, %v532
    %v621 = vpack.c.b16 %v535, %v534
    %v622 = vpack.c.b16 %v537, %v536
    %v623 = vpack.c.b16 %v539, %v538
    %v624 = vpack.c.b16 %v541, %v540
    %v625 = vpack.c.b16 %v543, %v542
    %v626 = vpack.c.b16 %v545, %v544
    %v627 = vpack.c.b16 %v547, %v546
    %v628 = vpack.c.b16 %v549, %v548
    %v629 = vpack.c.b16 %v551, %v550
    %v630 = vpack.c.b16 %v553, %v552
    %v631 = vpack.c.b16 %v555, %v554
    %v632 = vpack.c.b16 %v557, %v556
    %v633 = vpack.c.b16 %v559, %v558
    %v634 = vpack.c.b16 %v561, %v560
    %v635 = vpack.c.b16 %v563, %v562
    %v636 = vpack.c.b16 %v565, %v564
    %v637 = vpack.c.b16 %v567, %v566
    %v638 = vpack.c.b16 %v569, %v568
    %v639 = vpack.c.b16 %v571, %v570
    %v640 = vpack.c.b16 %v573, %v572
    %v641 = vpack.c.b16 %v575, %v574
    %v642 = vpack.c.b16 %v577, %v576
    %v643 = vpack.c.b16 %v579, %v578
    %708 = vmatprep.subr.bf16.mxu0 0
    %709 = vmatpush1.bf16.msra.mxu0 %v580
    %710 = vmatprep.subr.bf16.mxu0 0
    %711 = vmatpush1.bf16.msra.mxu0 %v581
    %712 = vmatprep.subr.bf16.mxu0 0
    %713 = vmatpush1.bf16.msra.mxu0 %v582
    %714 = vmatprep.subr.bf16.mxu0 0
    %715 = vmatpush1.bf16.msra.mxu0 %v583
    %716 = vmatprep.subr.bf16.mxu0 0
    %717 = vmatpush1.bf16.msra.mxu0 %v584
    %718 = vmatprep.subr.bf16.mxu0 0
    %719 = vmatpush1.bf16.msra.mxu0 %v585
    %720 = vmatprep.subr.bf16.mxu0 0
    %721 = vmatpush1.bf16.msra.mxu0 %v586
    %722 = vmatprep.subr.bf16.mxu0 0
    %723 = vmatpush1.bf16.msra.mxu0 %v587
    %724 = vmatprep.subr.bf16.mxu0 0
    %725 = vmatpush1.bf16.msra.mxu0 %v588
    %726 = vmatprep.subr.bf16.mxu0 0
    %727 = vmatpush1.bf16.msra.mxu0 %v589
    %728 = vmatprep.subr.bf16.mxu0 0
    %729 = vmatpush1.bf16.msra.mxu0 %v590
    %730 = vmatprep.subr.bf16.mxu0 0
    %731 = vmatpush1.bf16.msra.mxu0 %v591
    %732 = vmatprep.subr.bf16.mxu0 0
    %733 = vmatpush1.bf16.msra.mxu0 %v592
    %734 = vmatprep.subr.bf16.mxu0 0
    %735 = vmatpush1.bf16.msra.mxu0 %v593
    %736 = vmatprep.subr.bf16.mxu0 0
    %737 = vmatpush1.bf16.msra.mxu0 %v594
    %738 = vmatprep.subr.bf16.mxu0 0
    %739 = vmatpush1.bf16.msra.mxu0 %v595
    %740 = vmatprep.mubr.bf16.mxu0 %v309
    %741 = vmatmul.mubr.bf16.gmra.mrb[0].mxu0 %v308
    %v742 = vpop.f32.mrb[0].mxu0
    %v743 = vadd.f32 %v282, %v742
    %v744 = vpop.f32.mrb[0].mxu0
    %v745 = vpop.f32.mrb[0].mxu0
    %v746 = vadd.f32 %v282, %v745
    %v747 = vpop.f32.mrb[0].mxu0
    %748 = vdwg.mxu0
    %749 = vmatprep.subr.bf16.mxu0 0
    %750 = vmatpush1.bf16.msra.mxu0 %v596
    %751 = vmatprep.subr.bf16.mxu0 0
    %752 = vmatpush1.bf16.msra.mxu0 %v597
    %753 = vmatprep.subr.bf16.mxu0 0
    %754 = vmatpush1.bf16.msra.mxu0 %v598
    %755 = vmatprep.subr.bf16.mxu0 0
    %756 = vmatpush1.bf16.msra.mxu0 %v599
    %757 = vmatprep.subr.bf16.mxu0 0
    %758 = vmatpush1.bf16.msra.mxu0 %v600
    %759 = vmatprep.subr.bf16.mxu0 0
    %760 = vmatpush1.bf16.msra.mxu0 %v601
    %761 = vmatprep.subr.bf16.mxu0 0
    %762 = vmatpush1.bf16.msra.mxu0 %v602
    %763 = vmatprep.subr.bf16.mxu0 0
    %764 = vmatpush1.bf16.msra.mxu0 %v603
    %765 = vmatprep.subr.bf16.mxu0 0
    %766 = vmatpush1.bf16.msra.mxu0 %v604
    %767 = vmatprep.subr.bf16.mxu0 0
    %768 = vmatpush1.bf16.msra.mxu0 %v605
    %769 = vmatprep.subr.bf16.mxu0 0
    %770 = vmatpush1.bf16.msra.mxu0 %v606
    %771 = vmatprep.subr.bf16.mxu0 0
    %772 = vmatpush1.bf16.msra.mxu0 %v607
    %773 = vmatprep.subr.bf16.mxu0 0
    %774 = vmatpush1.bf16.msra.mxu0 %v608
    %775 = vmatprep.subr.bf16.mxu0 0
    %776 = vmatpush1.bf16.msra.mxu0 %v609
    %777 = vmatprep.subr.bf16.mxu0 0
    %778 = vmatpush1.bf16.msra.mxu0 %v610
    %779 = vmatprep.subr.bf16.mxu0 0
    %780 = vmatpush1.bf16.msra.mxu0 %v611
    %781 = vmatprep.mubr.bf16.mxu0 %v311
    %782 = vmatmul.mubr.bf16.gmra.mrb[0].mxu0 %v310
    %v783 = vpop.f32.mrb[0].mxu0
    %v784 = vadd.f32 %v743, %v783
    %v785 = vpop.f32.mrb[0].mxu0
    %v786 = vpop.f32.mrb[0].mxu0
    %v787 = vadd.f32 %v746, %v786
    %v788 = vpop.f32.mrb[0].mxu0
    %789 = vdwg.mxu0
    %790 = vmatprep.subr.bf16.mxu0 0
    %791 = vmatpush1.bf16.msra.mxu0 %v612
    %792 = vmatprep.subr.bf16.mxu0 0
    %793 = vmatpush1.bf16.msra.mxu0 %v613
    %794 = vmatprep.subr.bf16.mxu0 0
    %795 = vmatpush1.bf16.msra.mxu0 %v614
    %796 = vmatprep.subr.bf16.mxu0 0
    %797 = vmatpush1.bf16.msra.mxu0 %v615
    %798 = vmatprep.subr.bf16.mxu0 0
    %799 = vmatpush1.bf16.msra.mxu0 %v616
    %800 = vmatprep.subr.bf16.mxu0 0
    %801 = vmatpush1.bf16.msra.mxu0 %v617
    %802 = vmatprep.subr.bf16.mxu0 0
    %803 = vmatpush1.bf16.msra.mxu0 %v618
    %804 = vmatprep.subr.bf16.mxu0 0
    %805 = vmatpush1.bf16.msra.mxu0 %v619
    %806 = vmatprep.subr.bf16.mxu0 0
    %807 = vmatpush1.bf16.msra.mxu0 %v620
    %808 = vmatprep.subr.bf16.mxu0 0
    %809 = vmatpush1.bf16.msra.mxu0 %v621
    %810 = vmatprep.subr.bf16.mxu0 0
    %811 = vmatpush1.bf16.msra.mxu0 %v622
    %812 = vmatprep.subr.bf16.mxu0 0
    %813 = vmatpush1.bf16.msra.mxu0 %v623
    %814 = vmatprep.subr.bf16.mxu0 0
    %815 = vmatpush1.bf16.msra.mxu0 %v624
    %816 = vmatprep.subr.bf16.mxu0 0
    %817 = vmatpush1.bf16.msra.mxu0 %v625
    %818 = vmatprep.subr.bf16.mxu0 0
    %819 = vmatpush1.bf16.msra.mxu0 %v626
    %820 = vmatprep.subr.bf16.mxu0 0
    %821 = vmatpush1.bf16.msra.mxu0 %v627
    %822 = vmatprep.mubr.bf16.mxu0 %v313
    %823 = vmatmul.mubr.bf16.gmra.mrb[0].mxu0 %v312
    %v824 = vpop.f32.mrb[0].mxu0
    %v825 = vadd.f32 %v784, %v824
    %v826 = vpop.f32.mrb[0].mxu0
    %v827 = vpop.f32.mrb[0].mxu0
    %v828 = vadd.f32 %v787, %v827
    %v829 = vpop.f32.mrb[0].mxu0
    %830 = vdwg.mxu0
    %831 = vmatprep.subr.bf16.mxu0 0
    %832 = vmatpush1.bf16.msra.mxu0 %v628
    %833 = vmatprep.subr.bf16.mxu0 0
    %834 = vmatpush1.bf16.msra.mxu0 %v629
    %835 = vmatprep.subr.bf16.mxu0 0
    %836 = vmatpush1.bf16.msra.mxu0 %v630
    %837 = vmatprep.subr.bf16.mxu0 0
    %838 = vmatpush1.bf16.msra.mxu0 %v631
    %839 = vmatprep.subr.bf16.mxu0 0
    %840 = vmatpush1.bf16.msra.mxu0 %v632
    %841 = vmatprep.subr.bf16.mxu0 0
    %842 = vmatpush1.bf16.msra.mxu0 %v633
    %843 = vmatprep.subr.bf16.mxu0 0
    %844 = vmatpush1.bf16.msra.mxu0 %v634
    %845 = vmatprep.subr.bf16.mxu0 0
    %846 = vmatpush1.bf16.msra.mxu0 %v635
    %847 = vmatprep.subr.bf16.mxu0 0
    %848 = vmatpush1.bf16.msra.mxu0 %v636
    %849 = vmatprep.subr.bf16.mxu0 0
    %850 = vmatpush1.bf16.msra.mxu0 %v637
    %851 = vmatprep.subr.bf16.mxu0 0
    %852 = vmatpush1.bf16.msra.mxu0 %v638
    %853 = vmatprep.subr.bf16.mxu0 0
    %854 = vmatpush1.bf16.msra.mxu0 %v639
    %855 = vmatprep.subr.bf16.mxu0 0
    %856 = vmatpush1.bf16.msra.mxu0 %v640
    %857 = vmatprep.subr.bf16.mxu0 0
    %858 = vmatpush1.bf16.msra.mxu0 %v641
    %859 = vmatprep.subr.bf16.mxu0 0
    %860 = vmatpush1.bf16.msra.mxu0 %v642
    %861 = vmatprep.subr.bf16.mxu0 0
    %862 = vmatpush1.bf16.msra.mxu0 %v643
    %863 = vmatprep.mubr.bf16.mxu0 %v315
    %864 = vmatmul.mubr.bf16.gmra.mrb[0].mxu0 %v314
    %v865 = vpop.f32.mrb[0].mxu0
    %v866 = vadd.f32 %v825, %v865
    %v867 = vpop.f32.mrb[0].mxu0
    %v868 = vpop.f32.mrb[0].mxu0
    %v869 = vadd.f32 %v828, %v868
    %v870 = vpop.f32.mrb[0].mxu0
    %871 = vdwg.mxu0
    %v872 = vmax.f32 %v866, 0.0
    %v873 = vmax.f32 %v869, 0.0
    %v874 = vpack.c.bf16 %v873, %v872
    %v875 = vld [vmem:[#allocation7] sm:$0xf]
    %v876 = vld [vmem:[#allocation7 + $0x4] sm:$0xf]
    %v877 = vld [vmem:[#allocation7 + $0x8] sm:$0xf]
    %v878 = vld [vmem:[#allocation7 + $0xc] sm:$0xf]
    %v879 = vld [vmem:[#allocation7 + $0x10] sm:$0xf]
    %v880 = vld [vmem:[#allocation7 + $0x14] sm:$0xf]
    %v881 = vld [vmem:[#allocation7 + $0x18] sm:$0xf]
    %v882 = vld [vmem:[#allocation7 + $0x1c] sm:$0xf]
    %v883 = vld [vmem:[#allocation7 + $0x20] sm:$0xf]
    %v884 = vld [vmem:[#allocation7 + $0x24] sm:$0xf]
    %v885 = vld [vmem:[#allocation7 + $0x28] sm:$0xf]
    %v886 = vld [vmem:[#allocation7 + $0x2c] sm:$0xf]
    %v887 = vld [vmem:[#allocation7 + $0x30] sm:$0xf]
    %v888 = vld [vmem:[#allocation7 + $0x34] sm:$0xf]
    %v889 = vld [vmem:[#allocation7 + $0x38] sm:$0xf]
    %v890 = vld [vmem:[#allocation7 + $0x3c] sm:$0xf]
    %v891 = vld [vmem:[%s4] sm:$0x1]
    %v893 = vlaneseq
    %v894 = vshrl.u32 %v893, 7
    %v895 = vsub.s32 0, %v894
    %v896 = vrot.slane %v891, %v895
    %v914 = vunpack.c.l.b16 %v875
    %v915 = vunpack.c.l.b16 %v876
    %v916 = vunpack.c.l.b16 %v877
    %v917 = vunpack.c.l.b16 %v878
    %v918 = vunpack.c.l.b16 %v879
    %v919 = vunpack.c.l.b16 %v880
    %v920 = vunpack.c.l.b16 %v881
    %v921 = vunpack.c.l.b16 %v882
    %v922 = vunpack.c.l.b16 %v883
    %v923 = vunpack.c.l.b16 %v884
    %v924 = vunpack.c.l.b16 %v885
    %v925 = vunpack.c.l.b16 %v886
    %v926 = vunpack.c.l.b16 %v887
    %v927 = vunpack.c.l.b16 %v888
    %v928 = vunpack.c.l.b16 %v889
    %v929 = vunpack.c.l.b16 %v890
    %v930 = vpack.c.b16 %v915, %v914
    %v931 = vpack.c.b16 %v917, %v916
    %v932 = vpack.c.b16 %v919, %v918
    %v933 = vpack.c.b16 %v921, %v920
    %v934 = vpack.c.b16 %v923, %v922
    %v935 = vpack.c.b16 %v925, %v924
    %v936 = vpack.c.b16 %v927, %v926
    %v937 = vpack.c.b16 %v929, %v928
    %946 = vmatprep.subr.bf16.mxu0 0
    %947 = vmatpush1.bf16.msra.mxu0 %v930
    %948 = vmatprep.subr.bf16.mxu0 0
    %949 = vmatpush1.bf16.msra.mxu0 %v931
    %950 = vmatprep.subr.bf16.mxu0 0
    %951 = vmatpush1.bf16.msra.mxu0 %v932
    %952 = vmatprep.subr.bf16.mxu0 0
    %953 = vmatpush1.bf16.msra.mxu0 %v933
    %954 = vmatprep.subr.bf16.mxu0 0
    %955 = vmatpush1.bf16.msra.mxu0 %v934
    %956 = vmatprep.subr.bf16.mxu0 0
    %957 = vmatpush1.bf16.msra.mxu0 %v935
    %958 = vmatprep.subr.bf16.mxu0 0
    %959 = vmatpush1.bf16.msra.mxu0 %v936
    %960 = vmatprep.subr.bf16.mxu0 0
    %961 = vmatpush1.bf16.msra.mxu0 %v937
    %962 = vmatprep.subr.bf16.mxu0 0
    %963 = vmatpush1.bf16.msra.mxu0 0
    %964 = vmatprep.subr.bf16.mxu0 0
    %965 = vmatpush1.bf16.msra.mxu0 0
    %966 = vmatprep.subr.bf16.mxu0 0
    %967 = vmatpush1.bf16.msra.mxu0 0
    %968 = vmatprep.subr.bf16.mxu0 0
    %969 = vmatpush1.bf16.msra.mxu0 0
    %970 = vmatprep.subr.bf16.mxu0 0
    %971 = vmatpush1.bf16.msra.mxu0 0
    %972 = vmatprep.subr.bf16.mxu0 0
    %973 = vmatpush1.bf16.msra.mxu0 0
    %974 = vmatprep.subr.bf16.mxu0 0
    %975 = vmatpush1.bf16.msra.mxu0 0
    %976 = vmatprep.subr.bf16.mxu0 0
    %977 = vmatpush1.bf16.msra.mxu0 0
    %978 = vmatprep.mubr.bf16.mxu0 0
    %979 = vmatmul.mubr.bf16.gmra.mrb[0].mxu0 %v874
    %v980 = vpop.f32.mrb[0].mxu0
    %v981 = vadd.f32 %v896, %v980
    %v982 = vpop.f32.mrb[0].mxu0
    %v983 = vpop.f32.mrb[0].mxu0
    %v984 = vadd.f32 %v896, %v983
    %v985 = vpop.f32.mrb[0].mxu0
    %986 = vdwg.mxu0
    %v987 = vmax.f32 %v981, 0.0
    %v988 = vmax.f32 %v984, 0.0
    %v989 = vpack.c.bf16 %v988, %v987
    %v990 = vld [vmem:[#allocation8] sm:$0xf]
    %v991 = vld [vmem:[#allocation8 + $0x4] sm:$0xf]
    %v992 = vld [vmem:[#allocation8 + $0x8] sm:$0xf]
    %v993 = vld [vmem:[#allocation8 + $0xc] sm:$0xf]
    %v994 = vld [vmem:[#allocation8 + $0x10] sm:$0xf]
    %v995 = vld [vmem:[#allocation8 + $0x14] sm:$0xf]
    %v996 = vld [vmem:[#allocation8 + $0x18] sm:$0xf]
    %v997 = vld [vmem:[#allocation8 + $0x1c] sm:$0xf]
    %v998 = vld [vmem:[#allocation8 + $0x20] sm:$0xf]
    %v999 = vld [vmem:[#allocation8 + $0x24] sm:$0xf]
    %v1000 = vld [vmem:[#allocation8 + $0x28] sm:$0xf]
    %v1001 = vld [vmem:[#allocation8 + $0x2c] sm:$0xf]
    %v1002 = vld [vmem:[#allocation8 + $0x30] sm:$0xf]
    %v1003 = vld [vmem:[#allocation8 + $0x34] sm:$0xf]
    %v1004 = vld [vmem:[#allocation8 + $0x38] sm:$0xf]
    %v1005 = vld [vmem:[#allocation8 + $0x3c] sm:$0xf]
    %v1006 = vld [vmem:[%s6] sm:$0x1]
    %v1008 = vlaneseq
    %v1009 = vshrl.u32 %v1008, 7
    %v1010 = vsub.s32 0, %v1009
    %v1011 = vrot.slane %v1006, %v1010
    %v1029 = vunpack.c.l.b16 %v990
    %v1030 = vunpack.c.l.b16 %v991
    %v1031 = vunpack.c.l.b16 %v992
    %v1032 = vunpack.c.l.b16 %v993
    %v1033 = vunpack.c.l.b16 %v994
    %v1034 = vunpack.c.l.b16 %v995
    %v1035 = vunpack.c.l.b16 %v996
    %v1036 = vunpack.c.l.b16 %v997
    %v1037 = vunpack.c.l.b16 %v998
    %v1038 = vunpack.c.l.b16 %v999
    %v1039 = vunpack.c.l.b16 %v1000
    %v1040 = vunpack.c.l.b16 %v1001
    %v1041 = vunpack.c.l.b16 %v1002
    %v1042 = vunpack.c.l.b16 %v1003
    %v1043 = vunpack.c.l.b16 %v1004
    %v1044 = vunpack.c.l.b16 %v1005
    %v1045 = vpack.c.b16 %v1030, %v1029
    %v1046 = vpack.c.b16 %v1032, %v1031
    %v1047 = vpack.c.b16 %v1034, %v1033
    %v1048 = vpack.c.b16 %v1036, %v1035
    %v1049 = vpack.c.b16 %v1038, %v1037
    %v1050 = vpack.c.b16 %v1040, %v1039
    %v1051 = vpack.c.b16 %v1042, %v1041
    %v1052 = vpack.c.b16 %v1044, %v1043
    %1061 = vmatprep.subr.bf16.mxu0 0
    %1062 = vmatpush1.bf16.msra.mxu0 %v1045
    %1063 = vmatprep.subr.bf16.mxu0 0
    %1064 = vmatpush1.bf16.msra.mxu0 %v1046
    %1065 = vmatprep.subr.bf16.mxu0 0
    %1066 = vmatpush1.bf16.msra.mxu0 %v1047
    %1067 = vmatprep.subr.bf16.mxu0 0
    %1068 = vmatpush1.bf16.msra.mxu0 %v1048
    %1069 = vmatprep.subr.bf16.mxu0 0
    %1070 = vmatpush1.bf16.msra.mxu0 %v1049
    %1071 = vmatprep.subr.bf16.mxu0 0
    %1072 = vmatpush1.bf16.msra.mxu0 %v1050
    %1073 = vmatprep.subr.bf16.mxu0 0
    %1074 = vmatpush1.bf16.msra.mxu0 %v1051
    %1075 = vmatprep.subr.bf16.mxu0 0
    %1076 = vmatpush1.bf16.msra.mxu0 %v1052
    %1077 = vmatprep.subr.bf16.mxu0 0
    %1078 = vmatpush1.bf16.msra.mxu0 0
    %1079 = vmatprep.subr.bf16.mxu0 0
    %1080 = vmatpush1.bf16.msra.mxu0 0
    %1081 = vmatprep.subr.bf16.mxu0 0
    %1082 = vmatpush1.bf16.msra.mxu0 0
    %1083 = vmatprep.subr.bf16.mxu0 0
    %1084 = vmatpush1.bf16.msra.mxu0 0
    %1085 = vmatprep.subr.bf16.mxu0 0
    %1086 = vmatpush1.bf16.msra.mxu0 0
    %1087 = vmatprep.subr.bf16.mxu0 0
    %1088 = vmatpush1.bf16.msra.mxu0 0
    %1089 = vmatprep.subr.bf16.mxu0 0
    %1090 = vmatpush1.bf16.msra.mxu0 0
    %1091 = vmatprep.subr.bf16.mxu0 0
    %1092 = vmatpush1.bf16.msra.mxu0 0
    %1093 = vmatprep.mubr.bf16.mxu0 0
    %1094 = vmatmul.mubr.bf16.gmra.mrb[0].mxu0 %v989
    %v1095 = vpop.f32.mrb[0].mxu0
    %v1096 = vadd.f32 %v1011, %v1095
    %v1097 = vpop.f32.mrb[0].mxu0
    %v1098 = vpop.f32.mrb[0].mxu0
    %v1099 = vadd.f32 %v1011, %v1098
    %v1100 = vpop.f32.mrb[0].mxu0
    %1101 = vdwg.mxu0
    %v1102 = vmax.f32 %v1096, 0.0
    %v1103 = vmax.f32 %v1099, 0.0
    %v1104 = vpack.c.bf16 %v1103, %v1102
    %v1105 = vld [vmem:[#allocation10] sm:$0xf]
    %v1106 = vld [vmem:[#allocation10 + $0x4] sm:$0xf]
    %v1107 = vld [vmem:[#allocation10 + $0x8] sm:$0xf]
    %v1108 = vld [vmem:[#allocation10 + $0xc] sm:$0xf]
    %v1109 = vld [vmem:[#allocation10 + $0x10] sm:$0xf]
    %v1110 = vld [vmem:[#allocation10 + $0x14] sm:$0xf]
    %v1111 = vld [vmem:[#allocation10 + $0x18] sm:$0xf]
    %v1112 = vld [vmem:[#allocation10 + $0x1c] sm:$0xf]
    %v1113 = vld [vmem:[#allocation10 + $0x20] sm:$0xf]
    %v1114 = vld [vmem:[#allocation10 + $0x24] sm:$0xf]
    %v1115 = vld [vmem:[#allocation10 + $0x28] sm:$0xf]
    %v1116 = vld [vmem:[#allocation10 + $0x2c] sm:$0xf]
    %v1117 = vld [vmem:[#allocation10 + $0x30] sm:$0xf]
    %v1118 = vld [vmem:[#allocation10 + $0x34] sm:$0xf]
    %v1119 = vld [vmem:[#allocation10 + $0x38] sm:$0xf]
    %v1120 = vld [vmem:[#allocation10 + $0x3c] sm:$0xf]
    %v1121 = vld [vmem:[%s8] sm:$0x1]
    %v1123 = vlaneseq
    %v1124 = vshrl.u32 %v1123, 7
    %v1125 = vsub.s32 0, %v1124
    %v1126 = vrot.slane %v1121, %v1125
    %v1144 = vunpack.c.l.b16 %v1105
    %v1145 = vunpack.c.l.b16 %v1106
    %v1146 = vunpack.c.l.b16 %v1107
    %v1147 = vunpack.c.l.b16 %v1108
    %v1148 = vunpack.c.l.b16 %v1109
    %v1149 = vunpack.c.l.b16 %v1110
    %v1150 = vunpack.c.l.b16 %v1111
    %v1151 = vunpack.c.l.b16 %v1112
    %v1152 = vunpack.c.l.b16 %v1113
    %v1153 = vunpack.c.l.b16 %v1114
    %v1154 = vunpack.c.l.b16 %v1115
    %v1155 = vunpack.c.l.b16 %v1116
    %v1156 = vunpack.c.l.b16 %v1117
    %v1157 = vunpack.c.l.b16 %v1118
    %v1158 = vunpack.c.l.b16 %v1119
    %v1159 = vunpack.c.l.b16 %v1120
    %v1160 = vpack.c.b16 %v1145, %v1144
    %v1161 = vpack.c.b16 %v1147, %v1146
    %v1162 = vpack.c.b16 %v1149, %v1148
    %v1163 = vpack.c.b16 %v1151, %v1150
    %v1164 = vpack.c.b16 %v1153, %v1152
    %v1165 = vpack.c.b16 %v1155, %v1154
    %v1166 = vpack.c.b16 %v1157, %v1156
    %v1167 = vpack.c.b16 %v1159, %v1158
    %1176 = vmatprep.subr.bf16.mxu0 0
    %1177 = vmatpush1.bf16.msra.mxu0 %v1160
    %1178 = vmatprep.subr.bf16.mxu0 0
    %1179 = vmatpush1.bf16.msra.mxu0 %v1161
    %1180 = vmatprep.subr.bf16.mxu0 0
    %1181 = vmatpush1.bf16.msra.mxu0 %v1162
    %1182 = vmatprep.subr.bf16.mxu0 0
    %1183 = vmatpush1.bf16.msra.mxu0 %v1163
    %1184 = vmatprep.subr.bf16.mxu0 0
    %1185 = vmatpush1.bf16.msra.mxu0 %v1164
    %1186 = vmatprep.subr.bf16.mxu0 0
    %1187 = vmatpush1.bf16.msra.mxu0 %v1165
    %1188 = vmatprep.subr.bf16.mxu0 0
    %1189 = vmatpush1.bf16.msra.mxu0 %v1166
    %1190 = vmatprep.subr.bf16.mxu0 0
    %1191 = vmatpush1.bf16.msra.mxu0 %v1167
    %1192 = vmatprep.subr.bf16.mxu0 0
    %1193 = vmatpush1.bf16.msra.mxu0 0
    %1194 = vmatprep.subr.bf16.mxu0 0
    %1195 = vmatpush1.bf16.msra.mxu0 0
    %1196 = vmatprep.subr.bf16.mxu0 0
    %1197 = vmatpush1.bf16.msra.mxu0 0
    %1198 = vmatprep.subr.bf16.mxu0 0
    %1199 = vmatpush1.bf16.msra.mxu0 0
    %1200 = vmatprep.subr.bf16.mxu0 0
    %1201 = vmatpush1.bf16.msra.mxu0 0
    %1202 = vmatprep.subr.bf16.mxu0 0
    %1203 = vmatpush1.bf16.msra.mxu0 0
    %1204 = vmatprep.subr.bf16.mxu0 0
    %1205 = vmatpush1.bf16.msra.mxu0 0
    %1206 = vmatprep.subr.bf16.mxu0 0
    %1207 = vmatpush1.bf16.msra.mxu0 0
    %1208 = vmatprep.mubr.bf16.mxu0 0
    %1209 = vmatmul.mubr.bf16.gmra.mrb[0].mxu0 %v1104
    %v1210 = vpop.f32.mrb[0].mxu0
    %v1211 = vadd.f32 %v1126, %v1210
    %v1212 = vpop.f32.mrb[0].mxu0
    %v1213 = vpop.f32.mrb[0].mxu0
    %v1214 = vadd.f32 %v1126, %v1213
    %v1215 = vpop.f32.mrb[0].mxu0
    %1216 = vdwg.mxu0
    %v1217 = vmax.f32 %v1211, 0.0
    %v1218 = vmax.f32 %v1214, 0.0
    %v1219 = vpack.c.bf16 %v1218, %v1217
    %v1220 = vld [vmem:[#allocation11] sm:$0xf]
    %v1221 = vld [vmem:[#allocation11 + $0x4] sm:$0xf]
    %v1222 = vld [vmem:[#allocation11 + $0x8] sm:$0xf]
    %v1223 = vld [vmem:[#allocation11 + $0xc] sm:$0xf]
    %v1224 = vld [vmem:[#allocation11 + $0x10] sm:$0xf]
    %v1225 = vld [vmem:[#allocation11 + $0x14] sm:$0xf]
    %v1226 = vld [vmem:[#allocation11 + $0x18] sm:$0xf]
    %v1227 = vld [vmem:[#allocation11 + $0x1c] sm:$0xf]
    %v1228 = vld [vmem:[#allocation11 + $0x20] sm:$0xf]
    %v1229 = vld [vmem:[#allocation11 + $0x24] sm:$0xf]
    %v1230 = vld [vmem:[#allocation11 + $0x28] sm:$0xf]
    %v1231 = vld [vmem:[#allocation11 + $0x2c] sm:$0xf]
    %v1232 = vld [vmem:[#allocation11 + $0x30] sm:$0xf]
    %v1233 = vld [vmem:[#allocation11 + $0x34] sm:$0xf]
    %v1234 = vld [vmem:[#allocation11 + $0x38] sm:$0xf]
    %v1235 = vld [vmem:[#allocation11 + $0x3c] sm:$0xf]
    %v1236 = vld [vmem:[%s10] sm:$0x1]
    %v1238 = vlaneseq
    %v1239 = vshrl.u32 %v1238, 7
    %v1240 = vsub.s32 0, %v1239
    %v1241 = vrot.slane %v1236, %v1240
    %v1259 = vunpack.c.l.b16 %v1220
    %v1260 = vunpack.c.l.b16 %v1221
    %v1261 = vunpack.c.l.b16 %v1222
    %v1262 = vunpack.c.l.b16 %v1223
    %v1263 = vunpack.c.l.b16 %v1224
    %v1264 = vunpack.c.l.b16 %v1225
    %v1265 = vunpack.c.l.b16 %v1226
    %v1266 = vunpack.c.l.b16 %v1227
    %v1267 = vunpack.c.l.b16 %v1228
    %v1268 = vunpack.c.l.b16 %v1229
    %v1269 = vunpack.c.l.b16 %v1230
    %v1270 = vunpack.c.l.b16 %v1231
    %v1271 = vunpack.c.l.b16 %v1232
    %v1272 = vunpack.c.l.b16 %v1233
    %v1273 = vunpack.c.l.b16 %v1234
    %v1274 = vunpack.c.l.b16 %v1235
    %v1275 = vpack.c.b16 %v1260, %v1259
    %v1276 = vpack.c.b16 %v1262, %v1261
    %v1277 = vpack.c.b16 %v1264, %v1263
    %v1278 = vpack.c.b16 %v1266, %v1265
    %v1279 = vpack.c.b16 %v1268, %v1267
    %v1280 = vpack.c.b16 %v1270, %v1269
    %v1281 = vpack.c.b16 %v1272, %v1271
    %v1282 = vpack.c.b16 %v1274, %v1273
    %1291 = vmatprep.subr.bf16.mxu0 0
    %1292 = vmatpush1.bf16.msra.mxu0 %v1275
    %1293 = vmatprep.subr.bf16.mxu0 0
    %1294 = vmatpush1.bf16.msra.mxu0 %v1276
    %1295 = vmatprep.subr.bf16.mxu0 0
    %1296 = vmatpush1.bf16.msra.mxu0 %v1277
    %1297 = vmatprep.subr.bf16.mxu0 0
    %1298 = vmatpush1.bf16.msra.mxu0 %v1278
    %1299 = vmatprep.subr.bf16.mxu0 0
    %1300 = vmatpush1.bf16.msra.mxu0 %v1279
    %1301 = vmatprep.subr.bf16.mxu0 0
    %1302 = vmatpush1.bf16.msra.mxu0 %v1280
    %1303 = vmatprep.subr.bf16.mxu0 0
    %1304 = vmatpush1.bf16.msra.mxu0 %v1281
    %1305 = vmatprep.subr.bf16.mxu0 0
    %1306 = vmatpush1.bf16.msra.mxu0 %v1282
    %1307 = vmatprep.subr.bf16.mxu0 0
    %1308 = vmatpush1.bf16.msra.mxu0 0
    %1309 = vmatprep.subr.bf16.mxu0 0
    %1310 = vmatpush1.bf16.msra.mxu0 0
    %1311 = vmatprep.subr.bf16.mxu0 0
    %1312 = vmatpush1.bf16.msra.mxu0 0
    %1313 = vmatprep.subr.bf16.mxu0 0
    %1314 = vmatpush1.bf16.msra.mxu0 0
    %1315 = vmatprep.subr.bf16.mxu0 0
    %1316 = vmatpush1.bf16.msra.mxu0 0
    %1317 = vmatprep.subr.bf16.mxu0 0
    %1318 = vmatpush1.bf16.msra.mxu0 0
    %1319 = vmatprep.subr.bf16.mxu0 0
    %1320 = vmatpush1.bf16.msra.mxu0 0
    %1321 = vmatprep.subr.bf16.mxu0 0
    %1322 = vmatpush1.bf16.msra.mxu0 0
    %1323 = vmatprep.mubr.bf16.mxu0 0
    %1324 = vmatmul.mubr.bf16.gmra.mrb[0].mxu0 %v1219
    %v1325 = vpop.f32.mrb[0].mxu0
    %v1326 = vadd.f32 %v1241, %v1325
    %v1327 = vpop.f32.mrb[0].mxu0
    %v1328 = vpop.f32.mrb[0].mxu0
    %v1329 = vadd.f32 %v1241, %v1328
    %v1330 = vpop.f32.mrb[0].mxu0
    %1331 = vdwg.mxu0
    %v1332 = vmax.f32 %v1326, 0.0
    %v1333 = vmax.f32 %v1329, 0.0
    %v1334 = vpack.c.bf16 %v1333, %v1332
    %v1335 = vld [vmem:[#allocation13] sm:$0xff]
    %v1336 = vld [vmem:[#allocation13 + $0x8] sm:$0xff]
    %v1337 = vld [vmem:[#allocation13 + $0x10] sm:$0xff]
    %v1338 = vld [vmem:[#allocation13 + $0x18] sm:$0xff]
    %v1339 = vld [vmem:[#allocation13 + $0x20] sm:$0xff]
    %v1340 = vld [vmem:[#allocation13 + $0x28] sm:$0xff]
    %v1341 = vld [vmem:[#allocation13 + $0x30] sm:$0xff]
    %v1342 = vld [vmem:[#allocation13 + $0x38] sm:$0xff]
    %v1343 = vld [vmem:[#allocation13 + $0x40] sm:$0xff]
    %v1344 = vld [vmem:[#allocation13 + $0x48] sm:$0xff]
    %v1345 = vld [vmem:[#allocation13 + $0x50] sm:$0xff]
    %v1346 = vld [vmem:[#allocation13 + $0x58] sm:$0xff]
    %v1347 = vld [vmem:[#allocation13 + $0x60] sm:$0xff]
    %v1348 = vld [vmem:[#allocation13 + $0x68] sm:$0xff]
    %v1349 = vld [vmem:[#allocation13 + $0x70] sm:$0xff]
    %v1350 = vld [vmem:[#allocation13 + $0x78] sm:$0xff]
    %v1351 = vld [vmem:[#allocation13 + $0x80] sm:$0xff]
    %v1352 = vld [vmem:[#allocation13 + $0x88] sm:$0xff]
    %v1353 = vld [vmem:[#allocation13 + $0x90] sm:$0xff]
    %v1354 = vld [vmem:[#allocation13 + $0x98] sm:$0xff]
    %v1355 = vld [vmem:[#allocation13 + $0xa0] sm:$0xff]
    %v1356 = vld [vmem:[#allocation13 + $0xa8] sm:$0xff]
    %v1357 = vld [vmem:[#allocation13 + $0xb0] sm:$0xff]
    %v1358 = vld [vmem:[#allocation13 + $0xb8] sm:$0xff]
    %v1359 = vld [vmem:[#allocation13 + $0xc0] sm:$0xff]
    %v1360 = vld [vmem:[#allocation13 + $0xc8] sm:$0xff]
    %v1361 = vld [vmem:[#allocation13 + $0xd0] sm:$0xff]
    %v1362 = vld [vmem:[#allocation13 + $0xd8] sm:$0xff]
    %v1363 = vld [vmem:[#allocation13 + $0xe0] sm:$0xff]
    %v1364 = vld [vmem:[#allocation13 + $0xe8] sm:$0xff]
    %v1365 = vld [vmem:[#allocation13 + $0xf0] sm:$0xff]
    %v1366 = vld [vmem:[#allocation13 + $0xf8] sm:$0xff]
    %v1367 = vld [vmem:[#allocation13 + $0x100] sm:$0xff]
    %v1368 = vld [vmem:[#allocation13 + $0x108] sm:$0xff]
    %v1369 = vld [vmem:[#allocation13 + $0x110] sm:$0xff]
    %v1370 = vld [vmem:[#allocation13 + $0x118] sm:$0xff]
    %v1371 = vld [vmem:[#allocation13 + $0x120] sm:$0xff]
    %v1372 = vld [vmem:[#allocation13 + $0x128] sm:$0xff]
    %v1373 = vld [vmem:[#allocation13 + $0x130] sm:$0xff]
    %v1374 = vld [vmem:[#allocation13 + $0x138] sm:$0xff]
    %v1375 = vld [vmem:[#allocation13 + $0x140] sm:$0xff]
    %v1376 = vld [vmem:[#allocation13 + $0x148] sm:$0xff]
    %v1377 = vld [vmem:[#allocation13 + $0x150] sm:$0xff]
    %v1378 = vld [vmem:[#allocation13 + $0x158] sm:$0xff]
    %v1379 = vld [vmem:[#allocation13 + $0x160] sm:$0xff]
    %v1380 = vld [vmem:[#allocation13 + $0x168] sm:$0xff]
    %v1381 = vld [vmem:[#allocation13 + $0x170] sm:$0xff]
    %v1382 = vld [vmem:[#allocation13 + $0x178] sm:$0xff]
    %v1383 = vld [vmem:[#allocation13 + $0x180] sm:$0xff]
    %v1384 = vld [vmem:[#allocation13 + $0x188] sm:$0xff]
    %v1385 = vld [vmem:[#allocation13 + $0x190] sm:$0xff]
    %v1386 = vld [vmem:[#allocation13 + $0x198] sm:$0xff]
    %v1387 = vld [vmem:[#allocation13 + $0x1a0] sm:$0xff]
    %v1388 = vld [vmem:[#allocation13 + $0x1a8] sm:$0xff]
    %v1389 = vld [vmem:[#allocation13 + $0x1b0] sm:$0xff]
    %v1390 = vld [vmem:[#allocation13 + $0x1b8] sm:$0xff]
    %v1391 = vld [vmem:[#allocation13 + $0x1c0] sm:$0xff]
    %v1392 = vld [vmem:[#allocation13 + $0x1c8] sm:$0xff]
    %v1393 = vld [vmem:[#allocation13 + $0x1d0] sm:$0xff]
    %v1394 = vld [vmem:[#allocation13 + $0x1d8] sm:$0xff]
    %v1395 = vld [vmem:[#allocation13 + $0x1e0] sm:$0xff]
    %v1396 = vld [vmem:[#allocation13 + $0x1e8] sm:$0xff]
    %v1397 = vld [vmem:[#allocation13 + $0x1f0] sm:$0xff]
    %v1398 = vld [vmem:[#allocation13 + $0x1f8] sm:$0xff]
    %v1399 = vld [vmem:[%s12] sm:$0xff]
    %v1401 = vlaneseq
    %v1402 = vshrl.u32 %v1401, 7
    %v1403 = vsub.s32 0, %v1402
    %v1404 = vrot.slane %v1399, %v1403
    %v1405 = vlaneseq
    %v1406 = vshrl.u32 %v1405, 7
    %v1407 = vsub.s32 1, %v1406
    %v1408 = vrot.slane %v1399, %v1407
    %v1409 = vlaneseq
    %v1410 = vshrl.u32 %v1409, 7
    %v1411 = vsub.s32 2, %v1410
    %v1412 = vrot.slane %v1399, %v1411
    %v1413 = vlaneseq
    %v1414 = vshrl.u32 %v1413, 7
    %v1415 = vsub.s32 3, %v1414
    %v1416 = vrot.slane %v1399, %v1415
    %v1417 = vlaneseq
    %v1418 = vshrl.u32 %v1417, 7
    %v1419 = vsub.s32 4, %v1418
    %v1420 = vrot.slane %v1399, %v1419
    %v1421 = vlaneseq
    %v1422 = vshrl.u32 %v1421, 7
    %v1423 = vsub.s32 5, %v1422
    %v1424 = vrot.slane %v1399, %v1423
    %v1425 = vlaneseq
    %v1426 = vshrl.u32 %v1425, 7
    %v1427 = vsub.s32 6, %v1426
    %v1428 = vrot.slane %v1399, %v1427
    %v1429 = vlaneseq
    %v1430 = vshrl.u32 %v1429, 7
    %v1431 = vsub.s32 7, %v1430
    %v1432 = vrot.slane %v1399, %v1431
    %v1505 = vunpack.c.l.b16 %v1335
    %v1506 = vunpack.c.h.b16 %v1335
    %v1507 = vunpack.c.l.b16 %v1336
    %v1508 = vunpack.c.h.b16 %v1336
    %v1509 = vunpack.c.l.b16 %v1337
    %v1510 = vunpack.c.h.b16 %v1337
    %v1511 = vunpack.c.l.b16 %v1338
    %v1512 = vunpack.c.h.b16 %v1338
    %v1513 = vunpack.c.l.b16 %v1339
    %v1514 = vunpack.c.h.b16 %v1339
    %v1515 = vunpack.c.l.b16 %v1340
    %v1516 = vunpack.c.h.b16 %v1340
    %v1517 = vunpack.c.l.b16 %v1341
    %v1518 = vunpack.c.h.b16 %v1341
    %v1519 = vunpack.c.l.b16 %v1342
    %v1520 = vunpack.c.h.b16 %v1342
    %v1521 = vunpack.c.l.b16 %v1343
    %v1522 = vunpack.c.h.b16 %v1343
    %v1523 = vunpack.c.l.b16 %v1344
    %v1524 = vunpack.c.h.b16 %v1344
    %v1525 = vunpack.c.l.b16 %v1345
    %v1526 = vunpack.c.h.b16 %v1345
    %v1527 = vunpack.c.l.b16 %v1346
    %v1528 = vunpack.c.h.b16 %v1346
    %v1529 = vunpack.c.l.b16 %v1347
    %v1530 = vunpack.c.h.b16 %v1347
    %v1531 = vunpack.c.l.b16 %v1348
    %v1532 = vunpack.c.h.b16 %v1348
    %v1533 = vunpack.c.l.b16 %v1349
    %v1534 = vunpack.c.h.b16 %v1349
    %v1535 = vunpack.c.l.b16 %v1350
    %v1536 = vunpack.c.h.b16 %v1350
    %v1537 = vunpack.c.l.b16 %v1351
    %v1538 = vunpack.c.h.b16 %v1351
    %v1539 = vunpack.c.l.b16 %v1352
    %v1540 = vunpack.c.h.b16 %v1352
    %v1541 = vunpack.c.l.b16 %v1353
    %v1542 = vunpack.c.h.b16 %v1353
    %v1543 = vunpack.c.l.b16 %v1354
    %v1544 = vunpack.c.h.b16 %v1354
    %v1545 = vunpack.c.l.b16 %v1355
    %v1546 = vunpack.c.h.b16 %v1355
    %v1547 = vunpack.c.l.b16 %v1356
    %v1548 = vunpack.c.h.b16 %v1356
    %v1549 = vunpack.c.l.b16 %v1357
    %v1550 = vunpack.c.h.b16 %v1357
    %v1551 = vunpack.c.l.b16 %v1358
    %v1552 = vunpack.c.h.b16 %v1358
    %v1553 = vunpack.c.l.b16 %v1359
    %v1554 = vunpack.c.h.b16 %v1359
    %v1555 = vunpack.c.l.b16 %v1360
    %v1556 = vunpack.c.h.b16 %v1360
    %v1557 = vunpack.c.l.b16 %v1361
    %v1558 = vunpack.c.h.b16 %v1361
    %v1559 = vunpack.c.l.b16 %v1362
    %v1560 = vunpack.c.h.b16 %v1362
    %v1561 = vunpack.c.l.b16 %v1363
    %v1562 = vunpack.c.h.b16 %v1363
    %v1563 = vunpack.c.l.b16 %v1364
    %v1564 = vunpack.c.h.b16 %v1364
    %v1565 = vunpack.c.l.b16 %v1365
    %v1566 = vunpack.c.h.b16 %v1365
    %v1567 = vunpack.c.l.b16 %v1366
    %v1568 = vunpack.c.h.b16 %v1366
    %v1569 = vunpack.c.l.b16 %v1367
    %v1570 = vunpack.c.h.b16 %v1367
    %v1571 = vunpack.c.l.b16 %v1368
    %v1572 = vunpack.c.h.b16 %v1368
    %v1573 = vunpack.c.l.b16 %v1369
    %v1574 = vunpack.c.h.b16 %v1369
    %v1575 = vunpack.c.l.b16 %v1370
    %v1576 = vunpack.c.h.b16 %v1370
    %v1577 = vunpack.c.l.b16 %v1371
    %v1578 = vunpack.c.h.b16 %v1371
    %v1579 = vunpack.c.l.b16 %v1372
    %v1580 = vunpack.c.h.b16 %v1372
    %v1581 = vunpack.c.l.b16 %v1373
    %v1582 = vunpack.c.h.b16 %v1373
    %v1583 = vunpack.c.l.b16 %v1374
    %v1584 = vunpack.c.h.b16 %v1374
    %v1585 = vunpack.c.l.b16 %v1375
    %v1586 = vunpack.c.h.b16 %v1375
    %v1587 = vunpack.c.l.b16 %v1376
    %v1588 = vunpack.c.h.b16 %v1376
    %v1589 = vunpack.c.l.b16 %v1377
    %v1590 = vunpack.c.h.b16 %v1377
    %v1591 = vunpack.c.l.b16 %v1378
    %v1592 = vunpack.c.h.b16 %v1378
    %v1593 = vunpack.c.l.b16 %v1379
    %v1594 = vunpack.c.h.b16 %v1379
    %v1595 = vunpack.c.l.b16 %v1380
    %v1596 = vunpack.c.h.b16 %v1380
    %v1597 = vunpack.c.l.b16 %v1381
    %v1598 = vunpack.c.h.b16 %v1381
    %v1599 = vunpack.c.l.b16 %v1382
    %v1600 = vunpack.c.h.b16 %v1382
    %v1601 = vunpack.c.l.b16 %v1383
    %v1602 = vunpack.c.h.b16 %v1383
    %v1603 = vunpack.c.l.b16 %v1384
    %v1604 = vunpack.c.h.b16 %v1384
    %v1605 = vunpack.c.l.b16 %v1385
    %v1606 = vunpack.c.h.b16 %v1385
    %v1607 = vunpack.c.l.b16 %v1386
    %v1608 = vunpack.c.h.b16 %v1386
    %v1609 = vunpack.c.l.b16 %v1387
    %v1610 = vunpack.c.h.b16 %v1387
    %v1611 = vunpack.c.l.b16 %v1388
    %v1612 = vunpack.c.h.b16 %v1388
    %v1613 = vunpack.c.l.b16 %v1389
    %v1614 = vunpack.c.h.b16 %v1389
    %v1615 = vunpack.c.l.b16 %v1390
    %v1616 = vunpack.c.h.b16 %v1390
    %v1617 = vunpack.c.l.b16 %v1391
    %v1618 = vunpack.c.h.b16 %v1391
    %v1619 = vunpack.c.l.b16 %v1392
    %v1620 = vunpack.c.h.b16 %v1392
    %v1621 = vunpack.c.l.b16 %v1393
    %v1622 = vunpack.c.h.b16 %v1393
    %v1623 = vunpack.c.l.b16 %v1394
    %v1624 = vunpack.c.h.b16 %v1394
    %v1625 = vunpack.c.l.b16 %v1395
    %v1626 = vunpack.c.h.b16 %v1395
    %v1627 = vunpack.c.l.b16 %v1396
    %v1628 = vunpack.c.h.b16 %v1396
    %v1629 = vunpack.c.l.b16 %v1397
    %v1630 = vunpack.c.h.b16 %v1397
    %v1631 = vunpack.c.l.b16 %v1398
    %v1632 = vunpack.c.h.b16 %v1398
    %v1633 = vpack.c.b16 %v1513, %v1505
    %v1634 = vpack.c.b16 %v1514, %v1506
    %v1635 = vpack.c.b16 %v1515, %v1507
    %v1636 = vpack.c.b16 %v1516, %v1508
    %v1637 = vpack.c.b16 %v1517, %v1509
    %v1638 = vpack.c.b16 %v1518, %v1510
    %v1639 = vpack.c.b16 %v1519, %v1511
    %v1640 = vpack.c.b16 %v1520, %v1512
    %v1641 = vpack.c.b16 %v1529, %v1521
    %v1642 = vpack.c.b16 %v1530, %v1522
    %v1643 = vpack.c.b16 %v1531, %v1523
    %v1644 = vpack.c.b16 %v1532, %v1524
    %v1645 = vpack.c.b16 %v1533, %v1525
    %v1646 = vpack.c.b16 %v1534, %v1526
    %v1647 = vpack.c.b16 %v1535, %v1527
    %v1648 = vpack.c.b16 %v1536, %v1528
    %v1649 = vpack.c.b16 %v1545, %v1537
    %v1650 = vpack.c.b16 %v1546, %v1538
    %v1651 = vpack.c.b16 %v1547, %v1539
    %v1652 = vpack.c.b16 %v1548, %v1540
    %v1653 = vpack.c.b16 %v1549, %v1541
    %v1654 = vpack.c.b16 %v1550, %v1542
    %v1655 = vpack.c.b16 %v1551, %v1543
    %v1656 = vpack.c.b16 %v1552, %v1544
    %v1657 = vpack.c.b16 %v1561, %v1553
    %v1658 = vpack.c.b16 %v1562, %v1554
    %v1659 = vpack.c.b16 %v1563, %v1555
    %v1660 = vpack.c.b16 %v1564, %v1556
    %v1661 = vpack.c.b16 %v1565, %v1557
    %v1662 = vpack.c.b16 %v1566, %v1558
    %v1663 = vpack.c.b16 %v1567, %v1559
    %v1664 = vpack.c.b16 %v1568, %v1560
    %v1665 = vpack.c.b16 %v1577, %v1569
    %v1666 = vpack.c.b16 %v1578, %v1570
    %v1667 = vpack.c.b16 %v1579, %v1571
    %v1668 = vpack.c.b16 %v1580, %v1572
    %v1669 = vpack.c.b16 %v1581, %v1573
    %v1670 = vpack.c.b16 %v1582, %v1574
    %v1671 = vpack.c.b16 %v1583, %v1575
    %v1672 = vpack.c.b16 %v1584, %v1576
    %v1673 = vpack.c.b16 %v1593, %v1585
    %v1674 = vpack.c.b16 %v1594, %v1586
    %v1675 = vpack.c.b16 %v1595, %v1587
    %v1676 = vpack.c.b16 %v1596, %v1588
    %v1677 = vpack.c.b16 %v1597, %v1589
    %v1678 = vpack.c.b16 %v1598, %v1590
    %v1679 = vpack.c.b16 %v1599, %v1591
    %v1680 = vpack.c.b16 %v1600, %v1592
    %v1681 = vpack.c.b16 %v1609, %v1601
    %v1682 = vpack.c.b16 %v1610, %v1602
    %v1683 = vpack.c.b16 %v1611, %v1603
    %v1684 = vpack.c.b16 %v1612, %v1604
    %v1685 = vpack.c.b16 %v1613, %v1605
    %v1686 = vpack.c.b16 %v1614, %v1606
    %v1687 = vpack.c.b16 %v1615, %v1607
    %v1688 = vpack.c.b16 %v1616, %v1608
    %v1689 = vpack.c.b16 %v1625, %v1617
    %v1690 = vpack.c.b16 %v1626, %v1618
    %v1691 = vpack.c.b16 %v1627, %v1619
    %v1692 = vpack.c.b16 %v1628, %v1620
    %v1693 = vpack.c.b16 %v1629, %v1621
    %v1694 = vpack.c.b16 %v1630, %v1622
    %v1695 = vpack.c.b16 %v1631, %v1623
    %v1696 = vpack.c.b16 %v1632, %v1624
    %1761 = vmatprep.subr.bf16.mxu0 %v1634
    %1762 = vmatpush1.bf16.msra.mxu0 %v1633
    %1763 = vmatprep.subr.bf16.mxu0 %v1642
    %1764 = vmatpush1.bf16.msra.mxu0 %v1641
    %1765 = vmatprep.subr.bf16.mxu0 %v1650
    %1766 = vmatpush1.bf16.msra.mxu0 %v1649
    %1767 = vmatprep.subr.bf16.mxu0 %v1658
    %1768 = vmatpush1.bf16.msra.mxu0 %v1657
    %1769 = vmatprep.subr.bf16.mxu0 %v1666
    %1770 = vmatpush1.bf16.msra.mxu0 %v1665
    %1771 = vmatprep.subr.bf16.mxu0 %v1674
    %1772 = vmatpush1.bf16.msra.mxu0 %v1673
    %1773 = vmatprep.subr.bf16.mxu0 %v1682
    %1774 = vmatpush1.bf16.msra.mxu0 %v1681
    %1775 = vmatprep.subr.bf16.mxu0 %v1690
    %1776 = vmatpush1.bf16.msra.mxu0 %v1689
    %1777 = vmatprep.subr.bf16.mxu0 0
    %1778 = vmatpush1.bf16.msra.mxu0 0
    %1779 = vmatprep.subr.bf16.mxu0 0
    %1780 = vmatpush1.bf16.msra.mxu0 0
    %1781 = vmatprep.subr.bf16.mxu0 0
    %1782 = vmatpush1.bf16.msra.mxu0 0
    %1783 = vmatprep.subr.bf16.mxu0 0
    %1784 = vmatpush1.bf16.msra.mxu0 0
    %1785 = vmatprep.subr.bf16.mxu0 0
    %1786 = vmatpush1.bf16.msra.mxu0 0
    %1787 = vmatprep.subr.bf16.mxu0 0
    %1788 = vmatpush1.bf16.msra.mxu0 0
    %1789 = vmatprep.subr.bf16.mxu0 0
    %1790 = vmatpush1.bf16.msra.mxu0 0
    %1791 = vmatprep.subr.bf16.mxu0 0
    %1792 = vmatpush1.bf16.msra.mxu0 0
    %1793 = vmatprep.mubr.bf16.mxu0 0
    %1794 = vmatmul.mubr.bf16.gmra.mrb[0].mxu0 %v1334
    %v1795 = vpop.f32.mrb[0].mxu0
    %v1796 = vadd.f32 %v1404, %v1795
    %v1797 = vpop.f32.mrb[0].mxu0
    %v1798 = vadd.f32 %v1408, %v1797
    %v1799 = vpop.f32.mrb[0].mxu0
    %v1800 = vadd.f32 %v1404, %v1799
    %v1801 = vpop.f32.mrb[0].mxu0
    %v1802 = vadd.f32 %v1408, %v1801
    %1803 = vdwg.mxu0
    %1804 = vmatprep.subr.bf16.mxu0 %v1636
    %1805 = vmatpush1.bf16.msra.mxu0 %v1635
    %1806 = vmatprep.subr.bf16.mxu0 %v1644
    %1807 = vmatpush1.bf16.msra.mxu0 %v1643
    %1808 = vmatprep.subr.bf16.mxu0 %v1652
    %1809 = vmatpush1.bf16.msra.mxu0 %v1651
    %1810 = vmatprep.subr.bf16.mxu0 %v1660
    %1811 = vmatpush1.bf16.msra.mxu0 %v1659
    %1812 = vmatprep.subr.bf16.mxu0 %v1668
    %1813 = vmatpush1.bf16.msra.mxu0 %v1667
    %1814 = vmatprep.subr.bf16.mxu0 %v1676
    %1815 = vmatpush1.bf16.msra.mxu0 %v1675
    %1816 = vmatprep.subr.bf16.mxu0 %v1684
    %1817 = vmatpush1.bf16.msra.mxu0 %v1683
    %1818 = vmatprep.subr.bf16.mxu0 %v1692
    %1819 = vmatpush1.bf16.msra.mxu0 %v1691
    %1820 = vmatprep.subr.bf16.mxu0 0
    %1821 = vmatpush1.bf16.msra.mxu0 0
    %1822 = vmatprep.subr.bf16.mxu0 0
    %1823 = vmatpush1.bf16.msra.mxu0 0
    %1824 = vmatprep.subr.bf16.mxu0 0
    %1825 = vmatpush1.bf16.msra.mxu0 0
    %1826 = vmatprep.subr.bf16.mxu0 0
    %1827 = vmatpush1.bf16.msra.mxu0 0
    %1828 = vmatprep.subr.bf16.mxu0 0
    %1829 = vmatpush1.bf16.msra.mxu0 0
    %1830 = vmatprep.subr.bf16.mxu0 0
    %1831 = vmatpush1.bf16.msra.mxu0 0
    %1832 = vmatprep.subr.bf16.mxu0 0
    %1833 = vmatpush1.bf16.msra.mxu0 0
    %1834 = vmatprep.subr.bf16.mxu0 0
    %1835 = vmatpush1.bf16.msra.mxu0 0
    %1836 = vmatprep.mubr.bf16.mxu0 0
    %1837 = vmatmul.mubr.bf16.gmra.mrb[0].mxu0 %v1334
    %v1838 = vpop.f32.mrb[0].mxu0
    %v1839 = vadd.f32 %v1412, %v1838
    %v1840 = vpop.f32.mrb[0].mxu0
    %v1841 = vadd.f32 %v1416, %v1840
    %v1842 = vpop.f32.mrb[0].mxu0
    %v1843 = vadd.f32 %v1412, %v1842
    %v1844 = vpop.f32.mrb[0].mxu0
    %v1845 = vadd.f32 %v1416, %v1844
    %1846 = vdwg.mxu0
    %1847 = vmatprep.subr.bf16.mxu0 %v1638
    %1848 = vmatpush1.bf16.msra.mxu0 %v1637
    %1849 = vmatprep.subr.bf16.mxu0 %v1646
    %1850 = vmatpush1.bf16.msra.mxu0 %v1645
    %1851 = vmatprep.subr.bf16.mxu0 %v1654
    %1852 = vmatpush1.bf16.msra.mxu0 %v1653
    %1853 = vmatprep.subr.bf16.mxu0 %v1662
    %1854 = vmatpush1.bf16.msra.mxu0 %v1661
    %1855 = vmatprep.subr.bf16.mxu0 %v1670
    %1856 = vmatpush1.bf16.msra.mxu0 %v1669
    %1857 = vmatprep.subr.bf16.mxu0 %v1678
    %1858 = vmatpush1.bf16.msra.mxu0 %v1677
    %1859 = vmatprep.subr.bf16.mxu0 %v1686
    %1860 = vmatpush1.bf16.msra.mxu0 %v1685
    %1861 = vmatprep.subr.bf16.mxu0 %v1694
    %1862 = vmatpush1.bf16.msra.mxu0 %v1693
    %1863 = vmatprep.subr.bf16.mxu0 0
    %1864 = vmatpush1.bf16.msra.mxu0 0
    %1865 = vmatprep.subr.bf16.mxu0 0
    %1866 = vmatpush1.bf16.msra.mxu0 0
    %1867 = vmatprep.subr.bf16.mxu0 0
    %1868 = vmatpush1.bf16.msra.mxu0 0
    %1869 = vmatprep.subr.bf16.mxu0 0
    %1870 = vmatpush1.bf16.msra.mxu0 0
    %1871 = vmatprep.subr.bf16.mxu0 0
    %1872 = vmatpush1.bf16.msra.mxu0 0
    %1873 = vmatprep.subr.bf16.mxu0 0
    %1874 = vmatpush1.bf16.msra.mxu0 0
    %1875 = vmatprep.subr.bf16.mxu0 0
    %1876 = vmatpush1.bf16.msra.mxu0 0
    %1877 = vmatprep.subr.bf16.mxu0 0
    %1878 = vmatpush1.bf16.msra.mxu0 0
    %1879 = vmatprep.mubr.bf16.mxu0 0
    %1880 = vmatmul.mubr.bf16.gmra.mrb[0].mxu0 %v1334
    %v1881 = vpop.f32.mrb[0].mxu0
    %v1882 = vadd.f32 %v1420, %v1881
    %v1883 = vpop.f32.mrb[0].mxu0
    %v1884 = vadd.f32 %v1424, %v1883
    %v1885 = vpop.f32.mrb[0].mxu0
    %v1886 = vadd.f32 %v1420, %v1885
    %v1887 = vpop.f32.mrb[0].mxu0
    %v1888 = vadd.f32 %v1424, %v1887
    %1889 = vdwg.mxu0
    %1890 = vmatprep.subr.bf16.mxu0 %v1640
    %1891 = vmatpush1.bf16.msra.mxu0 %v1639
    %1892 = vmatprep.subr.bf16.mxu0 %v1648
    %1893 = vmatpush1.bf16.msra.mxu0 %v1647
    %1894 = vmatprep.subr.bf16.mxu0 %v1656
    %1895 = vmatpush1.bf16.msra.mxu0 %v1655
    %1896 = vmatprep.subr.bf16.mxu0 %v1664
    %1897 = vmatpush1.bf16.msra.mxu0 %v1663
    %1898 = vmatprep.subr.bf16.mxu0 %v1672
    %1899 = vmatpush1.bf16.msra.mxu0 %v1671
    %1900 = vmatprep.subr.bf16.mxu0 %v1680
    %1901 = vmatpush1.bf16.msra.mxu0 %v1679
    %1902 = vmatprep.subr.bf16.mxu0 %v1688
    %1903 = vmatpush1.bf16.msra.mxu0 %v1687
    %1904 = vmatprep.subr.bf16.mxu0 %v1696
    %1905 = vmatpush1.bf16.msra.mxu0 %v1695
    %1906 = vmatprep.subr.bf16.mxu0 0
    %1907 = vmatpush1.bf16.msra.mxu0 0
    %1908 = vmatprep.subr.bf16.mxu0 0
    %1909 = vmatpush1.bf16.msra.mxu0 0
    %1910 = vmatprep.subr.bf16.mxu0 0
    %1911 = vmatpush1.bf16.msra.mxu0 0
    %1912 = vmatprep.subr.bf16.mxu0 0
    %1913 = vmatpush1.bf16.msra.mxu0 0
    %1914 = vmatprep.subr.bf16.mxu0 0
    %1915 = vmatpush1.bf16.msra.mxu0 0
    %1916 = vmatprep.subr.bf16.mxu0 0
    %1917 = vmatpush1.bf16.msra.mxu0 0
    %1918 = vmatprep.subr.bf16.mxu0 0
    %1919 = vmatpush1.bf16.msra.mxu0 0
    %1920 = vmatprep.subr.bf16.mxu0 0
    %1921 = vmatpush1.bf16.msra.mxu0 0
    %1922 = vmatprep.mubr.bf16.mxu0 0
    %1923 = vmatmul.mubr.bf16.gmra.mrb[0].mxu0 %v1334
    %v1924 = vpop.f32.mrb[0].mxu0
    %v1925 = vadd.f32 %v1428, %v1924
    %v1926 = vpop.f32.mrb[0].mxu0
    %v1927 = vadd.f32 %v1432, %v1926
    %v1928 = vpop.f32.mrb[0].mxu0
    %v1929 = vadd.f32 %v1428, %v1928
    %v1930 = vpop.f32.mrb[0].mxu0
    %v1931 = vadd.f32 %v1432, %v1930
    %1932 = vdwg.mxu0
    %v1933 = vxor.u32 %v1796, 2147483648
    %v1934 = vxor.u32 %v1798, 2147483648
    %v1935 = vxor.u32 %v1839, 2147483648
    %v1936 = vxor.u32 %v1841, 2147483648
    %v1937 = vxor.u32 %v1882, 2147483648
    %v1938 = vxor.u32 %v1884, 2147483648
    %v1939 = vxor.u32 %v1925, 2147483648
    %v1940 = vxor.u32 %v1927, 2147483648
    %v1941 = vxor.u32 %v1800, 2147483648
    %v1942 = vxor.u32 %v1802, 2147483648
    %v1943 = vxor.u32 %v1843, 2147483648
    %v1944 = vxor.u32 %v1845, 2147483648
    %v1945 = vxor.u32 %v1886, 2147483648
    %v1946 = vxor.u32 %v1888, 2147483648
    %v1947 = vxor.u32 %v1929, 2147483648
    %v1948 = vxor.u32 %v1931, 2147483648
    %v1949 = vmul.f32 %v1933, 1.442695
    %v1950 = vpow.pop %v1949
    %v1951 = vmul.f32 %v1934, 1.442695
    %v1952 = vpow.pop %v1951
    %v1953 = vmul.f32 %v1935, 1.442695
    %v1954 = vpow.pop %v1953
    %v1955 = vmul.f32 %v1936, 1.442695
    %v1956 = vpow.pop %v1955
    %v1957 = vmul.f32 %v1937, 1.442695
    %v1958 = vpow.pop %v1957
    %v1959 = vmul.f32 %v1938, 1.442695
    %v1960 = vpow.pop %v1959
    %v1961 = vmul.f32 %v1939, 1.442695
    %v1962 = vpow.pop %v1961
    %v1963 = vmul.f32 %v1940, 1.442695
    %v1964 = vpow.pop %v1963
    %v1965 = vmul.f32 %v1941, 1.442695
    %v1966 = vpow.pop %v1965
    %v1967 = vmul.f32 %v1942, 1.442695
    %v1968 = vpow.pop %v1967
    %v1969 = vmul.f32 %v1943, 1.442695
    %v1970 = vpow.pop %v1969
    %v1971 = vmul.f32 %v1944, 1.442695
    %v1972 = vpow.pop %v1971
    %v1973 = vmul.f32 %v1945, 1.442695
    %v1974 = vpow.pop %v1973
    %v1975 = vmul.f32 %v1946, 1.442695
    %v1976 = vpow.pop %v1975
    %v1977 = vmul.f32 %v1947, 1.442695
    %v1978 = vpow.pop %v1977
    %v1979 = vmul.f32 %v1948, 1.442695
    %v1980 = vpow.pop %v1979
    %v1981 = vadd.f32 %v1950, 1.0
    %v1982 = vadd.f32 %v1952, 1.0
    %v1983 = vadd.f32 %v1954, 1.0
    %v1984 = vadd.f32 %v1956, 1.0
    %v1985 = vadd.f32 %v1958, 1.0
    %v1986 = vadd.f32 %v1960, 1.0
    %v1987 = vadd.f32 %v1962, 1.0
    %v1988 = vadd.f32 %v1964, 1.0
    %v1989 = vadd.f32 %v1966, 1.0
    %v1990 = vadd.f32 %v1968, 1.0
    %v1991 = vadd.f32 %v1970, 1.0
    %v1992 = vadd.f32 %v1972, 1.0
    %v1993 = vadd.f32 %v1974, 1.0
    %v1994 = vadd.f32 %v1976, 1.0
    %v1995 = vadd.f32 %v1978, 1.0
    %v1996 = vadd.f32 %v1980, 1.0
    %v1997 = vrcp.pop %v1981
    %v1998 = vmul.f32 1.0, %v1997
    %v1999 = vrcp.pop %v1982
    %v2000 = vmul.f32 1.0, %v1999
    %v2001 = vrcp.pop %v1983
    %v2002 = vmul.f32 1.0, %v2001
    %v2003 = vrcp.pop %v1984
    %v2004 = vmul.f32 1.0, %v2003
    %v2005 = vrcp.pop %v1985
    %v2006 = vmul.f32 1.0, %v2005
    %v2007 = vrcp.pop %v1986
    %v2008 = vmul.f32 1.0, %v2007
    %v2009 = vrcp.pop %v1987
    %v2010 = vmul.f32 1.0, %v2009
    %v2011 = vrcp.pop %v1988
    %v2012 = vmul.f32 1.0, %v2011
    %v2013 = vrcp.pop %v1989
    %v2014 = vmul.f32 1.0, %v2013
    %v2015 = vrcp.pop %v1990
    %v2016 = vmul.f32 1.0, %v2015
    %v2017 = vrcp.pop %v1991
    %v2018 = vmul.f32 1.0, %v2017
    %v2019 = vrcp.pop %v1992
    %v2020 = vmul.f32 1.0, %v2019
    %v2021 = vrcp.pop %v1993
    %v2022 = vmul.f32 1.0, %v2021
    %v2023 = vrcp.pop %v1994
    %v2024 = vmul.f32 1.0, %v2023
    %v2025 = vrcp.pop %v1995
    %v2026 = vmul.f32 1.0, %v2025
    %v2027 = vrcp.pop %v1996
    %v2028 = vmul.f32 1.0, %v2027
    %v2029 = vpack.c.bf16 %v2014, %v1998
    %v2030 = vpack.c.bf16 %v2016, %v2000
    %v2031 = vpack.c.bf16 %v2018, %v2002
    %v2032 = vpack.c.bf16 %v2020, %v2004
    %v2033 = vpack.c.bf16 %v2022, %v2006
    %v2034 = vpack.c.bf16 %v2024, %v2008
    %v2035 = vpack.c.bf16 %v2026, %v2010
    %v2036 = vpack.c.bf16 %v2028, %v2012
    %v2045 = vunpack.c.l.b16 %v2029
    %v2046 = vunpack.c.l.b16 %v2030
    %v2047 = vunpack.c.l.b16 %v2031
    %v2048 = vunpack.c.l.b16 %v2032
    %v2049 = vunpack.c.l.b16 %v2033
    %v2050 = vunpack.c.l.b16 %v2034
    %v2051 = vunpack.c.l.b16 %v2035
    %v2052 = vunpack.c.l.b16 %v2036
    %v2053 = vunpack.c.h.b16 %v2029
    %v2054 = vunpack.c.h.b16 %v2030
    %v2055 = vunpack.c.h.b16 %v2031
    %v2056 = vunpack.c.h.b16 %v2032
    %v2057 = vunpack.c.h.b16 %v2033
    %v2058 = vunpack.c.h.b16 %v2034
    %v2059 = vunpack.c.h.b16 %v2035
    %v2060 = vunpack.c.h.b16 %v2036
    %v2061 = vpack.c.b16 %v2046, %v2045
    %v2062 = vpack.c.b16 %v2048, %v2047
    %v2063 = vpack.c.b16 %v2050, %v2049
    %v2064 = vpack.c.b16 %v2052, %v2051
    %v2065 = vpack.c.b16 %v2054, %v2053
    %v2066 = vpack.c.b16 %v2056, %v2055
    %v2067 = vpack.c.b16 %v2058, %v2057
    %v2068 = vpack.c.b16 %v2060, %v2059
    %2077 = vst [vmem:[#allocation14] sm:$0xff] %v2061
    %2078 = vst [vmem:[#allocation14 + $0x8] sm:$0xff] %v2062
    %2079 = vst [vmem:[#allocation14 + $0x10] sm:$0xff] %v2063
    %2080 = vst [vmem:[#allocation14 + $0x18] sm:$0xff] %v2064
    %2081 = vst [vmem:[#allocation14 + $0x20] sm:$0xff] %v2065
    %2082 = vst [vmem:[#allocation14 + $0x28] sm:$0xff] %v2066
    %2083 = vst [vmem:[#allocation14 + $0x30] sm:$0xff] %v2067
    %2084 = vst [vmem:[#allocation14 + $0x38] sm:$0xff] %v2068
    // Predicated region
    $region82: #{tpu_custom_call.1} parent=1 // pred_check
      _
    $region83: #{tpu_custom_call.1} parent=1 // pred_check_branch
      %2086 = sbr.rel (0) target = $region85
    $region84: #{tpu_custom_call.1} parent=1 // pred_region
      %s2088 = ssub.s32 1024, 1024
      %2089 = vsyncadd [#allocation4], %s2088
      %s2090 = sshll.u32 [#allocation14], 4
      %s2091 = int_to_ptr.vmem [resolvable:$true] %s2090
      %2096 = dma.vmem_to_hbm [thread:$0]  %s2091, 1024, %s13, [#allocation4], 512, 512, 32
    $region85: #{tpu_custom_call.1} parent=1 // pred_fallthru
      _
    // Predicated region
    $region86: #{tpu_custom_call.1} parent=1 // pred_check
      _
    $region87: #{tpu_custom_call.1} parent=1 // pred_check_branch
      %2098 = sbr.rel (0) target = $region89
    $region88: #{tpu_custom_call.1} parent=1 // pred_region
      %2099 = dma.done [#allocation4], 1024
    $region89: #{tpu_custom_call.1} parent=1 // pred_fallthru
      _
    %2100 = vsyncpa [#allocation3], 1
    %2101 = vsyncpa [#allocation6], 1
    %2102 = vsyncpa [#allocation9], 1
    %2103 = vsyncpa [#allocation12], 1
    %2104 = vsyncpa [#allocation4], 1

</llo_original>
